<compile_context>
chip_gen: v7x
topology: tpu7x:2x2x1
jax: 0.10.0
libtpu: 0.0.40
codegen_flags: <defaults>
</compile_context>

<pallas_src>
import functools
import math

import jax
import jax.numpy as jnp
from jax.experimental import pallas as pl
from jax.experimental.pallas import tpu as pltpu  # noqa: F401  (TPU backend)


# ----------------------------------------------------------------------------
# Fused kernel: pos-embed add + `depth` transformer blocks + sequence mean
# ----------------------------------------------------------------------------
def fused_transformer_mean_kernel(
    x_ref,                 # (B, N, D)          f32
    pos_ref,               # (1, N, D)          f32
    ln1w_ref, ln1b_ref,    # (L, 1, D)          f32
    wqkv_ref,              # (L, D, 3*inner)    mxu dtype
    woutz_ref,             # (L, H*B, E, D)     mxu dtype (per-head out-proj, replicated over B)
    bout_ref,              # (L, 1, D)          f32
    ln2w_ref, ln2b_ref,    # (L, 1, D)          f32
    w1_ref,                # (L, D, mlp)        mxu dtype
    b1_ref,                # (L, 1, mlp)        f32
    w2_ref,                # (L, mlp, D)        mxu dtype
    b2_ref,                # (L, 1, D)          f32
    o_ref,                 # (B, D)             f32 (lane-dense output slab)
    *, depth, heads, dim_head, mxu_dtype,
):
    B, N, D = x_ref.shape
    H, E = heads, dim_head
    inner = H * E
    BN = B * N
    Z = H * B
    eps = 1e-5                         # torch.nn.LayerNorm default
    scale = E ** (-0.5)
    inv_d = 1.0 / D
    inv_n = 1.0 / N
    f32 = jnp.float32
    gelu_c = math.sqrt(2.0 / math.pi)

    def layernorm(v, w, b):            # v: (BN, D); w, b: (1, D)
        mu = jnp.sum(v, axis=-1, keepdims=True) * inv_d
        c = v - mu
        var = jnp.sum(c * c, axis=-1, keepdims=True) * inv_d
        return c * jax.lax.rsqrt(var + eps) * w + b

    def split_heads(t):                # (BN, inner) -> (Z, N, E), z = h*B + b
        t3 = t.reshape(B, N, inner)
        return jnp.stack(
            [t3[:, :, h * E:(h + 1) * E] for h in range(H)], axis=0
        ).reshape(Z, N, E)

    # pos-embedding add (broadcast over batch), flatten rows to (B*N, D)
    x = (x_ref[...] + pos_ref[...]).reshape(BN, D)          # f32 residual stream

    for l in range(depth):             # depth is small & static -> fully unrolled
        # ---- PreNorm + multi-head attention + residual ----------------------
        xn = layernorm(x, ln1w_ref[l], ln1b_ref[l])
        qkv = jnp.dot(xn.astype(mxu_dtype), wqkv_ref[l],
                      preferred_element_type=f32)            # (BN, 3*inner)
        qz = split_heads(qkv[:, 0 * inner:1 * inner]).astype(mxu_dtype)
        kz = split_heads(qkv[:, 1 * inner:2 * inner]).astype(mxu_dtype)
        vz = split_heads(qkv[:, 2 * inner:3 * inner]).astype(mxu_dtype)

        dots = jnp.einsum('znd,zmd->znm', qz, kz,
                          preferred_element_type=f32) * scale  # (Z, N, N)
        dots = dots - jnp.max(dots, axis=-1, keepdims=True)
        ex = jnp.exp(dots)
        attn = ex * pl.reciprocal(jnp.sum(ex, axis=-1, keepdims=True),
                                  approx=True)
        outz = jnp.einsum('znm,zmd->znd', attn.astype(mxu_dtype), vz,
                          preferred_element_type=f32)          # (Z, N, E)
        # per-head output projection summed over heads == concat(heads) @ W_out
        proj = jnp.einsum('zne,zed->znd', outz.astype(mxu_dtype), woutz_ref[l],
                          preferred_element_type=f32)          # (Z, N, D)
        attn_out = proj.reshape(H, BN, D).sum(axis=0) + bout_ref[l]
        x = x + attn_out

        # ---- PreNorm + FeedForward + residual --------------------------------
        xn2 = layernorm(x, ln2w_ref[l], ln2b_ref[l])
        h1 = jnp.dot(xn2.astype(mxu_dtype), w1_ref[l],
                     preferred_element_type=f32) + b1_ref[l]
        # custom tanh-GELU exactly as in the PyTorch module (f32 elementwise)
        g = 0.5 * h1 * (1.0 + jnp.tanh(gelu_c * (h1 + 0.044715 * (h1 * h1 * h1))))
        h2 = jnp.dot(g.astype(mxu_dtype), w2_ref[l],
                     preferred_element_type=f32) + b2_ref[l]
        x = x + h2

    # ---- mean over the sequence axis, lane-dense (B, D) output --------------
    o_ref[...] = (x.reshape(B, N, D).sum(axis=1) * inv_n).astype(o_ref.dtype)


# ----------------------------------------------------------------------------
# Wrapper: stack per-layer weights along depth, restructure out-proj per head
# ----------------------------------------------------------------------------
def _prepare_weights(params, batch, heads, dim_head, mxu_dtype):
    layers = params["layers"]
    H, E, B = heads, dim_head, batch
    D = layers[0]["w_out"].shape[-1]

    def stk(name):
        return jnp.stack([p[name] for p in layers], axis=0)

    def out_heads(w):                  # (inner, D) -> (H*B, E, D), z = h*B + b
        wh = w.reshape(H, E, D)
        return jnp.broadcast_to(wh[:, None], (H, B, E, D)).reshape(H * B, E, D)

    woutz = jnp.stack([out_heads(p["w_out"]) for p in layers], axis=0)

    return dict(
        ln1w=stk("ln1_w"), ln1b=stk("ln1_b"),
        wqkv=stk("w_qkv").astype(mxu_dtype),
        woutz=woutz.astype(mxu_dtype),
        bout=stk("b_out"),
        ln2w=stk("ln2_w"), ln2b=stk("ln2_b"),
        w1=stk("w1").astype(mxu_dtype), b1=stk("b1"),
        w2=stk("w2").astype(mxu_dtype), b2=stk("b2"),
    )


def temporal_transformer_mean_forward(x, params, num_patches, input_dim,
                                      heads, dim_head,
                                      mxu_dtype=jnp.bfloat16):
    # x.contiguous().view(-1, num_patches, input_dim)
    x = x.reshape(-1, num_patches, input_dim)
    B, N, D = x.shape
    depth = len(params["layers"])
    pos = params["pos_embedding"][:, :N]                    # (1, N, D)
    w = _prepare_weights(params, B, heads, dim_head, mxu_dtype)

    kernel = functools.partial(
        fused_transformer_mean_kernel,
        depth=depth, heads=heads, dim_head=dim_head, mxu_dtype=mxu_dtype)

    # Single grid-less invocation: the whole problem fits in VMEM, so every
    # operand is a full-array VMEM block and the kernel runs once.
    return pl.pallas_call(
        kernel,
        out_shape=jax.ShapeDtypeStruct((B, D), x.dtype),
    )(x, pos,
      w["ln1w"], w["ln1b"], w["wqkv"], w["woutz"], w["bout"],
      w["ln2w"], w["ln2b"], w["w1"], w["b1"], w["w2"], w["b2"])


# ----------------------------------------------------------------------------
# Pure-JAX reference (mirrors the PyTorch math) for a correctness check
# ----------------------------------------------------------------------------
def ref_forward(x, params, num_patches, input_dim, heads, dim_head):
    eps = 1e-5
    x = x.reshape(-1, num_patches, input_dim)
    x = x + params["pos_embedding"][:, :x.shape[1]]
    inner = heads * dim_head
    scale = dim_head ** (-0.5)

    def ln(v, w, b):
        mu = v.mean(-1, keepdims=True)
        var = ((v - mu) ** 2).mean(-1, keepdims=True)
        return (v - mu) / jnp.sqrt(var + eps) * w + b

    for p in params["layers"]:
        xn = ln(x, p["ln1_w"][0], p["ln1_b"][0])
        qkv = xn @ p["w_qkv"]
        q, k, v = jnp.split(qkv, 3, axis=-1)
        B, N, _ = q.shape
        q = q.reshape(B, N, heads, dim_head).transpose(0, 2, 1, 3)
        k = k.reshape(B, N, heads, dim_head).transpose(0, 2, 1, 3)
        v = v.reshape(B, N, heads, dim_head).transpose(0, 2, 1, 3)
        dots = jnp.einsum("bhid,bhjd->bhij", q, k) * scale
        attn = jax.nn.softmax(dots, axis=-1)
        out = jnp.einsum("bhij,bhjd->bhid", attn, v)
        out = out.transpose(0, 2, 1, 3).reshape(B, N, inner)
        out = out @ p["w_out"] + p["b_out"][0]
        x = x + out

        xn2 = ln(x, p["ln2_w"][0], p["ln2_b"][0])
        h1 = xn2 @ p["w1"] + p["b1"][0]
        g = 0.5 * h1 * (1.0 + jnp.tanh(math.sqrt(2.0 / math.pi)
                                       * (h1 + 0.044715 * h1 ** 3)))
        x = x + (g @ p["w2"] + p["b2"][0])
    return x.mean(axis=1)


# ----------------------------------------------------------------------------
# Deterministic parameter construction
# ----------------------------------------------------------------------------
def init_params(key, num_patches, input_dim, depth, heads, mlp_dim, dim_head):
    inner = heads * dim_head
    keys = jax.random.split(key, 1 + depth)
    params = {
        "pos_embedding": jax.random.normal(
            keys[0], (1, num_patches, input_dim), jnp.float32),
        "layers": [],
    }
    for d in range(depth):
        ks = jax.random.split(keys[1 + d], 6)
        s = 0.05
        layer = {
            "ln1_w": jnp.ones((1, input_dim), jnp.float32),
            "ln1_b": jnp.zeros((1, input_dim), jnp.float32),
            "ln2_w": jnp.ones((1, input_dim), jnp.float32),
            "ln2_b": jnp.zeros((1, input_dim), jnp.float32),
            "w_qkv": s * jax.random.normal(ks[0], (input_dim, 3 * inner), jnp.float32),
            "w_out": s * jax.random.normal(ks[1], (inner, input_dim), jnp.float32),
            "b_out": s * jax.random.normal(ks[2], (1, input_dim), jnp.float32),
            "w1": s * jax.random.normal(ks[3], (input_dim, mlp_dim), jnp.float32),
            "b1": s * jax.random.normal(ks[4], (1, mlp_dim), jnp.float32),
            "w2": s * jax.random.normal(ks[5], (mlp_dim, input_dim), jnp.float32),
            "b2": jnp.zeros((1, input_dim), jnp.float32),
        }
        params["layers"].append(layer)
    return params


# ----------------------------------------------------------------------------
if __name__ == "__main__":
    batch = 2
    num_patches = 8      # sequence length (temporal patches)
    input_dim = 32       # token dim
    depth = 2
    heads = 4
    dim_head = 16
    mlp_dim = 64

    key = jax.random.PRNGKey(0)
    k_x, k_p = jax.random.split(key)

    x = jax.random.normal(k_x, (batch, num_patches, input_dim), jnp.float32)
    params = init_params(k_p, num_patches, input_dim, depth, heads,
                         mlp_dim, dim_head)

    ref = ref_forward(x, params, num_patches, input_dim, heads, dim_head)

    # 1) exact-precision variant (f32 MXU operands) -- tight check
    out_f32 = jax.block_until_ready(temporal_transformer_mean_forward(
        x, params, num_patches, input_dim, heads, dim_head,
        mxu_dtype=jnp.float32))
    assert out_f32.shape == (batch, input_dim), out_f32.shape
    assert jnp.allclose(out_f32, ref, rtol=2e-3, atol=2e-3), (
        float(jnp.max(jnp.abs(out_f32 - ref))))

    # 2) performance default: bf16 MXU operands, f32 accumulation/elementwise
    out_bf16 = jax.block_until_ready(temporal_transformer_mean_forward(
        x, params, num_patches, input_dim, heads, dim_head,
        mxu_dtype=jnp.bfloat16))
    assert out_bf16.shape == (batch, input_dim), out_bf16.shape
    assert jnp.allclose(out_bf16, ref, rtol=2e-2, atol=2e-2), (
        float(jnp.max(jnp.abs(out_bf16 - ref))))

    print("KERNEL_OK")
</pallas_src>

<mosaic_0001>
module attributes {stable_mosaic.version = 11 : i64} {
  func.func @fused_transformer_mean_kernel(%arg0: memref<2x8x32xf32, #tpu.memory_space<vmem>>, %arg1: memref<1x8x32xf32, #tpu.memory_space<vmem>>, %arg2: memref<2x1x32xf32, #tpu.memory_space<vmem>>, %arg3: memref<2x1x32xf32, #tpu.memory_space<vmem>>, %arg4: memref<2x32x192xf32, #tpu.memory_space<vmem>>, %arg5: memref<2x8x16x32xf32, #tpu.memory_space<vmem>>, %arg6: memref<2x1x32xf32, #tpu.memory_space<vmem>>, %arg7: memref<2x1x32xf32, #tpu.memory_space<vmem>>, %arg8: memref<2x1x32xf32, #tpu.memory_space<vmem>>, %arg9: memref<2x32x64xf32, #tpu.memory_space<vmem>>, %arg10: memref<2x1x64xf32, #tpu.memory_space<vmem>>, %arg11: memref<2x64x32xf32, #tpu.memory_space<vmem>>, %arg12: memref<2x1x32xf32, #tpu.memory_space<vmem>>, %arg13: memref<2x32xf32, #tpu.memory_space<vmem>>) attributes {dimension_semantics = [], scalar_prefetch = 0 : i64, scratch_operands = 0 : i64, tpu.core_type = #tpu.core_type<tc>} {
    %c0 = arith.constant 0 : index
    %c0_0 = arith.constant 0 : index
    %c0_1 = arith.constant 0 : index
    %0 = vector.load %arg0[%c0, %c0_0, %c0_1] : memref<2x8x32xf32, #tpu.memory_space<vmem>>, vector<2x8x32xf32>
    %c0_2 = arith.constant 0 : index
    %c0_3 = arith.constant 0 : index
    %c0_4 = arith.constant 0 : index
    %1 = vector.load %arg1[%c0_2, %c0_3, %c0_4] : memref<1x8x32xf32, #tpu.memory_space<vmem>>, vector<1x8x32xf32>
    %2 = vector.broadcast %1 : vector<1x8x32xf32> to vector<2x8x32xf32>
    %3 = arith.addf %0, %2 : vector<2x8x32xf32>
    %4 = vector.shape_cast %3 : vector<2x8x32xf32> to vector<16x32xf32>
    %c0_5 = arith.constant 0 : index
    %c0_6 = arith.constant 0 : index
    %c0_7 = arith.constant 0 : index
    %5 = vector.load %arg2[%c0_5, %c0_6, %c0_7] : memref<2x1x32xf32, #tpu.memory_space<vmem>>, vector<1x1x32xf32>
    %6 = vector.shape_cast %5 : vector<1x1x32xf32> to vector<1x32xf32>
    %c0_8 = arith.constant 0 : index
    %c0_9 = arith.constant 0 : index
    %c0_10 = arith.constant 0 : index
    %7 = vector.load %arg3[%c0_8, %c0_9, %c0_10] : memref<2x1x32xf32, #tpu.memory_space<vmem>>, vector<1x1x32xf32>
    %8 = vector.shape_cast %7 : vector<1x1x32xf32> to vector<1x32xf32>
    %cst = arith.constant dense<0.000000e+00> : vector<16xf32>
    %9 = vector.multi_reduction <add>, %4, %cst [1] : vector<16x32xf32> to vector<16xf32>
    %10 = vector.shape_cast %9 : vector<16xf32> to vector<16x1xf32>
    %cst_11 = arith.constant 3.125000e-02 : f32
    %11 = vector.broadcast %cst_11 : f32 to vector<16x1xf32>
    %12 = arith.mulf %10, %11 : vector<16x1xf32>
    %13 = vector.broadcast %12 : vector<16x1xf32> to vector<16x32xf32>
    %14 = arith.subf %4, %13 : vector<16x32xf32>
    %15 = arith.mulf %14, %14 : vector<16x32xf32>
    %cst_12 = arith.constant dense<0.000000e+00> : vector<16xf32>
    %16 = vector.multi_reduction <add>, %15, %cst_12 [1] : vector<16x32xf32> to vector<16xf32>
    %17 = vector.shape_cast %16 : vector<16xf32> to vector<16x1xf32>
    %cst_13 = arith.constant 3.125000e-02 : f32
    %18 = vector.broadcast %cst_13 : f32 to vector<16x1xf32>
    %19 = arith.mulf %17, %18 : vector<16x1xf32>
    %cst_14 = arith.constant 9.99999974E-6 : f32
    %20 = vector.broadcast %cst_14 : f32 to vector<16x1xf32>
    %21 = arith.addf %19, %20 : vector<16x1xf32>
    %22 = math.rsqrt %21 : vector<16x1xf32>
    %23 = vector.broadcast %22 : vector<16x1xf32> to vector<16x32xf32>
    %24 = arith.mulf %14, %23 : vector<16x32xf32>
    %25 = vector.broadcast %6 : vector<1x32xf32> to vector<16x32xf32>
    %26 = arith.mulf %24, %25 : vector<16x32xf32>
    %27 = vector.broadcast %8 : vector<1x32xf32> to vector<16x32xf32>
    %28 = arith.addf %26, %27 : vector<16x32xf32>
    %c0_15 = arith.constant 0 : index
    %c0_16 = arith.constant 0 : index
    %c0_17 = arith.constant 0 : index
    %29 = vector.load %arg4[%c0_15, %c0_16, %c0_17] : memref<2x32x192xf32, #tpu.memory_space<vmem>>, vector<1x32x192xf32>
    %30 = vector.shape_cast %29 : vector<1x32x192xf32> to vector<32x192xf32>
    %cst_18 = arith.constant dense<0.000000e+00> : vector<16x192xf32>
    %31 = tpu.matmul %28, %30, %cst_18 {dimension_numbers = #tpu.dot_dimension_numbers<[1], [0], [0], [1], [0, 0, 1, 1], [], []>} : vector<16x32xf32>, vector<32x192xf32>, vector<16x192xf32> -> vector<16x192xf32>
    %32 = vector.extract_strided_slice %31 {offsets = [0, 0], sizes = [16, 64], strides = [1, 1]} : vector<16x192xf32> to vector<16x64xf32>
    %33 = vector.shape_cast %32 : vector<16x64xf32> to vector<2x8x64xf32>
    %34 = vector.extract_strided_slice %33 {offsets = [0, 0, 0], sizes = [2, 8, 16], strides = [1, 1, 1]} : vector<2x8x64xf32> to vector<2x8x16xf32>
    %35 = vector.extract_strided_slice %33 {offsets = [0, 0, 16], sizes = [2, 8, 16], strides = [1, 1, 1]} : vector<2x8x64xf32> to vector<2x8x16xf32>
    %36 = vector.extract_strided_slice %33 {offsets = [0, 0, 32], sizes = [2, 8, 16], strides = [1, 1, 1]} : vector<2x8x64xf32> to vector<2x8x16xf32>
    %37 = vector.extract_strided_slice %33 {offsets = [0, 0, 48], sizes = [2, 8, 16], strides = [1, 1, 1]} : vector<2x8x64xf32> to vector<2x8x16xf32>
    %38 = vector.shape_cast %34 : vector<2x8x16xf32> to vector<1x2x8x16xf32>
    %39 = vector.shape_cast %35 : vector<2x8x16xf32> to vector<1x2x8x16xf32>
    %40 = vector.shape_cast %36 : vector<2x8x16xf32> to vector<1x2x8x16xf32>
    %41 = vector.shape_cast %37 : vector<2x8x16xf32> to vector<1x2x8x16xf32>
    %42 = tpu.concatenate %38, %39, %40, %41 in 0 : vector<1x2x8x16xf32>, vector<1x2x8x16xf32>, vector<1x2x8x16xf32>, vector<1x2x8x16xf32> -> vector<4x2x8x16xf32>
    %43 = vector.shape_cast %42 : vector<4x2x8x16xf32> to vector<8x8x16xf32>
    %44 = vector.extract_strided_slice %31 {offsets = [0, 64], sizes = [16, 64], strides = [1, 1]} : vector<16x192xf32> to vector<16x64xf32>
    %45 = vector.shape_cast %44 : vector<16x64xf32> to vector<2x8x64xf32>
    %46 = vector.extract_strided_slice %45 {offsets = [0, 0, 0], sizes = [2, 8, 16], strides = [1, 1, 1]} : vector<2x8x64xf32> to vector<2x8x16xf32>
    %47 = vector.extract_strided_slice %45 {offsets = [0, 0, 16], sizes = [2, 8, 16], strides = [1, 1, 1]} : vector<2x8x64xf32> to vector<2x8x16xf32>
    %48 = vector.extract_strided_slice %45 {offsets = [0, 0, 32], sizes = [2, 8, 16], strides = [1, 1, 1]} : vector<2x8x64xf32> to vector<2x8x16xf32>
    %49 = vector.extract_strided_slice %45 {offsets = [0, 0, 48], sizes = [2, 8, 16], strides = [1, 1, 1]} : vector<2x8x64xf32> to vector<2x8x16xf32>
    %50 = vector.shape_cast %46 : vector<2x8x16xf32> to vector<1x2x8x16xf32>
    %51 = vector.shape_cast %47 : vector<2x8x16xf32> to vector<1x2x8x16xf32>
    %52 = vector.shape_cast %48 : vector<2x8x16xf32> to vector<1x2x8x16xf32>
    %53 = vector.shape_cast %49 : vector<2x8x16xf32> to vector<1x2x8x16xf32>
    %54 = tpu.concatenate %50, %51, %52, %53 in 0 : vector<1x2x8x16xf32>, vector<1x2x8x16xf32>, vector<1x2x8x16xf32>, vector<1x2x8x16xf32> -> vector<4x2x8x16xf32>
    %55 = vector.shape_cast %54 : vector<4x2x8x16xf32> to vector<8x8x16xf32>
    %56 = vector.extract_strided_slice %31 {offsets = [0, 128], sizes = [16, 64], strides = [1, 1]} : vector<16x192xf32> to vector<16x64xf32>
    %57 = vector.shape_cast %56 : vector<16x64xf32> to vector<2x8x64xf32>
    %58 = vector.extract_strided_slice %57 {offsets = [0, 0, 0], sizes = [2, 8, 16], strides = [1, 1, 1]} : vector<2x8x64xf32> to vector<2x8x16xf32>
    %59 = vector.extract_strided_slice %57 {offsets = [0, 0, 16], sizes = [2, 8, 16], strides = [1, 1, 1]} : vector<2x8x64xf32> to vector<2x8x16xf32>
    %60 = vector.extract_strided_slice %57 {offsets = [0, 0, 32], sizes = [2, 8, 16], strides = [1, 1, 1]} : vector<2x8x64xf32> to vector<2x8x16xf32>
    %61 = vector.extract_strided_slice %57 {offsets = [0, 0, 48], sizes = [2, 8, 16], strides = [1, 1, 1]} : vector<2x8x64xf32> to vector<2x8x16xf32>
    %62 = vector.shape_cast %58 : vector<2x8x16xf32> to vector<1x2x8x16xf32>
    %63 = vector.shape_cast %59 : vector<2x8x16xf32> to vector<1x2x8x16xf32>
    %64 = vector.shape_cast %60 : vector<2x8x16xf32> to vector<1x2x8x16xf32>
    %65 = vector.shape_cast %61 : vector<2x8x16xf32> to vector<1x2x8x16xf32>
    %66 = tpu.concatenate %62, %63, %64, %65 in 0 : vector<1x2x8x16xf32>, vector<1x2x8x16xf32>, vector<1x2x8x16xf32>, vector<1x2x8x16xf32> -> vector<4x2x8x16xf32>
    %67 = vector.shape_cast %66 : vector<4x2x8x16xf32> to vector<8x8x16xf32>
    "tpu.trace_start"() <{level = 10 : i32, message = "znd,zmd->znm"}> : () -> ()
    %cst_19 = arith.constant dense<0.000000e+00> : vector<8x8x8xf32>
    %68 = tpu.matmul %43, %55, %cst_19 {dimension_numbers = #tpu.dot_dimension_numbers<[2], [2], [1], [1], [0, 0, 0, 1, 1, 1], [0], [0]>} : vector<8x8x16xf32>, vector<8x8x16xf32>, vector<8x8x8xf32> -> vector<8x8x8xf32>
    "tpu.trace_stop"() : () -> ()
    %cst_20 = arith.constant 2.500000e-01 : f32
    %69 = vector.broadcast %cst_20 : f32 to vector<8x8x8xf32>
    %70 = arith.mulf %68, %69 : vector<8x8x8xf32>
    %cst_21 = arith.constant dense<0xFF800000> : vector<8x8xf32>
    %71 = vector.multi_reduction <maximumf>, %70, %cst_21 [2] : vector<8x8x8xf32> to vector<8x8xf32>
    %72 = vector.shape_cast %71 : vector<8x8xf32> to vector<8x8x1xf32>
    %73 = vector.broadcast %72 : vector<8x8x1xf32> to vector<8x8x8xf32>
    %74 = arith.subf %70, %73 : vector<8x8x8xf32>
    %75 = math.exp %74 : vector<8x8x8xf32>
    %cst_22 = arith.constant dense<0.000000e+00> : vector<8x8xf32>
    %76 = vector.multi_reduction <add>, %75, %cst_22 [2] : vector<8x8x8xf32> to vector<8x8xf32>
    %77 = vector.shape_cast %76 : vector<8x8xf32> to vector<8x8x1xf32>
    %78 = tpu.reciprocal %77 {approx = true} : vector<8x8x1xf32> -> vector<8x8x1xf32>
    %79 = vector.broadcast %78 : vector<8x8x1xf32> to vector<8x8x8xf32>
    %80 = arith.mulf %75, %79 : vector<8x8x8xf32>
    "tpu.trace_start"() <{level = 10 : i32, message = "znm,zmd->znd"}> : () -> ()
    %cst_23 = arith.constant dense<0.000000e+00> : vector<8x8x16xf32>
    %81 = tpu.matmul %80, %67, %cst_23 {dimension_numbers = #tpu.dot_dimension_numbers<[2], [1], [1], [2], [0, 0, 0, 1, 1, 2], [0], [0]>} : vector<8x8x8xf32>, vector<8x8x16xf32>, vector<8x8x16xf32> -> vector<8x8x16xf32>
    "tpu.trace_stop"() : () -> ()
    %c0_24 = arith.constant 0 : index
    %c0_25 = arith.constant 0 : index
    %c0_26 = arith.constant 0 : index
    %c0_27 = arith.constant 0 : index
    %82 = vector.load %arg5[%c0_24, %c0_25, %c0_26, %c0_27] : memref<2x8x16x32xf32, #tpu.memory_space<vmem>>, vector<1x8x16x32xf32>
    %83 = vector.shape_cast %82 : vector<1x8x16x32xf32> to vector<8x16x32xf32>
    "tpu.trace_start"() <{level = 10 : i32, message = "zne,zed->znd"}> : () -> ()
    %cst_28 = arith.constant dense<0.000000e+00> : vector<8x8x32xf32>
    %84 = tpu.matmul %81, %83, %cst_28 {dimension_numbers = #tpu.dot_dimension_numbers<[2], [1], [1], [2], [0, 0, 0, 1, 1, 2], [0], [0]>} : vector<8x8x16xf32>, vector<8x16x32xf32>, vector<8x8x32xf32> -> vector<8x8x32xf32>
    "tpu.trace_stop"() : () -> ()
    %85 = vector.shape_cast %84 : vector<8x8x32xf32> to vector<4x16x32xf32>
    %cst_29 = arith.constant dense<0.000000e+00> : vector<16x32xf32>
    %86 = vector.multi_reduction <add>, %85, %cst_29 [0] : vector<4x16x32xf32> to vector<16x32xf32>
    %c0_30 = arith.constant 0 : index
    %c0_31 = arith.constant 0 : index
    %c0_32 = arith.constant 0 : index
    %87 = vector.load %arg6[%c0_30, %c0_31, %c0_32] : memref<2x1x32xf32, #tpu.memory_space<vmem>>, vector<1x1x32xf32>
    %88 = vector.shape_cast %87 : vector<1x1x32xf32> to vector<1x32xf32>
    %89 = vector.broadcast %88 : vector<1x32xf32> to vector<16x32xf32>
    %90 = arith.addf %86, %89 : vector<16x32xf32>
    %91 = arith.addf %4, %90 : vector<16x32xf32>
    %c0_33 = arith.constant 0 : index
    %c0_34 = arith.constant 0 : index
    %c0_35 = arith.constant 0 : index
    %92 = vector.load %arg7[%c0_33, %c0_34, %c0_35] : memref<2x1x32xf32, #tpu.memory_space<vmem>>, vector<1x1x32xf32>
    %93 = vector.shape_cast %92 : vector<1x1x32xf32> to vector<1x32xf32>
    %c0_36 = arith.constant 0 : index
    %c0_37 = arith.constant 0 : index
    %c0_38 = arith.constant 0 : index
    %94 = vector.load %arg8[%c0_36, %c0_37, %c0_38] : memref<2x1x32xf32, #tpu.memory_space<vmem>>, vector<1x1x32xf32>
    %95 = vector.shape_cast %94 : vector<1x1x32xf32> to vector<1x32xf32>
    %cst_39 = arith.constant dense<0.000000e+00> : vector<16xf32>
    %96 = vector.multi_reduction <add>, %91, %cst_39 [1] : vector<16x32xf32> to vector<16xf32>
    %97 = vector.shape_cast %96 : vector<16xf32> to vector<16x1xf32>
    %cst_40 = arith.constant 3.125000e-02 : f32
    %98 = vector.broadcast %cst_40 : f32 to vector<16x1xf32>
    %99 = arith.mulf %97, %98 : vector<16x1xf32>
    %100 = vector.broadcast %99 : vector<16x1xf32> to vector<16x32xf32>
    %101 = arith.subf %91, %100 : vector<16x32xf32>
    %102 = arith.mulf %101, %101 : vector<16x32xf32>
    %cst_41 = arith.constant dense<0.000000e+00> : vector<16xf32>
    %103 = vector.multi_reduction <add>, %102, %cst_41 [1] : vector<16x32xf32> to vector<16xf32>
    %104 = vector.shape_cast %103 : vector<16xf32> to vector<16x1xf32>
    %cst_42 = arith.constant 3.125000e-02 : f32
    %105 = vector.broadcast %cst_42 : f32 to vector<16x1xf32>
    %106 = arith.mulf %104, %105 : vector<16x1xf32>
    %cst_43 = arith.constant 9.99999974E-6 : f32
    %107 = vector.broadcast %cst_43 : f32 to vector<16x1xf32>
    %108 = arith.addf %106, %107 : vector<16x1xf32>
    %109 = math.rsqrt %108 : vector<16x1xf32>
    %110 = vector.broadcast %109 : vector<16x1xf32> to vector<16x32xf32>
    %111 = arith.mulf %101, %110 : vector<16x32xf32>
    %112 = vector.broadcast %93 : vector<1x32xf32> to vector<16x32xf32>
    %113 = arith.mulf %111, %112 : vector<16x32xf32>
    %114 = vector.broadcast %95 : vector<1x32xf32> to vector<16x32xf32>
    %115 = arith.addf %113, %114 : vector<16x32xf32>
    %c0_44 = arith.constant 0 : index
    %c0_45 = arith.constant 0 : index
    %c0_46 = arith.constant 0 : index
    %116 = vector.load %arg9[%c0_44, %c0_45, %c0_46] : memref<2x32x64xf32, #tpu.memory_space<vmem>>, vector<1x32x64xf32>
    %117 = vector.shape_cast %116 : vector<1x32x64xf32> to vector<32x64xf32>
    %cst_47 = arith.constant dense<0.000000e+00> : vector<16x64xf32>
    %118 = tpu.matmul %115, %117, %cst_47 {dimension_numbers = #tpu.dot_dimension_numbers<[1], [0], [0], [1], [0, 0, 1, 1], [], []>} : vector<16x32xf32>, vector<32x64xf32>, vector<16x64xf32> -> vector<16x64xf32>
    %c0_48 = arith.constant 0 : index
    %c0_49 = arith.constant 0 : index
    %c0_50 = arith.constant 0 : index
    %119 = vector.load %arg10[%c0_48, %c0_49, %c0_50] : memref<2x1x64xf32, #tpu.memory_space<vmem>>, vector<1x1x64xf32>
    %120 = vector.shape_cast %119 : vector<1x1x64xf32> to vector<1x64xf32>
    %121 = vector.broadcast %120 : vector<1x64xf32> to vector<16x64xf32>
    %122 = arith.addf %118, %121 : vector<16x64xf32>
    %cst_51 = arith.constant 5.000000e-01 : f32
    %123 = vector.broadcast %cst_51 : f32 to vector<16x64xf32>
    %124 = arith.mulf %123, %122 : vector<16x64xf32>
    %125 = arith.mulf %122, %122 : vector<16x64xf32>
    %126 = arith.mulf %125, %122 : vector<16x64xf32>
    %cst_52 = arith.constant 4.471500e-02 : f32
    %127 = vector.broadcast %cst_52 : f32 to vector<16x64xf32>
    %128 = arith.mulf %127, %126 : vector<16x64xf32>
    %129 = arith.addf %122, %128 : vector<16x64xf32>
    %cst_53 = arith.constant 0.797884583 : f32
    %130 = vector.broadcast %cst_53 : f32 to vector<16x64xf32>
    %131 = arith.mulf %130, %129 : vector<16x64xf32>
    %132 = math.tanh %131 : vector<16x64xf32>
    %cst_54 = arith.constant 1.000000e+00 : f32
    %133 = vector.broadcast %cst_54 : f32 to vector<16x64xf32>
    %134 = arith.addf %133, %132 : vector<16x64xf32>
    %135 = arith.mulf %124, %134 : vector<16x64xf32>
    %c0_55 = arith.constant 0 : index
    %c0_56 = arith.constant 0 : index
    %c0_57 = arith.constant 0 : index
    %136 = vector.load %arg11[%c0_55, %c0_56, %c0_57] : memref<2x64x32xf32, #tpu.memory_space<vmem>>, vector<1x64x32xf32>
    %137 = vector.shape_cast %136 : vector<1x64x32xf32> to vector<64x32xf32>
    %cst_58 = arith.constant dense<0.000000e+00> : vector<16x32xf32>
    %138 = tpu.matmul %135, %137, %cst_58 {dimension_numbers = #tpu.dot_dimension_numbers<[1], [0], [0], [1], [0, 0, 1, 1], [], []>} : vector<16x64xf32>, vector<64x32xf32>, vector<16x32xf32> -> vector<16x32xf32>
    %c0_59 = arith.constant 0 : index
    %c0_60 = arith.constant 0 : index
    %c0_61 = arith.constant 0 : index
    %139 = vector.load %arg12[%c0_59, %c0_60, %c0_61] : memref<2x1x32xf32, #tpu.memory_space<vmem>>, vector<1x1x32xf32>
    %140 = vector.shape_cast %139 : vector<1x1x32xf32> to vector<1x32xf32>
    %141 = vector.broadcast %140 : vector<1x32xf32> to vector<16x32xf32>
    %142 = arith.addf %138, %141 : vector<16x32xf32>
    %143 = arith.addf %91, %142 : vector<16x32xf32>
    %c1 = arith.constant 1 : index
    %c0_62 = arith.constant 0 : index
    %c0_63 = arith.constant 0 : index
    %144 = vector.load %arg2[%c1, %c0_62, %c0_63] : memref<2x1x32xf32, #tpu.memory_space<vmem>>, vector<1x1x32xf32>
    %145 = vector.shape_cast %144 : vector<1x1x32xf32> to vector<1x32xf32>
    %c1_64 = arith.constant 1 : index
    %c0_65 = arith.constant 0 : index
    %c0_66 = arith.constant 0 : index
    %146 = vector.load %arg3[%c1_64, %c0_65, %c0_66] : memref<2x1x32xf32, #tpu.memory_space<vmem>>, vector<1x1x32xf32>
    %147 = vector.shape_cast %146 : vector<1x1x32xf32> to vector<1x32xf32>
    %cst_67 = arith.constant dense<0.000000e+00> : vector<16xf32>
    %148 = vector.multi_reduction <add>, %143, %cst_67 [1] : vector<16x32xf32> to vector<16xf32>
    %149 = vector.shape_cast %148 : vector<16xf32> to vector<16x1xf32>
    %cst_68 = arith.constant 3.125000e-02 : f32
    %150 = vector.broadcast %cst_68 : f32 to vector<16x1xf32>
    %151 = arith.mulf %149, %150 : vector<16x1xf32>
    %152 = vector.broadcast %151 : vector<16x1xf32> to vector<16x32xf32>
    %153 = arith.subf %143, %152 : vector<16x32xf32>
    %154 = arith.mulf %153, %153 : vector<16x32xf32>
    %cst_69 = arith.constant dense<0.000000e+00> : vector<16xf32>
    %155 = vector.multi_reduction <add>, %154, %cst_69 [1] : vector<16x32xf32> to vector<16xf32>
    %156 = vector.shape_cast %155 : vector<16xf32> to vector<16x1xf32>
    %cst_70 = arith.constant 3.125000e-02 : f32
    %157 = vector.broadcast %cst_70 : f32 to vector<16x1xf32>
    %158 = arith.mulf %156, %157 : vector<16x1xf32>
    %cst_71 = arith.constant 9.99999974E-6 : f32
    %159 = vector.broadcast %cst_71 : f32 to vector<16x1xf32>
    %160 = arith.addf %158, %159 : vector<16x1xf32>
    %161 = math.rsqrt %160 : vector<16x1xf32>
    %162 = vector.broadcast %161 : vector<16x1xf32> to vector<16x32xf32>
    %163 = arith.mulf %153, %162 : vector<16x32xf32>
    %164 = vector.broadcast %145 : vector<1x32xf32> to vector<16x32xf32>
    %165 = arith.mulf %163, %164 : vector<16x32xf32>
    %166 = vector.broadcast %147 : vector<1x32xf32> to vector<16x32xf32>
    %167 = arith.addf %165, %166 : vector<16x32xf32>
    %c1_72 = arith.constant 1 : index
    %c0_73 = arith.constant 0 : index
    %c0_74 = arith.constant 0 : index
    %168 = vector.load %arg4[%c1_72, %c0_73, %c0_74] : memref<2x32x192xf32, #tpu.memory_space<vmem>>, vector<1x32x192xf32>
    %169 = vector.shape_cast %168 : vector<1x32x192xf32> to vector<32x192xf32>
    %cst_75 = arith.constant dense<0.000000e+00> : vector<16x192xf32>
    %170 = tpu.matmul %167, %169, %cst_75 {dimension_numbers = #tpu.dot_dimension_numbers<[1], [0], [0], [1], [0, 0, 1, 1], [], []>} : vector<16x32xf32>, vector<32x192xf32>, vector<16x192xf32> -> vector<16x192xf32>
    %171 = vector.extract_strided_slice %170 {offsets = [0, 0], sizes = [16, 64], strides = [1, 1]} : vector<16x192xf32> to vector<16x64xf32>
    %172 = vector.shape_cast %171 : vector<16x64xf32> to vector<2x8x64xf32>
    %173 = vector.extract_strided_slice %172 {offsets = [0, 0, 0], sizes = [2, 8, 16], strides = [1, 1, 1]} : vector<2x8x64xf32> to vector<2x8x16xf32>
    %174 = vector.extract_strided_slice %172 {offsets = [0, 0, 16], sizes = [2, 8, 16], strides = [1, 1, 1]} : vector<2x8x64xf32> to vector<2x8x16xf32>
    %175 = vector.extract_strided_slice %172 {offsets = [0, 0, 32], sizes = [2, 8, 16], strides = [1, 1, 1]} : vector<2x8x64xf32> to vector<2x8x16xf32>
    %176 = vector.extract_strided_slice %172 {offsets = [0, 0, 48], sizes = [2, 8, 16], strides = [1, 1, 1]} : vector<2x8x64xf32> to vector<2x8x16xf32>
    %177 = vector.shape_cast %173 : vector<2x8x16xf32> to vector<1x2x8x16xf32>
    %178 = vector.shape_cast %174 : vector<2x8x16xf32> to vector<1x2x8x16xf32>
    %179 = vector.shape_cast %175 : vector<2x8x16xf32> to vector<1x2x8x16xf32>
    %180 = vector.shape_cast %176 : vector<2x8x16xf32> to vector<1x2x8x16xf32>
    %181 = tpu.concatenate %177, %178, %179, %180 in 0 : vector<1x2x8x16xf32>, vector<1x2x8x16xf32>, vector<1x2x8x16xf32>, vector<1x2x8x16xf32> -> vector<4x2x8x16xf32>
    %182 = vector.shape_cast %181 : vector<4x2x8x16xf32> to vector<8x8x16xf32>
    %183 = vector.extract_strided_slice %170 {offsets = [0, 64], sizes = [16, 64], strides = [1, 1]} : vector<16x192xf32> to vector<16x64xf32>
    %184 = vector.shape_cast %183 : vector<16x64xf32> to vector<2x8x64xf32>
    %185 = vector.extract_strided_slice %184 {offsets = [0, 0, 0], sizes = [2, 8, 16], strides = [1, 1, 1]} : vector<2x8x64xf32> to vector<2x8x16xf32>
    %186 = vector.extract_strided_slice %184 {offsets = [0, 0, 16], sizes = [2, 8, 16], strides = [1, 1, 1]} : vector<2x8x64xf32> to vector<2x8x16xf32>
    %187 = vector.extract_strided_slice %184 {offsets = [0, 0, 32], sizes = [2, 8, 16], strides = [1, 1, 1]} : vector<2x8x64xf32> to vector<2x8x16xf32>
    %188 = vector.extract_strided_slice %184 {offsets = [0, 0, 48], sizes = [2, 8, 16], strides = [1, 1, 1]} : vector<2x8x64xf32> to vector<2x8x16xf32>
    %189 = vector.shape_cast %185 : vector<2x8x16xf32> to vector<1x2x8x16xf32>
    %190 = vector.shape_cast %186 : vector<2x8x16xf32> to vector<1x2x8x16xf32>
    %191 = vector.shape_cast %187 : vector<2x8x16xf32> to vector<1x2x8x16xf32>
    %192 = vector.shape_cast %188 : vector<2x8x16xf32> to vector<1x2x8x16xf32>
    %193 = tpu.concatenate %189, %190, %191, %192 in 0 : vector<1x2x8x16xf32>, vector<1x2x8x16xf32>, vector<1x2x8x16xf32>, vector<1x2x8x16xf32> -> vector<4x2x8x16xf32>
    %194 = vector.shape_cast %193 : vector<4x2x8x16xf32> to vector<8x8x16xf32>
    %195 = vector.extract_strided_slice %170 {offsets = [0, 128], sizes = [16, 64], strides = [1, 1]} : vector<16x192xf32> to vector<16x64xf32>
    %196 = vector.shape_cast %195 : vector<16x64xf32> to vector<2x8x64xf32>
    %197 = vector.extract_strided_slice %196 {offsets = [0, 0, 0], sizes = [2, 8, 16], strides = [1, 1, 1]} : vector<2x8x64xf32> to vector<2x8x16xf32>
    %198 = vector.extract_strided_slice %196 {offsets = [0, 0, 16], sizes = [2, 8, 16], strides = [1, 1, 1]} : vector<2x8x64xf32> to vector<2x8x16xf32>
    %199 = vector.extract_strided_slice %196 {offsets = [0, 0, 32], sizes = [2, 8, 16], strides = [1, 1, 1]} : vector<2x8x64xf32> to vector<2x8x16xf32>
    %200 = vector.extract_strided_slice %196 {offsets = [0, 0, 48], sizes = [2, 8, 16], strides = [1, 1, 1]} : vector<2x8x64xf32> to vector<2x8x16xf32>
    %201 = vector.shape_cast %197 : vector<2x8x16xf32> to vector<1x2x8x16xf32>
    %202 = vector.shape_cast %198 : vector<2x8x16xf32> to vector<1x2x8x16xf32>
    %203 = vector.shape_cast %199 : vector<2x8x16xf32> to vector<1x2x8x16xf32>
    %204 = vector.shape_cast %200 : vector<2x8x16xf32> to vector<1x2x8x16xf32>
    %205 = tpu.concatenate %201, %202, %203, %204 in 0 : vector<1x2x8x16xf32>, vector<1x2x8x16xf32>, vector<1x2x8x16xf32>, vector<1x2x8x16xf32> -> vector<4x2x8x16xf32>
    %206 = vector.shape_cast %205 : vector<4x2x8x16xf32> to vector<8x8x16xf32>
    "tpu.trace_start"() <{level = 10 : i32, message = "znd,zmd->znm"}> : () -> ()
    %cst_76 = arith.constant dense<0.000000e+00> : vector<8x8x8xf32>
    %207 = tpu.matmul %182, %194, %cst_76 {dimension_numbers = #tpu.dot_dimension_numbers<[2], [2], [1], [1], [0, 0, 0, 1, 1, 1], [0], [0]>} : vector<8x8x16xf32>, vector<8x8x16xf32>, vector<8x8x8xf32> -> vector<8x8x8xf32>
    "tpu.trace_stop"() : () -> ()
    %cst_77 = arith.constant 2.500000e-01 : f32
    %208 = vector.broadcast %cst_77 : f32 to vector<8x8x8xf32>
    %209 = arith.mulf %207, %208 : vector<8x8x8xf32>
    %cst_78 = arith.constant dense<0xFF800000> : vector<8x8xf32>
    %210 = vector.multi_reduction <maximumf>, %209, %cst_78 [2] : vector<8x8x8xf32> to vector<8x8xf32>
    %211 = vector.shape_cast %210 : vector<8x8xf32> to vector<8x8x1xf32>
    %212 = vector.broadcast %211 : vector<8x8x1xf32> to vector<8x8x8xf32>
    %213 = arith.subf %209, %212 : vector<8x8x8xf32>
    %214 = math.exp %213 : vector<8x8x8xf32>
    %cst_79 = arith.constant dense<0.000000e+00> : vector<8x8xf32>
    %215 = vector.multi_reduction <add>, %214, %cst_79 [2] : vector<8x8x8xf32> to vector<8x8xf32>
    %216 = vector.shape_cast %215 : vector<8x8xf32> to vector<8x8x1xf32>
    %217 = tpu.reciprocal %216 {approx = true} : vector<8x8x1xf32> -> vector<8x8x1xf32>
    %218 = vector.broadcast %217 : vector<8x8x1xf32> to vector<8x8x8xf32>
    %219 = arith.mulf %214, %218 : vector<8x8x8xf32>
    "tpu.trace_start"() <{level = 10 : i32, message = "znm,zmd->znd"}> : () -> ()
    %cst_80 = arith.constant dense<0.000000e+00> : vector<8x8x16xf32>
    %220 = tpu.matmul %219, %206, %cst_80 {dimension_numbers = #tpu.dot_dimension_numbers<[2], [1], [1], [2], [0, 0, 0, 1, 1, 2], [0], [0]>} : vector<8x8x8xf32>, vector<8x8x16xf32>, vector<8x8x16xf32> -> vector<8x8x16xf32>
    "tpu.trace_stop"() : () -> ()
    %c1_81 = arith.constant 1 : index
    %c0_82 = arith.constant 0 : index
    %c0_83 = arith.constant 0 : index
    %c0_84 = arith.constant 0 : index
    %221 = vector.load %arg5[%c1_81, %c0_82, %c0_83, %c0_84] : memref<2x8x16x32xf32, #tpu.memory_space<vmem>>, vector<1x8x16x32xf32>
    %222 = vector.shape_cast %221 : vector<1x8x16x32xf32> to vector<8x16x32xf32>
    "tpu.trace_start"() <{level = 10 : i32, message = "zne,zed->znd"}> : () -> ()
    %cst_85 = arith.constant dense<0.000000e+00> : vector<8x8x32xf32>
    %223 = tpu.matmul %220, %222, %cst_85 {dimension_numbers = #tpu.dot_dimension_numbers<[2], [1], [1], [2], [0, 0, 0, 1, 1, 2], [0], [0]>} : vector<8x8x16xf32>, vector<8x16x32xf32>, vector<8x8x32xf32> -> vector<8x8x32xf32>
    "tpu.trace_stop"() : () -> ()
    %224 = vector.shape_cast %223 : vector<8x8x32xf32> to vector<4x16x32xf32>
    %cst_86 = arith.constant dense<0.000000e+00> : vector<16x32xf32>
    %225 = vector.multi_reduction <add>, %224, %cst_86 [0] : vector<4x16x32xf32> to vector<16x32xf32>
    %c1_87 = arith.constant 1 : index
    %c0_88 = arith.constant 0 : index
    %c0_89 = arith.constant 0 : index
    %226 = vector.load %arg6[%c1_87, %c0_88, %c0_89] : memref<2x1x32xf32, #tpu.memory_space<vmem>>, vector<1x1x32xf32>
    %227 = vector.shape_cast %226 : vector<1x1x32xf32> to vector<1x32xf32>
    %228 = vector.broadcast %227 : vector<1x32xf32> to vector<16x32xf32>
    %229 = arith.addf %225, %228 : vector<16x32xf32>
    %230 = arith.addf %143, %229 : vector<16x32xf32>
    %c1_90 = arith.constant 1 : index
    %c0_91 = arith.constant 0 : index
    %c0_92 = arith.constant 0 : index
    %231 = vector.load %arg7[%c1_90, %c0_91, %c0_92] : memref<2x1x32xf32, #tpu.memory_space<vmem>>, vector<1x1x32xf32>
    %232 = vector.shape_cast %231 : vector<1x1x32xf32> to vector<1x32xf32>
    %c1_93 = arith.constant 1 : index
    %c0_94 = arith.constant 0 : index
    %c0_95 = arith.constant 0 : index
    %233 = vector.load %arg8[%c1_93, %c0_94, %c0_95] : memref<2x1x32xf32, #tpu.memory_space<vmem>>, vector<1x1x32xf32>
    %234 = vector.shape_cast %233 : vector<1x1x32xf32> to vector<1x32xf32>
    %cst_96 = arith.constant dense<0.000000e+00> : vector<16xf32>
    %235 = vector.multi_reduction <add>, %230, %cst_96 [1] : vector<16x32xf32> to vector<16xf32>
    %236 = vector.shape_cast %235 : vector<16xf32> to vector<16x1xf32>
    %cst_97 = arith.constant 3.125000e-02 : f32
    %237 = vector.broadcast %cst_97 : f32 to vector<16x1xf32>
    %238 = arith.mulf %236, %237 : vector<16x1xf32>
    %239 = vector.broadcast %238 : vector<16x1xf32> to vector<16x32xf32>
    %240 = arith.subf %230, %239 : vector<16x32xf32>
    %241 = arith.mulf %240, %240 : vector<16x32xf32>
    %cst_98 = arith.constant dense<0.000000e+00> : vector<16xf32>
    %242 = vector.multi_reduction <add>, %241, %cst_98 [1] : vector<16x32xf32> to vector<16xf32>
    %243 = vector.shape_cast %242 : vector<16xf32> to vector<16x1xf32>
    %cst_99 = arith.constant 3.125000e-02 : f32
    %244 = vector.broadcast %cst_99 : f32 to vector<16x1xf32>
    %245 = arith.mulf %243, %244 : vector<16x1xf32>
    %cst_100 = arith.constant 9.99999974E-6 : f32
    %246 = vector.broadcast %cst_100 : f32 to vector<16x1xf32>
    %247 = arith.addf %245, %246 : vector<16x1xf32>
    %248 = math.rsqrt %247 : vector<16x1xf32>
    %249 = vector.broadcast %248 : vector<16x1xf32> to vector<16x32xf32>
    %250 = arith.mulf %240, %249 : vector<16x32xf32>
    %251 = vector.broadcast %232 : vector<1x32xf32> to vector<16x32xf32>
    %252 = arith.mulf %250, %251 : vector<16x32xf32>
    %253 = vector.broadcast %234 : vector<1x32xf32> to vector<16x32xf32>
    %254 = arith.addf %252, %253 : vector<16x32xf32>
    %c1_101 = arith.constant 1 : index
    %c0_102 = arith.constant 0 : index
    %c0_103 = arith.constant 0 : index
    %255 = vector.load %arg9[%c1_101, %c0_102, %c0_103] : memref<2x32x64xf32, #tpu.memory_space<vmem>>, vector<1x32x64xf32>
    %256 = vector.shape_cast %255 : vector<1x32x64xf32> to vector<32x64xf32>
    %cst_104 = arith.constant dense<0.000000e+00> : vector<16x64xf32>
    %257 = tpu.matmul %254, %256, %cst_104 {dimension_numbers = #tpu.dot_dimension_numbers<[1], [0], [0], [1], [0, 0, 1, 1], [], []>} : vector<16x32xf32>, vector<32x64xf32>, vector<16x64xf32> -> vector<16x64xf32>
    %c1_105 = arith.constant 1 : index
    %c0_106 = arith.constant 0 : index
    %c0_107 = arith.constant 0 : index
    %258 = vector.load %arg10[%c1_105, %c0_106, %c0_107] : memref<2x1x64xf32, #tpu.memory_space<vmem>>, vector<1x1x64xf32>
    %259 = vector.shape_cast %258 : vector<1x1x64xf32> to vector<1x64xf32>
    %260 = vector.broadcast %259 : vector<1x64xf32> to vector<16x64xf32>
    %261 = arith.addf %257, %260 : vector<16x64xf32>
    %cst_108 = arith.constant 5.000000e-01 : f32
    %262 = vector.broadcast %cst_108 : f32 to vector<16x64xf32>
    %263 = arith.mulf %262, %261 : vector<16x64xf32>
    %264 = arith.mulf %261, %261 : vector<16x64xf32>
    %265 = arith.mulf %264, %261 : vector<16x64xf32>
    %cst_109 = arith.constant 4.471500e-02 : f32
    %266 = vector.broadcast %cst_109 : f32 to vector<16x64xf32>
    %267 = arith.mulf %266, %265 : vector<16x64xf32>
    %268 = arith.addf %261, %267 : vector<16x64xf32>
    %cst_110 = arith.constant 0.797884583 : f32
    %269 = vector.broadcast %cst_110 : f32 to vector<16x64xf32>
    %270 = arith.mulf %269, %268 : vector<16x64xf32>
    %271 = math.tanh %270 : vector<16x64xf32>
    %cst_111 = arith.constant 1.000000e+00 : f32
    %272 = vector.broadcast %cst_111 : f32 to vector<16x64xf32>
    %273 = arith.addf %272, %271 : vector<16x64xf32>
    %274 = arith.mulf %263, %273 : vector<16x64xf32>
    %c1_112 = arith.constant 1 : index
    %c0_113 = arith.constant 0 : index
    %c0_114 = arith.constant 0 : index
    %275 = vector.load %arg11[%c1_112, %c0_113, %c0_114] : memref<2x64x32xf32, #tpu.memory_space<vmem>>, vector<1x64x32xf32>
    %276 = vector.shape_cast %275 : vector<1x64x32xf32> to vector<64x32xf32>
    %cst_115 = arith.constant dense<0.000000e+00> : vector<16x32xf32>
    %277 = tpu.matmul %274, %276, %cst_115 {dimension_numbers = #tpu.dot_dimension_numbers<[1], [0], [0], [1], [0, 0, 1, 1], [], []>} : vector<16x64xf32>, vector<64x32xf32>, vector<16x32xf32> -> vector<16x32xf32>
    %c1_116 = arith.constant 1 : index
    %c0_117 = arith.constant 0 : index
    %c0_118 = arith.constant 0 : index
    %278 = vector.load %arg12[%c1_116, %c0_117, %c0_118] : memref<2x1x32xf32, #tpu.memory_space<vmem>>, vector<1x1x32xf32>
    %279 = vector.shape_cast %278 : vector<1x1x32xf32> to vector<1x32xf32>
    %280 = vector.broadcast %279 : vector<1x32xf32> to vector<16x32xf32>
    %281 = arith.addf %277, %280 : vector<16x32xf32>
    %282 = arith.addf %230, %281 : vector<16x32xf32>
    %283 = vector.shape_cast %282 : vector<16x32xf32> to vector<2x8x32xf32>
    %cst_119 = arith.constant dense<0.000000e+00> : vector<2x32xf32>
    %284 = vector.multi_reduction <add>, %283, %cst_119 [1] : vector<2x8x32xf32> to vector<2x32xf32>
    %cst_120 = arith.constant 1.250000e-01 : f32
    %285 = vector.broadcast %cst_120 : f32 to vector<2x32xf32>
    %286 = arith.mulf %284, %285 : vector<2x32xf32>
    %c0_121 = arith.constant 0 : index
    %c0_122 = arith.constant 0 : index
    %287 = vector.load %arg13[%c0_121, %c0_122] : memref<2x32xf32, #tpu.memory_space<vmem>>, vector<2x32xf32>
    tpu.vector_store %arg13[%c0_121, %c0_122], %286 {strides = array<i32>} : memref<2x32xf32, #tpu.memory_space<vmem>>, vector<2x32xf32>,
    return
  }
}

</mosaic_0001>

<llo_original>
// kernel: tpu_custom_call.1
$region0: #{tpu_custom_call.1}
  #allocation0 [shape = 'u32[]', space=smem, size = 0x4, offset = 0x4, fixed_abs, tag = 'smem constant byte address 0x4 - core index']
  #allocation1 [shape = 'u32[144,128]{1,0:T(1,128)}', space=vmem, size = 0x12000, scoped, tag = 'internal scratch']
  %s0 = inlined_call_operand.hbm [shape: f32[2,8,32], index: 0, kind: input, shape index: {}]
  %s1 = inlined_call_operand.vmem [shape: f32[1,8,32], index: 1, kind: input, shape index: {}]
  %s2 = inlined_call_operand.vmem [shape: f32[2,1,32], index: 2, kind: input, shape index: {}]
  %s3 = inlined_call_operand.vmem [shape: f32[2,1,32], index: 3, kind: input, shape index: {}]
  %s4 = inlined_call_operand.vmem [shape: f32[2,32,192], index: 4, kind: input, shape index: {}]
  %s5 = inlined_call_operand.hbm [shape: f32[2,8,16,32], index: 5, kind: input, shape index: {}]
  %s6 = inlined_call_operand.vmem [shape: f32[2,1,32], index: 6, kind: input, shape index: {}]
  %s7 = inlined_call_operand.vmem [shape: f32[2,1,32], index: 7, kind: input, shape index: {}]
  %s8 = inlined_call_operand.vmem [shape: f32[2,1,32], index: 8, kind: input, shape index: {}]
  %s9 = inlined_call_operand.vmem [shape: f32[2,32,64], index: 9, kind: input, shape index: {}]
  %s10 = inlined_call_operand.vmem [shape: f32[2,1,64], index: 10, kind: input, shape index: {}]
  %s11 = inlined_call_operand.vmem [shape: f32[2,64,32], index: 11, kind: input, shape index: {}]
  %s12 = inlined_call_operand.vmem [shape: f32[2,1,32], index: 12, kind: input, shape index: {}]
  %s13 = inlined_call_operand.hbm [shape: f32[2,32], index: 13, kind: output, shape index: {}]
  %s14 = sld [smem:[#allocation0]]
  $region70: #{tpu_custom_call.1} parent=0
    _
  %s16 = ssub.s32 1, %s14
  %s17 = scalar_select 0, %s16, %s14
  $region1: #{tpu_custom_call.1} parent=0
    #allocation2 [shape = 'u8[8192]{0}', space=vmem, size = 0x2000, scoped, tag = 'input window, operand 0, single buffered']
    #allocation3 [shape = 's32[1]{0}', space=sflag, size = 0x4, scoped, tag = 'scoped memory for tpu_custom_call.1']
    #allocation4 [shape = 's32[1]{0}', space=sflag, size = 0x4, scoped, tag = 'scoped memory for tpu_custom_call.1']
    #allocation5 [shape = 'u8[131072]{0}', space=vmem, size = 0x20000, scoped, tag = 'input window, operand 5, single buffered']
    #allocation6 [shape = 's32[1]{0}', space=sflag, size = 0x4, scoped, tag = 'scoped memory for tpu_custom_call.1']
    #allocation7 [shape = 'u8[1024]{0}', space=vmem, size = 0x400, scoped, tag = 'output window, operand 0, single buffered']
    %18 = vsyncpa [#allocation3], 0
    %19 = vsyncpa [#allocation6], 0
    %20 = vsyncpa [#allocation4], 0
    // Predicated region
    $region2: #{tpu_custom_call.1} parent=1 // pred_check
      _
    $region3: #{tpu_custom_call.1} parent=1 // pred_check_branch
      %22 = sbr.rel (0) target = $region5
    $region4: #{tpu_custom_call.1} parent=1 // pred_region
      %s24 = ssub.s32 256, 256
      %25 = vsyncadd [#allocation3], %s24
      %s26 = sshll.u32 [#allocation2], 4
      %s27 = int_to_ptr.vmem [resolvable:$true] %s26
      %32 = dma.hbm_to_vmem [thread:$0]  %s0, 256, %s27, [#allocation3], 128, 128, 8
    $region5: #{tpu_custom_call.1} parent=1 // pred_fallthru
      _
    // Predicated region
    $region6: #{tpu_custom_call.1} parent=1 // pred_check
      _
    $region7: #{tpu_custom_call.1} parent=1 // pred_check_branch
      %34 = sbr.rel (0) target = $region9
    $region8: #{tpu_custom_call.1} parent=1 // pred_region
      _
    $region9: #{tpu_custom_call.1} parent=1 // pred_fallthru
      _
    // Predicated region
    $region10: #{tpu_custom_call.1} parent=1 // pred_check
      _
    $region11: #{tpu_custom_call.1} parent=1 // pred_check_branch
      %36 = sbr.rel (0) target = $region13
    $region12: #{tpu_custom_call.1} parent=1 // pred_region
      _
    $region13: #{tpu_custom_call.1} parent=1 // pred_fallthru
      _
    // Predicated region
    $region14: #{tpu_custom_call.1} parent=1 // pred_check
      _
    $region15: #{tpu_custom_call.1} parent=1 // pred_check_branch
      %38 = sbr.rel (0) target = $region17
    $region16: #{tpu_custom_call.1} parent=1 // pred_region
      _
    $region17: #{tpu_custom_call.1} parent=1 // pred_fallthru
      _
    // Predicated region
    $region18: #{tpu_custom_call.1} parent=1 // pred_check
      _
    $region19: #{tpu_custom_call.1} parent=1 // pred_check_branch
      %40 = sbr.rel (0) target = $region21
    $region20: #{tpu_custom_call.1} parent=1 // pred_region
      _
    $region21: #{tpu_custom_call.1} parent=1 // pred_fallthru
      _
    // Predicated region
    $region22: #{tpu_custom_call.1} parent=1 // pred_check
      _
    $region23: #{tpu_custom_call.1} parent=1 // pred_check_branch
      %42 = sbr.rel (0) target = $region25
    $region24: #{tpu_custom_call.1} parent=1 // pred_region
      %s44 = ssub.s32 4096, 4096
      %45 = vsyncadd [#allocation6], %s44
      %s46 = sshll.u32 [#allocation5], 4
      %s47 = int_to_ptr.vmem [resolvable:$true] %s46
      %52 = dma.hbm_to_vmem [thread:$0]  %s5, 4096, %s47, [#allocation6], 128, 128, 8
    $region25: #{tpu_custom_call.1} parent=1 // pred_fallthru
      _
    // Predicated region
    $region26: #{tpu_custom_call.1} parent=1 // pred_check
      _
    $region27: #{tpu_custom_call.1} parent=1 // pred_check_branch
      %54 = sbr.rel (0) target = $region29
    $region28: #{tpu_custom_call.1} parent=1 // pred_region
      _
    $region29: #{tpu_custom_call.1} parent=1 // pred_fallthru
      _
    // Predicated region
    $region30: #{tpu_custom_call.1} parent=1 // pred_check
      _
    $region31: #{tpu_custom_call.1} parent=1 // pred_check_branch
      %56 = sbr.rel (0) target = $region33
    $region32: #{tpu_custom_call.1} parent=1 // pred_region
      _
    $region33: #{tpu_custom_call.1} parent=1 // pred_fallthru
      _
    // Predicated region
    $region34: #{tpu_custom_call.1} parent=1 // pred_check
      _
    $region35: #{tpu_custom_call.1} parent=1 // pred_check_branch
      %58 = sbr.rel (0) target = $region37
    $region36: #{tpu_custom_call.1} parent=1 // pred_region
      _
    $region37: #{tpu_custom_call.1} parent=1 // pred_fallthru
      _
    // Predicated region
    $region38: #{tpu_custom_call.1} parent=1 // pred_check
      _
    $region39: #{tpu_custom_call.1} parent=1 // pred_check_branch
      %60 = sbr.rel (0) target = $region41
    $region40: #{tpu_custom_call.1} parent=1 // pred_region
      _
    $region41: #{tpu_custom_call.1} parent=1 // pred_fallthru
      _
    // Predicated region
    $region42: #{tpu_custom_call.1} parent=1 // pred_check
      _
    $region43: #{tpu_custom_call.1} parent=1 // pred_check_branch
      %62 = sbr.rel (0) target = $region45
    $region44: #{tpu_custom_call.1} parent=1 // pred_region
      _
    $region45: #{tpu_custom_call.1} parent=1 // pred_fallthru
      _
    // Predicated region
    $region46: #{tpu_custom_call.1} parent=1 // pred_check
      _
    $region47: #{tpu_custom_call.1} parent=1 // pred_check_branch
      %64 = sbr.rel (0) target = $region49
    $region48: #{tpu_custom_call.1} parent=1 // pred_region
      _
    $region49: #{tpu_custom_call.1} parent=1 // pred_fallthru
      _
    // Predicated region
    $region50: #{tpu_custom_call.1} parent=1 // pred_check
      _
    $region51: #{tpu_custom_call.1} parent=1 // pred_check_branch
      %66 = sbr.rel (0) target = $region53
    $region52: #{tpu_custom_call.1} parent=1 // pred_region
      _
    $region53: #{tpu_custom_call.1} parent=1 // pred_fallthru
      _
    // Predicated region
    $region54: #{tpu_custom_call.1} parent=1 // pred_check
      _
    $region55: #{tpu_custom_call.1} parent=1 // pred_check_branch
      %68 = sbr.rel (0) target = $region57
    $region56: #{tpu_custom_call.1} parent=1 // pred_region
      %69 = dma.done [#allocation3], 256
    $region57: #{tpu_custom_call.1} parent=1 // pred_fallthru
      _
    // Predicated region
    $region58: #{tpu_custom_call.1} parent=1 // pred_check
      _
    $region59: #{tpu_custom_call.1} parent=1 // pred_check_branch
      %71 = sbr.rel (0) target = $region61
    $region60: #{tpu_custom_call.1} parent=1 // pred_region
      %72 = dma.done [#allocation6], 4096
    $region61: #{tpu_custom_call.1} parent=1 // pred_fallthru
      _
    %v73 = vld [vmem:[#allocation2] sm:$0xff]
    %v74 = vld [vmem:[#allocation2 + $0x8] sm:$0xff]
    %v75 = vld [vmem:[%s1] sm:$0xff]
    %v76 = vadd.f32 %v73, %v75
    %v77 = vadd.f32 %v74, %v75
    %v78 = vld [vmem:[%s2] sm:$0x1]
    %v79 = vld [vmem:[%s3] sm:$0x1]
    %vm80 = vcmask 261120
    %v81 = vsel %vm80, %v76, 0.0
    %82 = vadd.xlane.f32.xlu0 %v81
    %v83 = vpop.xlane.xlu0 %82
    %v84 = vsel %vm80, %v77, 0.0
    %85 = vadd.xlane.f32.xlu0 %v84
    %v86 = vpop.xlane.xlu0 %85
    %v87 = vmul.f32 %v83, 0.03125
    %v88 = vmul.f32 %v86, 0.03125
    %v89 = vsub.f32 %v76, %v87
    %v90 = vsub.f32 %v77, %v88
    %v91 = vmul.f32 %v89, %v89
    %v92 = vmul.f32 %v90, %v90
    %v93 = vsel %vm80, %v91, 0.0
    %94 = vadd.xlane.f32.xlu0 %v93
    %v95 = vpop.xlane.xlu0 %94
    %v96 = vsel %vm80, %v92, 0.0
    %97 = vadd.xlane.f32.xlu0 %v96
    %v98 = vpop.xlane.xlu0 %97
    %v99 = vmul.f32 %v95, 0.03125
    %v100 = vmul.f32 %v98, 0.03125
    %v101 = vadd.f32 %v99, 1e-05
    %v102 = vadd.f32 %v100, 1e-05
    %v103 = vrsqrt.pop %v101
    %v104 = vrsqrt.pop %v102
    %v105 = vmul.f32 %v89, %v103
    %v106 = vmul.f32 %v90, %v104
    %v108 = vlaneseq
    %v109 = vshrl.u32 %v108, 7
    %v110 = vsub.s32 0, %v109
    %v111 = vrot.slane %v78, %v110
    %v113 = vmul.f32 %v105, %v111
    %v114 = vmul.f32 %v106, %v111
    %v116 = vlaneseq
    %v117 = vshrl.u32 %v116, 7
    %v118 = vsub.s32 0, %v117
    %v119 = vrot.slane %v79, %v118
    %v121 = vadd.f32 %v113, %v119
    %v122 = vadd.f32 %v114, %v119
    %v123 = vld [vmem:[%s4] sm:$0xff]
    %v124 = vld [vmem:[%s4 + $0x8] sm:$0xff]
    %v125 = vld [vmem:[%s4 + $0x10] sm:$0xff]
    %v126 = vld [vmem:[%s4 + $0x18] sm:$0xff]
    %v127 = vld [vmem:[%s4 + $0x20] sm:$0xff]
    %v128 = vld [vmem:[%s4 + $0x28] sm:$0xff]
    %v129 = vld [vmem:[%s4 + $0x30] sm:$0xff]
    %v130 = vld [vmem:[%s4 + $0x38] sm:$0xff]
    %v132 = vsel %vm80, %v121, 0
    %v135 = vsel %vm80, %v122, 0
    %137 = vmatprep.subr.mxu0 %v124
    %138 = vmatpush1.msra.mxu0 %v123
    %139 = vmatprep.subr.mxu0 %v126
    %140 = vmatpush1.msra.mxu0 %v125
    %141 = vmatprep.subr.mxu0 %v128
    %142 = vmatpush1.msra.mxu0 %v127
    %143 = vmatprep.subr.mxu0 %v130
    %144 = vmatpush1.msra.mxu0 %v129
    %145 = vmatprep.subr.mxu0 0.0
    %146 = vmatpush1.msra.mxu0 0.0
    %147 = vmatprep.subr.mxu0 0.0
    %148 = vmatpush1.msra.mxu0 0.0
    %149 = vmatprep.subr.mxu0 0.0
    %150 = vmatpush1.msra.mxu0 0.0
    %151 = vmatprep.subr.mxu0 0.0
    %152 = vmatpush1.msra.mxu0 0.0
    %153 = vmatprep.subr.mxu0 0.0
    %154 = vmatpush1.msra.mxu0 0.0
    %155 = vmatprep.subr.mxu0 0.0
    %156 = vmatpush1.msra.mxu0 0.0
    %157 = vmatprep.subr.mxu0 0.0
    %158 = vmatpush1.msra.mxu0 0.0
    %159 = vmatprep.subr.mxu0 0.0
    %160 = vmatpush1.msra.mxu0 0.0
    %161 = vmatprep.subr.mxu0 0.0
    %162 = vmatpush1.msra.mxu0 0.0
    %163 = vmatprep.subr.mxu0 0.0
    %164 = vmatpush1.msra.mxu0 0.0
    %165 = vmatprep.subr.mxu0 0.0
    %166 = vmatpush1.msra.mxu0 0.0
    %167 = vmatprep.subr.mxu0 0.0
    %168 = vmatpush1.msra.mxu0 0.0
    %169 = vmatprep.subr.mxu0 0.0
    %170 = vmatpush1.msra.mxu0 0.0
    %171 = vmatprep.subr.mxu0 0.0
    %172 = vmatpush1.msra.mxu0 0.0
    %173 = vmatprep.subr.mxu0 0.0
    %174 = vmatpush1.msra.mxu0 0.0
    %175 = vmatprep.subr.mxu0 0.0
    %176 = vmatpush1.msra.mxu0 0.0
    %177 = vmatprep.subr.mxu0 0.0
    %178 = vmatpush1.msra.mxu0 0.0
    %179 = vmatprep.subr.mxu0 0.0
    %180 = vmatpush1.msra.mxu0 0.0
    %181 = vmatprep.subr.mxu0 0.0
    %182 = vmatpush1.msra.mxu0 0.0
    %183 = vmatprep.subr.mxu0 0.0
    %184 = vmatpush1.msra.mxu0 0.0
    %185 = vmatprep.subr.mxu0 0.0
    %186 = vmatpush1.msra.mxu0 0.0
    %187 = vmatprep.subr.mxu0 0.0
    %188 = vmatpush1.msra.mxu0 0.0
    %189 = vmatprep.subr.mxu0 0.0
    %190 = vmatpush1.msra.mxu0 0.0
    %191 = vmatprep.subr.mxu0 0.0
    %192 = vmatpush1.msra.mxu0 0.0
    %193 = vmatprep.subr.mxu0 0.0
    %194 = vmatpush1.msra.mxu0 0.0
    %195 = vmatprep.subr.mxu0 0.0
    %196 = vmatpush1.msra.mxu0 0.0
    %197 = vmatprep.subr.mxu0 0.0
    %198 = vmatpush1.msra.mxu0 0.0
    %199 = vmatprep.subr.mxu0 0.0
    %200 = vmatpush1.msra.mxu0 0.0
    %201 = vmatprep.mubr.f32.mxu0 0.0
    %202 = vmatmul.mubr.f32.gmra.mrb[0].mxu0 %v132
    %v203 = vpop.f32.mrb[0].mxu0
    %v204 = vadd.f32 0.0, %v203
    %v205 = vpop.f32.mrb[0].mxu0
    %v206 = vadd.f32 0.0, %v205
    %207 = vmatprep.mubr.f32.mxu0 0.0
    %208 = vmatmul.mubr.f32.gmra.mrb[0].mxu0 %v135
    %v209 = vpop.f32.mrb[0].mxu0
    %v210 = vadd.f32 0.0, %v209
    %v211 = vpop.f32.mrb[0].mxu0
    %v212 = vadd.f32 0.0, %v211
    %213 = vdwg.mxu0
    %216 = vrot.lane.b32.xlu0 %v204, 112
    %v217 = vpop.permute.xlu0 %216
    %218 = vrot.lane.b32.xlu0 %v210, 112
    %v219 = vpop.permute.xlu0 %218
    %220 = vrot.lane.b32.xlu0 %v204, 96
    %v221 = vpop.permute.xlu0 %220
    %222 = vrot.lane.b32.xlu0 %v210, 96
    %v223 = vpop.permute.xlu0 %222
    %224 = vrot.lane.b32.xlu0 %v204, 80
    %v225 = vpop.permute.xlu0 %224
    %226 = vrot.lane.b32.xlu0 %v210, 80
    %v227 = vpop.permute.xlu0 %226
    %230 = vrot.lane.b32.xlu0 %v206, 112
    %v231 = vpop.permute.xlu0 %230
    %232 = vrot.lane.b32.xlu0 %v212, 112
    %v233 = vpop.permute.xlu0 %232
    %236 = vrot.lane.b32.xlu0 %v206, 96
    %v237 = vpop.permute.xlu0 %236
    %238 = vrot.lane.b32.xlu0 %v212, 96
    %v239 = vpop.permute.xlu0 %238
    %242 = vrot.lane.b32.xlu0 %v206, 80
    %v243 = vpop.permute.xlu0 %242
    %244 = vrot.lane.b32.xlu0 %v212, 80
    %v245 = vpop.permute.xlu0 %244
    %248 = vrot.lane.b32.xlu0 %v204, 64
    %v249 = vpop.permute.xlu0 %248
    %vm250 = vcmask 130048
    %v251 = vsel %vm250, %v204, 0
    %v253 = vsel %vm250, %v249, 0
    %255 = vmatprep.subr.mxu0 0.0
    %256 = vmatpush1.xpose.msra.mxu0 %v253
    %257 = vmatprep.subr.mxu0 0.0
    %258 = vmatpush1.xpose.msra.mxu0 0.0
    %259 = vmatprep.subr.mxu0 0.0
    %260 = vmatpush1.xpose.msra.mxu0 0.0
    %261 = vmatprep.subr.mxu0 0.0
    %262 = vmatpush1.xpose.msra.mxu0 0.0
    %263 = vmatprep.subr.mxu0 0.0
    %264 = vmatpush1.xpose.msra.mxu0 0.0
    %265 = vmatprep.subr.mxu0 0.0
    %266 = vmatpush1.xpose.msra.mxu0 0.0
    %267 = vmatprep.subr.mxu0 0.0
    %268 = vmatpush1.xpose.msra.mxu0 0.0
    %269 = vmatprep.subr.mxu0 0.0
    %270 = vmatpush1.xpose.msra.mxu0 0.0
    %271 = vmatprep.subr.mxu0 0.0
    %272 = vmatpush1.xpose.msra.mxu0 0.0
    %273 = vmatprep.subr.mxu0 0.0
    %274 = vmatpush1.xpose.msra.mxu0 0.0
    %275 = vmatprep.subr.mxu0 0.0
    %276 = vmatpush1.xpose.msra.mxu0 0.0
    %277 = vmatprep.subr.mxu0 0.0
    %278 = vmatpush1.xpose.msra.mxu0 0.0
    %279 = vmatprep.subr.mxu0 0.0
    %280 = vmatpush1.xpose.msra.mxu0 0.0
    %281 = vmatprep.subr.mxu0 0.0
    %282 = vmatpush1.xpose.msra.mxu0 0.0
    %283 = vmatprep.subr.mxu0 0.0
    %284 = vmatpush1.xpose.msra.mxu0 0.0
    %285 = vmatprep.subr.mxu0 0.0
    %286 = vmatpush1.xpose.msra.mxu0 0.0
    %287 = vmatprep.subr.mxu0 0.0
    %288 = vmatpush1.xpose.msra.mxu0 0.0
    %289 = vmatprep.subr.mxu0 0.0
    %290 = vmatpush1.xpose.msra.mxu0 0.0
    %291 = vmatprep.subr.mxu0 0.0
    %292 = vmatpush1.xpose.msra.mxu0 0.0
    %293 = vmatprep.subr.mxu0 0.0
    %294 = vmatpush1.xpose.msra.mxu0 0.0
    %295 = vmatprep.subr.mxu0 0.0
    %296 = vmatpush1.xpose.msra.mxu0 0.0
    %297 = vmatprep.subr.mxu0 0.0
    %298 = vmatpush1.xpose.msra.mxu0 0.0
    %299 = vmatprep.subr.mxu0 0.0
    %300 = vmatpush1.xpose.msra.mxu0 0.0
    %301 = vmatprep.subr.mxu0 0.0
    %302 = vmatpush1.xpose.msra.mxu0 0.0
    %303 = vmatprep.subr.mxu0 0.0
    %304 = vmatpush1.xpose.msra.mxu0 0.0
    %305 = vmatprep.subr.mxu0 0.0
    %306 = vmatpush1.xpose.msra.mxu0 0.0
    %307 = vmatprep.subr.mxu0 0.0
    %308 = vmatpush1.xpose.msra.mxu0 0.0
    %309 = vmatprep.subr.mxu0 0.0
    %310 = vmatpush1.xpose.msra.mxu0 0.0
    %311 = vmatprep.subr.mxu0 0.0
    %312 = vmatpush1.xpose.msra.mxu0 0.0
    %313 = vmatprep.subr.mxu0 0.0
    %314 = vmatpush1.xpose.msra.mxu0 0.0
    %315 = vmatprep.subr.mxu0 0.0
    %316 = vmatpush1.xpose.msra.mxu0 0.0
    %317 = vmatprep.subr.mxu0 0.0
    %318 = vmatpush1.xpose.msra.mxu0 0.0
    %319 = vmatprep.mubr.f32.mxu0 0.0
    %320 = vmatmul.mubr.f32.gmra.mrb[0].mxu0 %v251
    %v321 = vpop.f32.mrb[0].mxu0
    %v322 = vadd.f32 0.0, %v321
    %v323 = vpop.f32.mrb[0].mxu0
    %324 = vdwg.mxu0
    %325 = vrot.lane.b32.xlu0 %v210, 64
    %v326 = vpop.permute.xlu0 %325
    %v327 = vsel %vm250, %v210, 0
    %v329 = vsel %vm250, %v326, 0
    %331 = vmatprep.subr.mxu0 0.0
    %332 = vmatpush1.xpose.msra.mxu0 %v329
    %333 = vmatprep.subr.mxu0 0.0
    %334 = vmatpush1.xpose.msra.mxu0 0.0
    %335 = vmatprep.subr.mxu0 0.0
    %336 = vmatpush1.xpose.msra.mxu0 0.0
    %337 = vmatprep.subr.mxu0 0.0
    %338 = vmatpush1.xpose.msra.mxu0 0.0
    %339 = vmatprep.subr.mxu0 0.0
    %340 = vmatpush1.xpose.msra.mxu0 0.0
    %341 = vmatprep.subr.mxu0 0.0
    %342 = vmatpush1.xpose.msra.mxu0 0.0
    %343 = vmatprep.subr.mxu0 0.0
    %344 = vmatpush1.xpose.msra.mxu0 0.0
    %345 = vmatprep.subr.mxu0 0.0
    %346 = vmatpush1.xpose.msra.mxu0 0.0
    %347 = vmatprep.subr.mxu0 0.0
    %348 = vmatpush1.xpose.msra.mxu0 0.0
    %349 = vmatprep.subr.mxu0 0.0
    %350 = vmatpush1.xpose.msra.mxu0 0.0
    %351 = vmatprep.subr.mxu0 0.0
    %352 = vmatpush1.xpose.msra.mxu0 0.0
    %353 = vmatprep.subr.mxu0 0.0
    %354 = vmatpush1.xpose.msra.mxu0 0.0
    %355 = vmatprep.subr.mxu0 0.0
    %356 = vmatpush1.xpose.msra.mxu0 0.0
    %357 = vmatprep.subr.mxu0 0.0
    %358 = vmatpush1.xpose.msra.mxu0 0.0
    %359 = vmatprep.subr.mxu0 0.0
    %360 = vmatpush1.xpose.msra.mxu0 0.0
    %361 = vmatprep.subr.mxu0 0.0
    %362 = vmatpush1.xpose.msra.mxu0 0.0
    %363 = vmatprep.subr.mxu0 0.0
    %364 = vmatpush1.xpose.msra.mxu0 0.0
    %365 = vmatprep.subr.mxu0 0.0
    %366 = vmatpush1.xpose.msra.mxu0 0.0
    %367 = vmatprep.subr.mxu0 0.0
    %368 = vmatpush1.xpose.msra.mxu0 0.0
    %369 = vmatprep.subr.mxu0 0.0
    %370 = vmatpush1.xpose.msra.mxu0 0.0
    %371 = vmatprep.subr.mxu0 0.0
    %372 = vmatpush1.xpose.msra.mxu0 0.0
    %373 = vmatprep.subr.mxu0 0.0
    %374 = vmatpush1.xpose.msra.mxu0 0.0
    %375 = vmatprep.subr.mxu0 0.0
    %376 = vmatpush1.xpose.msra.mxu0 0.0
    %377 = vmatprep.subr.mxu0 0.0
    %378 = vmatpush1.xpose.msra.mxu0 0.0
    %379 = vmatprep.subr.mxu0 0.0
    %380 = vmatpush1.xpose.msra.mxu0 0.0
    %381 = vmatprep.subr.mxu0 0.0
    %382 = vmatpush1.xpose.msra.mxu0 0.0
    %383 = vmatprep.subr.mxu0 0.0
    %384 = vmatpush1.xpose.msra.mxu0 0.0
    %385 = vmatprep.subr.mxu0 0.0
    %386 = vmatpush1.xpose.msra.mxu0 0.0
    %387 = vmatprep.subr.mxu0 0.0
    %388 = vmatpush1.xpose.msra.mxu0 0.0
    %389 = vmatprep.subr.mxu0 0.0
    %390 = vmatpush1.xpose.msra.mxu0 0.0
    %391 = vmatprep.subr.mxu0 0.0
    %392 = vmatpush1.xpose.msra.mxu0 0.0
    %393 = vmatprep.subr.mxu0 0.0
    %394 = vmatpush1.xpose.msra.mxu0 0.0
    %395 = vmatprep.mubr.f32.mxu0 0.0
    %396 = vmatmul.mubr.f32.gmra.mrb[0].mxu0 %v327
    %v397 = vpop.f32.mrb[0].mxu0
    %v398 = vadd.f32 0.0, %v397
    %v399 = vpop.f32.mrb[0].mxu0
    %400 = vdwg.mxu0
    %401 = vrot.lane.b32.xlu0 %v217, 64
    %v402 = vpop.permute.xlu0 %401
    %v403 = vsel %vm250, %v217, 0
    %v405 = vsel %vm250, %v402, 0
    %407 = vmatprep.subr.mxu0 0.0
    %408 = vmatpush1.xpose.msra.mxu0 %v405
    %409 = vmatprep.subr.mxu0 0.0
    %410 = vmatpush1.xpose.msra.mxu0 0.0
    %411 = vmatprep.subr.mxu0 0.0
    %412 = vmatpush1.xpose.msra.mxu0 0.0
    %413 = vmatprep.subr.mxu0 0.0
    %414 = vmatpush1.xpose.msra.mxu0 0.0
    %415 = vmatprep.subr.mxu0 0.0
    %416 = vmatpush1.xpose.msra.mxu0 0.0
    %417 = vmatprep.subr.mxu0 0.0
    %418 = vmatpush1.xpose.msra.mxu0 0.0
    %419 = vmatprep.subr.mxu0 0.0
    %420 = vmatpush1.xpose.msra.mxu0 0.0
    %421 = vmatprep.subr.mxu0 0.0
    %422 = vmatpush1.xpose.msra.mxu0 0.0
    %423 = vmatprep.subr.mxu0 0.0
    %424 = vmatpush1.xpose.msra.mxu0 0.0
    %425 = vmatprep.subr.mxu0 0.0
    %426 = vmatpush1.xpose.msra.mxu0 0.0
    %427 = vmatprep.subr.mxu0 0.0
    %428 = vmatpush1.xpose.msra.mxu0 0.0
    %429 = vmatprep.subr.mxu0 0.0
    %430 = vmatpush1.xpose.msra.mxu0 0.0
    %431 = vmatprep.subr.mxu0 0.0
    %432 = vmatpush1.xpose.msra.mxu0 0.0
    %433 = vmatprep.subr.mxu0 0.0
    %434 = vmatpush1.xpose.msra.mxu0 0.0
    %435 = vmatprep.subr.mxu0 0.0
    %436 = vmatpush1.xpose.msra.mxu0 0.0
    %437 = vmatprep.subr.mxu0 0.0
    %438 = vmatpush1.xpose.msra.mxu0 0.0
    %439 = vmatprep.subr.mxu0 0.0
    %440 = vmatpush1.xpose.msra.mxu0 0.0
    %441 = vmatprep.subr.mxu0 0.0
    %442 = vmatpush1.xpose.msra.mxu0 0.0
    %443 = vmatprep.subr.mxu0 0.0
    %444 = vmatpush1.xpose.msra.mxu0 0.0
    %445 = vmatprep.subr.mxu0 0.0
    %446 = vmatpush1.xpose.msra.mxu0 0.0
    %447 = vmatprep.subr.mxu0 0.0
    %448 = vmatpush1.xpose.msra.mxu0 0.0
    %449 = vmatprep.subr.mxu0 0.0
    %450 = vmatpush1.xpose.msra.mxu0 0.0
    %451 = vmatprep.subr.mxu0 0.0
    %452 = vmatpush1.xpose.msra.mxu0 0.0
    %453 = vmatprep.subr.mxu0 0.0
    %454 = vmatpush1.xpose.msra.mxu0 0.0
    %455 = vmatprep.subr.mxu0 0.0
    %456 = vmatpush1.xpose.msra.mxu0 0.0
    %457 = vmatprep.subr.mxu0 0.0
    %458 = vmatpush1.xpose.msra.mxu0 0.0
    %459 = vmatprep.subr.mxu0 0.0
    %460 = vmatpush1.xpose.msra.mxu0 0.0
    %461 = vmatprep.subr.mxu0 0.0
    %462 = vmatpush1.xpose.msra.mxu0 0.0
    %463 = vmatprep.subr.mxu0 0.0
    %464 = vmatpush1.xpose.msra.mxu0 0.0
    %465 = vmatprep.subr.mxu0 0.0
    %466 = vmatpush1.xpose.msra.mxu0 0.0
    %467 = vmatprep.subr.mxu0 0.0
    %468 = vmatpush1.xpose.msra.mxu0 0.0
    %469 = vmatprep.subr.mxu0 0.0
    %470 = vmatpush1.xpose.msra.mxu0 0.0
    %471 = vmatprep.mubr.f32.mxu0 0.0
    %472 = vmatmul.mubr.f32.gmra.mrb[0].mxu0 %v403
    %v473 = vpop.f32.mrb[0].mxu0
    %v474 = vadd.f32 0.0, %v473
    %v475 = vpop.f32.mrb[0].mxu0
    %476 = vdwg.mxu0
    %477 = vrot.lane.b32.xlu0 %v219, 64
    %v478 = vpop.permute.xlu0 %477
    %v479 = vsel %vm250, %v219, 0
    %v481 = vsel %vm250, %v478, 0
    %483 = vmatprep.subr.mxu0 0.0
    %484 = vmatpush1.xpose.msra.mxu0 %v481
    %485 = vmatprep.subr.mxu0 0.0
    %486 = vmatpush1.xpose.msra.mxu0 0.0
    %487 = vmatprep.subr.mxu0 0.0
    %488 = vmatpush1.xpose.msra.mxu0 0.0
    %489 = vmatprep.subr.mxu0 0.0
    %490 = vmatpush1.xpose.msra.mxu0 0.0
    %491 = vmatprep.subr.mxu0 0.0
    %492 = vmatpush1.xpose.msra.mxu0 0.0
    %493 = vmatprep.subr.mxu0 0.0
    %494 = vmatpush1.xpose.msra.mxu0 0.0
    %495 = vmatprep.subr.mxu0 0.0
    %496 = vmatpush1.xpose.msra.mxu0 0.0
    %497 = vmatprep.subr.mxu0 0.0
    %498 = vmatpush1.xpose.msra.mxu0 0.0
    %499 = vmatprep.subr.mxu0 0.0
    %500 = vmatpush1.xpose.msra.mxu0 0.0
    %501 = vmatprep.subr.mxu0 0.0
    %502 = vmatpush1.xpose.msra.mxu0 0.0
    %503 = vmatprep.subr.mxu0 0.0
    %504 = vmatpush1.xpose.msra.mxu0 0.0
    %505 = vmatprep.subr.mxu0 0.0
    %506 = vmatpush1.xpose.msra.mxu0 0.0
    %507 = vmatprep.subr.mxu0 0.0
    %508 = vmatpush1.xpose.msra.mxu0 0.0
    %509 = vmatprep.subr.mxu0 0.0
    %510 = vmatpush1.xpose.msra.mxu0 0.0
    %511 = vmatprep.subr.mxu0 0.0
    %512 = vmatpush1.xpose.msra.mxu0 0.0
    %513 = vmatprep.subr.mxu0 0.0
    %514 = vmatpush1.xpose.msra.mxu0 0.0
    %515 = vmatprep.subr.mxu0 0.0
    %516 = vmatpush1.xpose.msra.mxu0 0.0
    %517 = vmatprep.subr.mxu0 0.0
    %518 = vmatpush1.xpose.msra.mxu0 0.0
    %519 = vmatprep.subr.mxu0 0.0
    %520 = vmatpush1.xpose.msra.mxu0 0.0
    %521 = vmatprep.subr.mxu0 0.0
    %522 = vmatpush1.xpose.msra.mxu0 0.0
    %523 = vmatprep.subr.mxu0 0.0
    %524 = vmatpush1.xpose.msra.mxu0 0.0
    %525 = vmatprep.subr.mxu0 0.0
    %526 = vmatpush1.xpose.msra.mxu0 0.0
    %527 = vmatprep.subr.mxu0 0.0
    %528 = vmatpush1.xpose.msra.mxu0 0.0
    %529 = vmatprep.subr.mxu0 0.0
    %530 = vmatpush1.xpose.msra.mxu0 0.0
    %531 = vmatprep.subr.mxu0 0.0
    %532 = vmatpush1.xpose.msra.mxu0 0.0
    %533 = vmatprep.subr.mxu0 0.0
    %534 = vmatpush1.xpose.msra.mxu0 0.0
    %535 = vmatprep.subr.mxu0 0.0
    %536 = vmatpush1.xpose.msra.mxu0 0.0
    %537 = vmatprep.subr.mxu0 0.0
    %538 = vmatpush1.xpose.msra.mxu0 0.0
    %539 = vmatprep.subr.mxu0 0.0
    %540 = vmatpush1.xpose.msra.mxu0 0.0
    %541 = vmatprep.subr.mxu0 0.0
    %542 = vmatpush1.xpose.msra.mxu0 0.0
    %543 = vmatprep.subr.mxu0 0.0
    %544 = vmatpush1.xpose.msra.mxu0 0.0
    %545 = vmatprep.subr.mxu0 0.0
    %546 = vmatpush1.xpose.msra.mxu0 0.0
    %547 = vmatprep.mubr.f32.mxu0 0.0
    %548 = vmatmul.mubr.f32.gmra.mrb[0].mxu0 %v479
    %v549 = vpop.f32.mrb[0].mxu0
    %v550 = vadd.f32 0.0, %v549
    %v551 = vpop.f32.mrb[0].mxu0
    %552 = vdwg.mxu0
    %553 = vrot.lane.b32.xlu0 %v221, 64
    %v554 = vpop.permute.xlu0 %553
    %v555 = vsel %vm250, %v221, 0
    %v557 = vsel %vm250, %v554, 0
    %559 = vmatprep.subr.mxu0 0.0
    %560 = vmatpush1.xpose.msra.mxu0 %v557
    %561 = vmatprep.subr.mxu0 0.0
    %562 = vmatpush1.xpose.msra.mxu0 0.0
    %563 = vmatprep.subr.mxu0 0.0
    %564 = vmatpush1.xpose.msra.mxu0 0.0
    %565 = vmatprep.subr.mxu0 0.0
    %566 = vmatpush1.xpose.msra.mxu0 0.0
    %567 = vmatprep.subr.mxu0 0.0
    %568 = vmatpush1.xpose.msra.mxu0 0.0
    %569 = vmatprep.subr.mxu0 0.0
    %570 = vmatpush1.xpose.msra.mxu0 0.0
    %571 = vmatprep.subr.mxu0 0.0
    %572 = vmatpush1.xpose.msra.mxu0 0.0
    %573 = vmatprep.subr.mxu0 0.0
    %574 = vmatpush1.xpose.msra.mxu0 0.0
    %575 = vmatprep.subr.mxu0 0.0
    %576 = vmatpush1.xpose.msra.mxu0 0.0
    %577 = vmatprep.subr.mxu0 0.0
    %578 = vmatpush1.xpose.msra.mxu0 0.0
    %579 = vmatprep.subr.mxu0 0.0
    %580 = vmatpush1.xpose.msra.mxu0 0.0
    %581 = vmatprep.subr.mxu0 0.0
    %582 = vmatpush1.xpose.msra.mxu0 0.0
    %583 = vmatprep.subr.mxu0 0.0
    %584 = vmatpush1.xpose.msra.mxu0 0.0
    %585 = vmatprep.subr.mxu0 0.0
    %586 = vmatpush1.xpose.msra.mxu0 0.0
    %587 = vmatprep.subr.mxu0 0.0
    %588 = vmatpush1.xpose.msra.mxu0 0.0
    %589 = vmatprep.subr.mxu0 0.0
    %590 = vmatpush1.xpose.msra.mxu0 0.0
    %591 = vmatprep.subr.mxu0 0.0
    %592 = vmatpush1.xpose.msra.mxu0 0.0
    %593 = vmatprep.subr.mxu0 0.0
    %594 = vmatpush1.xpose.msra.mxu0 0.0
    %595 = vmatprep.subr.mxu0 0.0
    %596 = vmatpush1.xpose.msra.mxu0 0.0
    %597 = vmatprep.subr.mxu0 0.0
    %598 = vmatpush1.xpose.msra.mxu0 0.0
    %599 = vmatprep.subr.mxu0 0.0
    %600 = vmatpush1.xpose.msra.mxu0 0.0
    %601 = vmatprep.subr.mxu0 0.0
    %602 = vmatpush1.xpose.msra.mxu0 0.0
    %603 = vmatprep.subr.mxu0 0.0
    %604 = vmatpush1.xpose.msra.mxu0 0.0
    %605 = vmatprep.subr.mxu0 0.0
    %606 = vmatpush1.xpose.msra.mxu0 0.0
    %607 = vmatprep.subr.mxu0 0.0
    %608 = vmatpush1.xpose.msra.mxu0 0.0
    %609 = vmatprep.subr.mxu0 0.0
    %610 = vmatpush1.xpose.msra.mxu0 0.0
    %611 = vmatprep.subr.mxu0 0.0
    %612 = vmatpush1.xpose.msra.mxu0 0.0
    %613 = vmatprep.subr.mxu0 0.0
    %614 = vmatpush1.xpose.msra.mxu0 0.0
    %615 = vmatprep.subr.mxu0 0.0
    %616 = vmatpush1.xpose.msra.mxu0 0.0
    %617 = vmatprep.subr.mxu0 0.0
    %618 = vmatpush1.xpose.msra.mxu0 0.0
    %619 = vmatprep.subr.mxu0 0.0
    %620 = vmatpush1.xpose.msra.mxu0 0.0
    %621 = vmatprep.subr.mxu0 0.0
    %622 = vmatpush1.xpose.msra.mxu0 0.0
    %623 = vmatprep.mubr.f32.mxu0 0.0
    %624 = vmatmul.mubr.f32.gmra.mrb[0].mxu0 %v555
    %v625 = vpop.f32.mrb[0].mxu0
    %v626 = vadd.f32 0.0, %v625
    %v627 = vpop.f32.mrb[0].mxu0
    %628 = vdwg.mxu0
    %629 = vrot.lane.b32.xlu0 %v223, 64
    %v630 = vpop.permute.xlu0 %629
    %v631 = vsel %vm250, %v223, 0
    %v633 = vsel %vm250, %v630, 0
    %635 = vmatprep.subr.mxu0 0.0
    %636 = vmatpush1.xpose.msra.mxu0 %v633
    %637 = vmatprep.subr.mxu0 0.0
    %638 = vmatpush1.xpose.msra.mxu0 0.0
    %639 = vmatprep.subr.mxu0 0.0
    %640 = vmatpush1.xpose.msra.mxu0 0.0
    %641 = vmatprep.subr.mxu0 0.0
    %642 = vmatpush1.xpose.msra.mxu0 0.0
    %643 = vmatprep.subr.mxu0 0.0
    %644 = vmatpush1.xpose.msra.mxu0 0.0
    %645 = vmatprep.subr.mxu0 0.0
    %646 = vmatpush1.xpose.msra.mxu0 0.0
    %647 = vmatprep.subr.mxu0 0.0
    %648 = vmatpush1.xpose.msra.mxu0 0.0
    %649 = vmatprep.subr.mxu0 0.0
    %650 = vmatpush1.xpose.msra.mxu0 0.0
    %651 = vmatprep.subr.mxu0 0.0
    %652 = vmatpush1.xpose.msra.mxu0 0.0
    %653 = vmatprep.subr.mxu0 0.0
    %654 = vmatpush1.xpose.msra.mxu0 0.0
    %655 = vmatprep.subr.mxu0 0.0
    %656 = vmatpush1.xpose.msra.mxu0 0.0
    %657 = vmatprep.subr.mxu0 0.0
    %658 = vmatpush1.xpose.msra.mxu0 0.0
    %659 = vmatprep.subr.mxu0 0.0
    %660 = vmatpush1.xpose.msra.mxu0 0.0
    %661 = vmatprep.subr.mxu0 0.0
    %662 = vmatpush1.xpose.msra.mxu0 0.0
    %663 = vmatprep.subr.mxu0 0.0
    %664 = vmatpush1.xpose.msra.mxu0 0.0
    %665 = vmatprep.subr.mxu0 0.0
    %666 = vmatpush1.xpose.msra.mxu0 0.0
    %667 = vmatprep.subr.mxu0 0.0
    %668 = vmatpush1.xpose.msra.mxu0 0.0
    %669 = vmatprep.subr.mxu0 0.0
    %670 = vmatpush1.xpose.msra.mxu0 0.0
    %671 = vmatprep.subr.mxu0 0.0
    %672 = vmatpush1.xpose.msra.mxu0 0.0
    %673 = vmatprep.subr.mxu0 0.0
    %674 = vmatpush1.xpose.msra.mxu0 0.0
    %675 = vmatprep.subr.mxu0 0.0
    %676 = vmatpush1.xpose.msra.mxu0 0.0
    %677 = vmatprep.subr.mxu0 0.0
    %678 = vmatpush1.xpose.msra.mxu0 0.0
    %679 = vmatprep.subr.mxu0 0.0
    %680 = vmatpush1.xpose.msra.mxu0 0.0
    %681 = vmatprep.subr.mxu0 0.0
    %682 = vmatpush1.xpose.msra.mxu0 0.0
    %683 = vmatprep.subr.mxu0 0.0
    %684 = vmatpush1.xpose.msra.mxu0 0.0
    %685 = vmatprep.subr.mxu0 0.0
    %686 = vmatpush1.xpose.msra.mxu0 0.0
    %687 = vmatprep.subr.mxu0 0.0
    %688 = vmatpush1.xpose.msra.mxu0 0.0
    %689 = vmatprep.subr.mxu0 0.0
    %690 = vmatpush1.xpose.msra.mxu0 0.0
    %691 = vmatprep.subr.mxu0 0.0
    %692 = vmatpush1.xpose.msra.mxu0 0.0
    %693 = vmatprep.subr.mxu0 0.0
    %694 = vmatpush1.xpose.msra.mxu0 0.0
    %695 = vmatprep.subr.mxu0 0.0
    %696 = vmatpush1.xpose.msra.mxu0 0.0
    %697 = vmatprep.subr.mxu0 0.0
    %698 = vmatpush1.xpose.msra.mxu0 0.0
    %699 = vmatprep.mubr.f32.mxu0 0.0
    %700 = vmatmul.mubr.f32.gmra.mrb[0].mxu0 %v631
    %v701 = vpop.f32.mrb[0].mxu0
    %v702 = vadd.f32 0.0, %v701
    %v703 = vpop.f32.mrb[0].mxu0
    %704 = vdwg.mxu0
    %705 = vrot.lane.b32.xlu0 %v225, 64
    %v706 = vpop.permute.xlu0 %705
    %v707 = vsel %vm250, %v225, 0
    %v709 = vsel %vm250, %v706, 0
    %711 = vmatprep.subr.mxu0 0.0
    %712 = vmatpush1.xpose.msra.mxu0 %v709
    %713 = vmatprep.subr.mxu0 0.0
    %714 = vmatpush1.xpose.msra.mxu0 0.0
    %715 = vmatprep.subr.mxu0 0.0
    %716 = vmatpush1.xpose.msra.mxu0 0.0
    %717 = vmatprep.subr.mxu0 0.0
    %718 = vmatpush1.xpose.msra.mxu0 0.0
    %719 = vmatprep.subr.mxu0 0.0
    %720 = vmatpush1.xpose.msra.mxu0 0.0
    %721 = vmatprep.subr.mxu0 0.0
    %722 = vmatpush1.xpose.msra.mxu0 0.0
    %723 = vmatprep.subr.mxu0 0.0
    %724 = vmatpush1.xpose.msra.mxu0 0.0
    %725 = vmatprep.subr.mxu0 0.0
    %726 = vmatpush1.xpose.msra.mxu0 0.0
    %727 = vmatprep.subr.mxu0 0.0
    %728 = vmatpush1.xpose.msra.mxu0 0.0
    %729 = vmatprep.subr.mxu0 0.0
    %730 = vmatpush1.xpose.msra.mxu0 0.0
    %731 = vmatprep.subr.mxu0 0.0
    %732 = vmatpush1.xpose.msra.mxu0 0.0
    %733 = vmatprep.subr.mxu0 0.0
    %734 = vmatpush1.xpose.msra.mxu0 0.0
    %735 = vmatprep.subr.mxu0 0.0
    %736 = vmatpush1.xpose.msra.mxu0 0.0
    %737 = vmatprep.subr.mxu0 0.0
    %738 = vmatpush1.xpose.msra.mxu0 0.0
    %739 = vmatprep.subr.mxu0 0.0
    %740 = vmatpush1.xpose.msra.mxu0 0.0
    %741 = vmatprep.subr.mxu0 0.0
    %742 = vmatpush1.xpose.msra.mxu0 0.0
    %743 = vmatprep.subr.mxu0 0.0
    %744 = vmatpush1.xpose.msra.mxu0 0.0
    %745 = vmatprep.subr.mxu0 0.0
    %746 = vmatpush1.xpose.msra.mxu0 0.0
    %747 = vmatprep.subr.mxu0 0.0
    %748 = vmatpush1.xpose.msra.mxu0 0.0
    %749 = vmatprep.subr.mxu0 0.0
    %750 = vmatpush1.xpose.msra.mxu0 0.0
    %751 = vmatprep.subr.mxu0 0.0
    %752 = vmatpush1.xpose.msra.mxu0 0.0
    %753 = vmatprep.subr.mxu0 0.0
    %754 = vmatpush1.xpose.msra.mxu0 0.0
    %755 = vmatprep.subr.mxu0 0.0
    %756 = vmatpush1.xpose.msra.mxu0 0.0
    %757 = vmatprep.subr.mxu0 0.0
    %758 = vmatpush1.xpose.msra.mxu0 0.0
    %759 = vmatprep.subr.mxu0 0.0
    %760 = vmatpush1.xpose.msra.mxu0 0.0
    %761 = vmatprep.subr.mxu0 0.0
    %762 = vmatpush1.xpose.msra.mxu0 0.0
    %763 = vmatprep.subr.mxu0 0.0
    %764 = vmatpush1.xpose.msra.mxu0 0.0
    %765 = vmatprep.subr.mxu0 0.0
    %766 = vmatpush1.xpose.msra.mxu0 0.0
    %767 = vmatprep.subr.mxu0 0.0
    %768 = vmatpush1.xpose.msra.mxu0 0.0
    %769 = vmatprep.subr.mxu0 0.0
    %770 = vmatpush1.xpose.msra.mxu0 0.0
    %771 = vmatprep.subr.mxu0 0.0
    %772 = vmatpush1.xpose.msra.mxu0 0.0
    %773 = vmatprep.subr.mxu0 0.0
    %774 = vmatpush1.xpose.msra.mxu0 0.0
    %775 = vmatprep.mubr.f32.mxu0 0.0
    %776 = vmatmul.mubr.f32.gmra.mrb[0].mxu0 %v707
    %v777 = vpop.f32.mrb[0].mxu0
    %v778 = vadd.f32 0.0, %v777
    %v779 = vpop.f32.mrb[0].mxu0
    %780 = vdwg.mxu0
    %781 = vrot.lane.b32.xlu0 %v227, 64
    %v782 = vpop.permute.xlu0 %781
    %v783 = vsel %vm250, %v227, 0
    %v785 = vsel %vm250, %v782, 0
    %787 = vmatprep.subr.mxu0 0.0
    %788 = vmatpush1.xpose.msra.mxu0 %v785
    %789 = vmatprep.subr.mxu0 0.0
    %790 = vmatpush1.xpose.msra.mxu0 0.0
    %791 = vmatprep.subr.mxu0 0.0
    %792 = vmatpush1.xpose.msra.mxu0 0.0
    %793 = vmatprep.subr.mxu0 0.0
    %794 = vmatpush1.xpose.msra.mxu0 0.0
    %795 = vmatprep.subr.mxu0 0.0
    %796 = vmatpush1.xpose.msra.mxu0 0.0
    %797 = vmatprep.subr.mxu0 0.0
    %798 = vmatpush1.xpose.msra.mxu0 0.0
    %799 = vmatprep.subr.mxu0 0.0
    %800 = vmatpush1.xpose.msra.mxu0 0.0
    %801 = vmatprep.subr.mxu0 0.0
    %802 = vmatpush1.xpose.msra.mxu0 0.0
    %803 = vmatprep.subr.mxu0 0.0
    %804 = vmatpush1.xpose.msra.mxu0 0.0
    %805 = vmatprep.subr.mxu0 0.0
    %806 = vmatpush1.xpose.msra.mxu0 0.0
    %807 = vmatprep.subr.mxu0 0.0
    %808 = vmatpush1.xpose.msra.mxu0 0.0
    %809 = vmatprep.subr.mxu0 0.0
    %810 = vmatpush1.xpose.msra.mxu0 0.0
    %811 = vmatprep.subr.mxu0 0.0
    %812 = vmatpush1.xpose.msra.mxu0 0.0
    %813 = vmatprep.subr.mxu0 0.0
    %814 = vmatpush1.xpose.msra.mxu0 0.0
    %815 = vmatprep.subr.mxu0 0.0
    %816 = vmatpush1.xpose.msra.mxu0 0.0
    %817 = vmatprep.subr.mxu0 0.0
    %818 = vmatpush1.xpose.msra.mxu0 0.0
    %819 = vmatprep.subr.mxu0 0.0
    %820 = vmatpush1.xpose.msra.mxu0 0.0
    %821 = vmatprep.subr.mxu0 0.0
    %822 = vmatpush1.xpose.msra.mxu0 0.0
    %823 = vmatprep.subr.mxu0 0.0
    %824 = vmatpush1.xpose.msra.mxu0 0.0
    %825 = vmatprep.subr.mxu0 0.0
    %826 = vmatpush1.xpose.msra.mxu0 0.0
    %827 = vmatprep.subr.mxu0 0.0
    %828 = vmatpush1.xpose.msra.mxu0 0.0
    %829 = vmatprep.subr.mxu0 0.0
    %830 = vmatpush1.xpose.msra.mxu0 0.0
    %831 = vmatprep.subr.mxu0 0.0
    %832 = vmatpush1.xpose.msra.mxu0 0.0
    %833 = vmatprep.subr.mxu0 0.0
    %834 = vmatpush1.xpose.msra.mxu0 0.0
    %835 = vmatprep.subr.mxu0 0.0
    %836 = vmatpush1.xpose.msra.mxu0 0.0
    %837 = vmatprep.subr.mxu0 0.0
    %838 = vmatpush1.xpose.msra.mxu0 0.0
    %839 = vmatprep.subr.mxu0 0.0
    %840 = vmatpush1.xpose.msra.mxu0 0.0
    %841 = vmatprep.subr.mxu0 0.0
    %842 = vmatpush1.xpose.msra.mxu0 0.0
    %843 = vmatprep.subr.mxu0 0.0
    %844 = vmatpush1.xpose.msra.mxu0 0.0
    %845 = vmatprep.subr.mxu0 0.0
    %846 = vmatpush1.xpose.msra.mxu0 0.0
    %847 = vmatprep.subr.mxu0 0.0
    %848 = vmatpush1.xpose.msra.mxu0 0.0
    %849 = vmatprep.subr.mxu0 0.0
    %850 = vmatpush1.xpose.msra.mxu0 0.0
    %851 = vmatprep.mubr.f32.mxu0 0.0
    %852 = vmatmul.mubr.f32.gmra.mrb[0].mxu0 %v783
    %v853 = vpop.f32.mrb[0].mxu0
    %v854 = vadd.f32 0.0, %v853
    %v855 = vpop.f32.mrb[0].mxu0
    %856 = vdwg.mxu0
    %v857 = vmul.f32 %v322, 0.25
    %v858 = vmul.f32 %v398, 0.25
    %v859 = vmul.f32 %v474, 0.25
    %v860 = vmul.f32 %v550, 0.25
    %v861 = vmul.f32 %v626, 0.25
    %v862 = vmul.f32 %v702, 0.25
    %v863 = vmul.f32 %v778, 0.25
    %v864 = vmul.f32 %v854, 0.25
    %vm865 = vcmask 64512
    %v866 = vsel %vm865, %v857, -inf
    %867 = vmax.xlane.f32.xlu0 %v866
    %v868 = vpop.xlane.xlu0 %867
    %v869 = vsel %vm865, %v858, -inf
    %870 = vmax.xlane.f32.xlu0 %v869
    %v871 = vpop.xlane.xlu0 %870
    %v872 = vsel %vm865, %v859, -inf
    %873 = vmax.xlane.f32.xlu0 %v872
    %v874 = vpop.xlane.xlu0 %873
    %v875 = vsel %vm865, %v860, -inf
    %876 = vmax.xlane.f32.xlu0 %v875
    %v877 = vpop.xlane.xlu0 %876
    %v878 = vsel %vm865, %v861, -inf
    %879 = vmax.xlane.f32.xlu0 %v878
    %v880 = vpop.xlane.xlu0 %879
    %v881 = vsel %vm865, %v862, -inf
    %882 = vmax.xlane.f32.xlu0 %v881
    %v883 = vpop.xlane.xlu0 %882
    %v884 = vsel %vm865, %v863, -inf
    %885 = vmax.xlane.f32.xlu0 %v884
    %v886 = vpop.xlane.xlu0 %885
    %v887 = vsel %vm865, %v864, -inf
    %888 = vmax.xlane.f32.xlu0 %v887
    %v889 = vpop.xlane.xlu0 %888
    %v890 = vsub.f32 %v857, %v868
    %v891 = vsub.f32 %v858, %v871
    %v892 = vsub.f32 %v859, %v874
    %v893 = vsub.f32 %v860, %v877
    %v894 = vsub.f32 %v861, %v880
    %v895 = vsub.f32 %v862, %v883
    %v896 = vsub.f32 %v863, %v886
    %v897 = vsub.f32 %v864, %v889
    %v898 = vmul.f32 %v890, 1.442695
    %v899 = vpow.pop %v898
    %v900 = vmul.f32 %v891, 1.442695
    %v901 = vpow.pop %v900
    %v902 = vmul.f32 %v892, 1.442695
    %v903 = vpow.pop %v902
    %v904 = vmul.f32 %v893, 1.442695
    %v905 = vpow.pop %v904
    %v906 = vmul.f32 %v894, 1.442695
    %v907 = vpow.pop %v906
    %v908 = vmul.f32 %v895, 1.442695
    %v909 = vpow.pop %v908
    %v910 = vmul.f32 %v896, 1.442695
    %v911 = vpow.pop %v910
    %v912 = vmul.f32 %v897, 1.442695
    %v913 = vpow.pop %v912
    %v914 = vsel %vm865, %v899, 0.0
    %915 = vadd.xlane.f32.xlu0 %v914
    %v916 = vpop.xlane.xlu0 %915
    %v917 = vsel %vm865, %v901, 0.0
    %918 = vadd.xlane.f32.xlu0 %v917
    %v919 = vpop.xlane.xlu0 %918
    %v920 = vsel %vm865, %v903, 0.0
    %921 = vadd.xlane.f32.xlu0 %v920
    %v922 = vpop.xlane.xlu0 %921
    %v923 = vsel %vm865, %v905, 0.0
    %924 = vadd.xlane.f32.xlu0 %v923
    %v925 = vpop.xlane.xlu0 %924
    %v926 = vsel %vm865, %v907, 0.0
    %927 = vadd.xlane.f32.xlu0 %v926
    %v928 = vpop.xlane.xlu0 %927
    %v929 = vsel %vm865, %v909, 0.0
    %930 = vadd.xlane.f32.xlu0 %v929
    %v931 = vpop.xlane.xlu0 %930
    %v932 = vsel %vm865, %v911, 0.0
    %933 = vadd.xlane.f32.xlu0 %v932
    %v934 = vpop.xlane.xlu0 %933
    %v935 = vsel %vm865, %v913, 0.0
    %936 = vadd.xlane.f32.xlu0 %v935
    %v937 = vpop.xlane.xlu0 %936
    %v938 = vrcp.pop %v916
    %v939 = vrcp.pop %v919
    %v940 = vrcp.pop %v922
    %v941 = vrcp.pop %v925
    %v942 = vrcp.pop %v928
    %v943 = vrcp.pop %v931
    %v944 = vrcp.pop %v934
    %v945 = vrcp.pop %v937
    %v946 = vmul.f32 %v899, %v938
    %v947 = vmul.f32 %v901, %v939
    %v948 = vmul.f32 %v903, %v940
    %v949 = vmul.f32 %v905, %v941
    %v950 = vmul.f32 %v907, %v942
    %v951 = vmul.f32 %v909, %v943
    %v952 = vmul.f32 %v911, %v944
    %v953 = vmul.f32 %v913, %v945
    %v955 = vsel %vm865, %v946, 0
    %957 = vmatprep.subr.mxu0 0.0
    %958 = vmatpush1.msra.mxu0 %v206
    %959 = vmatprep.subr.mxu0 0.0
    %960 = vmatpush1.msra.mxu0 0.0
    %961 = vmatprep.subr.mxu0 0.0
    %962 = vmatpush1.msra.mxu0 0.0
    %963 = vmatprep.subr.mxu0 0.0
    %964 = vmatpush1.msra.mxu0 0.0
    %965 = vmatprep.subr.mxu0 0.0
    %966 = vmatpush1.msra.mxu0 0.0
    %967 = vmatprep.subr.mxu0 0.0
    %968 = vmatpush1.msra.mxu0 0.0
    %969 = vmatprep.subr.mxu0 0.0
    %970 = vmatpush1.msra.mxu0 0.0
    %971 = vmatprep.subr.mxu0 0.0
    %972 = vmatpush1.msra.mxu0 0.0
    %973 = vmatprep.subr.mxu0 0.0
    %974 = vmatpush1.msra.mxu0 0.0
    %975 = vmatprep.subr.mxu0 0.0
    %976 = vmatpush1.msra.mxu0 0.0
    %977 = vmatprep.subr.mxu0 0.0
    %978 = vmatpush1.msra.mxu0 0.0
    %979 = vmatprep.subr.mxu0 0.0
    %980 = vmatpush1.msra.mxu0 0.0
    %981 = vmatprep.subr.mxu0 0.0
    %982 = vmatpush1.msra.mxu0 0.0
    %983 = vmatprep.subr.mxu0 0.0
    %984 = vmatpush1.msra.mxu0 0.0
    %985 = vmatprep.subr.mxu0 0.0
    %986 = vmatpush1.msra.mxu0 0.0
    %987 = vmatprep.subr.mxu0 0.0
    %988 = vmatpush1.msra.mxu0 0.0
    %989 = vmatprep.subr.mxu0 0.0
    %990 = vmatpush1.msra.mxu0 0.0
    %991 = vmatprep.subr.mxu0 0.0
    %992 = vmatpush1.msra.mxu0 0.0
    %993 = vmatprep.subr.mxu0 0.0
    %994 = vmatpush1.msra.mxu0 0.0
    %995 = vmatprep.subr.mxu0 0.0
    %996 = vmatpush1.msra.mxu0 0.0
    %997 = vmatprep.subr.mxu0 0.0
    %998 = vmatpush1.msra.mxu0 0.0
    %999 = vmatprep.subr.mxu0 0.0
    %1000 = vmatpush1.msra.mxu0 0.0
    %1001 = vmatprep.subr.mxu0 0.0
    %1002 = vmatpush1.msra.mxu0 0.0
    %1003 = vmatprep.subr.mxu0 0.0
    %1004 = vmatpush1.msra.mxu0 0.0
    %1005 = vmatprep.subr.mxu0 0.0
    %1006 = vmatpush1.msra.mxu0 0.0
    %1007 = vmatprep.subr.mxu0 0.0
    %1008 = vmatpush1.msra.mxu0 0.0
    %1009 = vmatprep.subr.mxu0 0.0
    %1010 = vmatpush1.msra.mxu0 0.0
    %1011 = vmatprep.subr.mxu0 0.0
    %1012 = vmatpush1.msra.mxu0 0.0
    %1013 = vmatprep.subr.mxu0 0.0
    %1014 = vmatpush1.msra.mxu0 0.0
    %1015 = vmatprep.subr.mxu0 0.0
    %1016 = vmatpush1.msra.mxu0 0.0
    %1017 = vmatprep.subr.mxu0 0.0
    %1018 = vmatpush1.msra.mxu0 0.0
    %1019 = vmatprep.subr.mxu0 0.0
    %1020 = vmatpush1.msra.mxu0 0.0
    %1021 = vmatprep.mubr.f32.mxu0 0.0
    %1022 = vmatmul.mubr.f32.gmra.mrb[0].mxu0 %v955
    %v1023 = vpop.f32.mrb[0].mxu0
    %v1024 = vadd.f32 0.0, %v1023
    %v1025 = vpop.f32.mrb[0].mxu0
    %1026 = vdwg.mxu0
    %v1028 = vsel %vm865, %v947, 0
    %1030 = vmatprep.subr.mxu0 0.0
    %1031 = vmatpush1.msra.mxu0 %v212
    %1032 = vmatprep.subr.mxu0 0.0
    %1033 = vmatpush1.msra.mxu0 0.0
    %1034 = vmatprep.subr.mxu0 0.0
    %1035 = vmatpush1.msra.mxu0 0.0
    %1036 = vmatprep.subr.mxu0 0.0
    %1037 = vmatpush1.msra.mxu0 0.0
    %1038 = vmatprep.subr.mxu0 0.0
    %1039 = vmatpush1.msra.mxu0 0.0
    %1040 = vmatprep.subr.mxu0 0.0
    %1041 = vmatpush1.msra.mxu0 0.0
    %1042 = vmatprep.subr.mxu0 0.0
    %1043 = vmatpush1.msra.mxu0 0.0
    %1044 = vmatprep.subr.mxu0 0.0
    %1045 = vmatpush1.msra.mxu0 0.0
    %1046 = vmatprep.subr.mxu0 0.0
    %1047 = vmatpush1.msra.mxu0 0.0
    %1048 = vmatprep.subr.mxu0 0.0
    %1049 = vmatpush1.msra.mxu0 0.0
    %1050 = vmatprep.subr.mxu0 0.0
    %1051 = vmatpush1.msra.mxu0 0.0
    %1052 = vmatprep.subr.mxu0 0.0
    %1053 = vmatpush1.msra.mxu0 0.0
    %1054 = vmatprep.subr.mxu0 0.0
    %1055 = vmatpush1.msra.mxu0 0.0
    %1056 = vmatprep.subr.mxu0 0.0
    %1057 = vmatpush1.msra.mxu0 0.0
    %1058 = vmatprep.subr.mxu0 0.0
    %1059 = vmatpush1.msra.mxu0 0.0
    %1060 = vmatprep.subr.mxu0 0.0
    %1061 = vmatpush1.msra.mxu0 0.0
    %1062 = vmatprep.subr.mxu0 0.0
    %1063 = vmatpush1.msra.mxu0 0.0
    %1064 = vmatprep.subr.mxu0 0.0
    %1065 = vmatpush1.msra.mxu0 0.0
    %1066 = vmatprep.subr.mxu0 0.0
    %1067 = vmatpush1.msra.mxu0 0.0
    %1068 = vmatprep.subr.mxu0 0.0
    %1069 = vmatpush1.msra.mxu0 0.0
    %1070 = vmatprep.subr.mxu0 0.0
    %1071 = vmatpush1.msra.mxu0 0.0
    %1072 = vmatprep.subr.mxu0 0.0
    %1073 = vmatpush1.msra.mxu0 0.0
    %1074 = vmatprep.subr.mxu0 0.0
    %1075 = vmatpush1.msra.mxu0 0.0
    %1076 = vmatprep.subr.mxu0 0.0
    %1077 = vmatpush1.msra.mxu0 0.0
    %1078 = vmatprep.subr.mxu0 0.0
    %1079 = vmatpush1.msra.mxu0 0.0
    %1080 = vmatprep.subr.mxu0 0.0
    %1081 = vmatpush1.msra.mxu0 0.0
    %1082 = vmatprep.subr.mxu0 0.0
    %1083 = vmatpush1.msra.mxu0 0.0
    %1084 = vmatprep.subr.mxu0 0.0
    %1085 = vmatpush1.msra.mxu0 0.0
    %1086 = vmatprep.subr.mxu0 0.0
    %1087 = vmatpush1.msra.mxu0 0.0
    %1088 = vmatprep.subr.mxu0 0.0
    %1089 = vmatpush1.msra.mxu0 0.0
    %1090 = vmatprep.subr.mxu0 0.0
    %1091 = vmatpush1.msra.mxu0 0.0
    %1092 = vmatprep.subr.mxu0 0.0
    %1093 = vmatpush1.msra.mxu0 0.0
    %1094 = vmatprep.mubr.f32.mxu0 0.0
    %1095 = vmatmul.mubr.f32.gmra.mrb[0].mxu0 %v1028
    %v1096 = vpop.f32.mrb[0].mxu0
    %v1097 = vadd.f32 0.0, %v1096
    %v1098 = vpop.f32.mrb[0].mxu0
    %1099 = vdwg.mxu0
    %v1101 = vsel %vm865, %v948, 0
    %1103 = vmatprep.subr.mxu0 0.0
    %1104 = vmatpush1.msra.mxu0 %v231
    %1105 = vmatprep.subr.mxu0 0.0
    %1106 = vmatpush1.msra.mxu0 0.0
    %1107 = vmatprep.subr.mxu0 0.0
    %1108 = vmatpush1.msra.mxu0 0.0
    %1109 = vmatprep.subr.mxu0 0.0
    %1110 = vmatpush1.msra.mxu0 0.0
    %1111 = vmatprep.subr.mxu0 0.0
    %1112 = vmatpush1.msra.mxu0 0.0
    %1113 = vmatprep.subr.mxu0 0.0
    %1114 = vmatpush1.msra.mxu0 0.0
    %1115 = vmatprep.subr.mxu0 0.0
    %1116 = vmatpush1.msra.mxu0 0.0
    %1117 = vmatprep.subr.mxu0 0.0
    %1118 = vmatpush1.msra.mxu0 0.0
    %1119 = vmatprep.subr.mxu0 0.0
    %1120 = vmatpush1.msra.mxu0 0.0
    %1121 = vmatprep.subr.mxu0 0.0
    %1122 = vmatpush1.msra.mxu0 0.0
    %1123 = vmatprep.subr.mxu0 0.0
    %1124 = vmatpush1.msra.mxu0 0.0
    %1125 = vmatprep.subr.mxu0 0.0
    %1126 = vmatpush1.msra.mxu0 0.0
    %1127 = vmatprep.subr.mxu0 0.0
    %1128 = vmatpush1.msra.mxu0 0.0
    %1129 = vmatprep.subr.mxu0 0.0
    %1130 = vmatpush1.msra.mxu0 0.0
    %1131 = vmatprep.subr.mxu0 0.0
    %1132 = vmatpush1.msra.mxu0 0.0
    %1133 = vmatprep.subr.mxu0 0.0
    %1134 = vmatpush1.msra.mxu0 0.0
    %1135 = vmatprep.subr.mxu0 0.0
    %1136 = vmatpush1.msra.mxu0 0.0
    %1137 = vmatprep.subr.mxu0 0.0
    %1138 = vmatpush1.msra.mxu0 0.0
    %1139 = vmatprep.subr.mxu0 0.0
    %1140 = vmatpush1.msra.mxu0 0.0
    %1141 = vmatprep.subr.mxu0 0.0
    %1142 = vmatpush1.msra.mxu0 0.0
    %1143 = vmatprep.subr.mxu0 0.0
    %1144 = vmatpush1.msra.mxu0 0.0
    %1145 = vmatprep.subr.mxu0 0.0
    %1146 = vmatpush1.msra.mxu0 0.0
    %1147 = vmatprep.subr.mxu0 0.0
    %1148 = vmatpush1.msra.mxu0 0.0
    %1149 = vmatprep.subr.mxu0 0.0
    %1150 = vmatpush1.msra.mxu0 0.0
    %1151 = vmatprep.subr.mxu0 0.0
    %1152 = vmatpush1.msra.mxu0 0.0
    %1153 = vmatprep.subr.mxu0 0.0
    %1154 = vmatpush1.msra.mxu0 0.0
    %1155 = vmatprep.subr.mxu0 0.0
    %1156 = vmatpush1.msra.mxu0 0.0
    %1157 = vmatprep.subr.mxu0 0.0
    %1158 = vmatpush1.msra.mxu0 0.0
    %1159 = vmatprep.subr.mxu0 0.0
    %1160 = vmatpush1.msra.mxu0 0.0
    %1161 = vmatprep.subr.mxu0 0.0
    %1162 = vmatpush1.msra.mxu0 0.0
    %1163 = vmatprep.subr.mxu0 0.0
    %1164 = vmatpush1.msra.mxu0 0.0
    %1165 = vmatprep.subr.mxu0 0.0
    %1166 = vmatpush1.msra.mxu0 0.0
    %1167 = vmatprep.mubr.f32.mxu0 0.0
    %1168 = vmatmul.mubr.f32.gmra.mrb[0].mxu0 %v1101
    %v1169 = vpop.f32.mrb[0].mxu0
    %v1170 = vadd.f32 0.0, %v1169
    %v1171 = vpop.f32.mrb[0].mxu0
    %1172 = vdwg.mxu0
    %v1174 = vsel %vm865, %v949, 0
    %1176 = vmatprep.subr.mxu0 0.0
    %1177 = vmatpush1.msra.mxu0 %v233
    %1178 = vmatprep.subr.mxu0 0.0
    %1179 = vmatpush1.msra.mxu0 0.0
    %1180 = vmatprep.subr.mxu0 0.0
    %1181 = vmatpush1.msra.mxu0 0.0
    %1182 = vmatprep.subr.mxu0 0.0
    %1183 = vmatpush1.msra.mxu0 0.0
    %1184 = vmatprep.subr.mxu0 0.0
    %1185 = vmatpush1.msra.mxu0 0.0
    %1186 = vmatprep.subr.mxu0 0.0
    %1187 = vmatpush1.msra.mxu0 0.0
    %1188 = vmatprep.subr.mxu0 0.0
    %1189 = vmatpush1.msra.mxu0 0.0
    %1190 = vmatprep.subr.mxu0 0.0
    %1191 = vmatpush1.msra.mxu0 0.0
    %1192 = vmatprep.subr.mxu0 0.0
    %1193 = vmatpush1.msra.mxu0 0.0
    %1194 = vmatprep.subr.mxu0 0.0
    %1195 = vmatpush1.msra.mxu0 0.0
    %1196 = vmatprep.subr.mxu0 0.0
    %1197 = vmatpush1.msra.mxu0 0.0
    %1198 = vmatprep.subr.mxu0 0.0
    %1199 = vmatpush1.msra.mxu0 0.0
    %1200 = vmatprep.subr.mxu0 0.0
    %1201 = vmatpush1.msra.mxu0 0.0
    %1202 = vmatprep.subr.mxu0 0.0
    %1203 = vmatpush1.msra.mxu0 0.0
    %1204 = vmatprep.subr.mxu0 0.0
    %1205 = vmatpush1.msra.mxu0 0.0
    %1206 = vmatprep.subr.mxu0 0.0
    %1207 = vmatpush1.msra.mxu0 0.0
    %1208 = vmatprep.subr.mxu0 0.0
    %1209 = vmatpush1.msra.mxu0 0.0
    %1210 = vmatprep.subr.mxu0 0.0
    %1211 = vmatpush1.msra.mxu0 0.0
    %1212 = vmatprep.subr.mxu0 0.0
    %1213 = vmatpush1.msra.mxu0 0.0
    %1214 = vmatprep.subr.mxu0 0.0
    %1215 = vmatpush1.msra.mxu0 0.0
    %1216 = vmatprep.subr.mxu0 0.0
    %1217 = vmatpush1.msra.mxu0 0.0
    %1218 = vmatprep.subr.mxu0 0.0
    %1219 = vmatpush1.msra.mxu0 0.0
    %1220 = vmatprep.subr.mxu0 0.0
    %1221 = vmatpush1.msra.mxu0 0.0
    %1222 = vmatprep.subr.mxu0 0.0
    %1223 = vmatpush1.msra.mxu0 0.0
    %1224 = vmatprep.subr.mxu0 0.0
    %1225 = vmatpush1.msra.mxu0 0.0
    %1226 = vmatprep.subr.mxu0 0.0
    %1227 = vmatpush1.msra.mxu0 0.0
    %1228 = vmatprep.subr.mxu0 0.0
    %1229 = vmatpush1.msra.mxu0 0.0
    %1230 = vmatprep.subr.mxu0 0.0
    %1231 = vmatpush1.msra.mxu0 0.0
    %1232 = vmatprep.subr.mxu0 0.0
    %1233 = vmatpush1.msra.mxu0 0.0
    %1234 = vmatprep.subr.mxu0 0.0
    %1235 = vmatpush1.msra.mxu0 0.0
    %1236 = vmatprep.subr.mxu0 0.0
    %1237 = vmatpush1.msra.mxu0 0.0
    %1238 = vmatprep.subr.mxu0 0.0
    %1239 = vmatpush1.msra.mxu0 0.0
    %1240 = vmatprep.mubr.f32.mxu0 0.0
    %1241 = vmatmul.mubr.f32.gmra.mrb[0].mxu0 %v1174
    %v1242 = vpop.f32.mrb[0].mxu0
    %v1243 = vadd.f32 0.0, %v1242
    %v1244 = vpop.f32.mrb[0].mxu0
    %1245 = vdwg.mxu0
    %v1247 = vsel %vm865, %v950, 0
    %1249 = vmatprep.subr.mxu0 0.0
    %1250 = vmatpush1.msra.mxu0 %v237
    %1251 = vmatprep.subr.mxu0 0.0
    %1252 = vmatpush1.msra.mxu0 0.0
    %1253 = vmatprep.subr.mxu0 0.0
    %1254 = vmatpush1.msra.mxu0 0.0
    %1255 = vmatprep.subr.mxu0 0.0
    %1256 = vmatpush1.msra.mxu0 0.0
    %1257 = vmatprep.subr.mxu0 0.0
    %1258 = vmatpush1.msra.mxu0 0.0
    %1259 = vmatprep.subr.mxu0 0.0
    %1260 = vmatpush1.msra.mxu0 0.0
    %1261 = vmatprep.subr.mxu0 0.0
    %1262 = vmatpush1.msra.mxu0 0.0
    %1263 = vmatprep.subr.mxu0 0.0
    %1264 = vmatpush1.msra.mxu0 0.0
    %1265 = vmatprep.subr.mxu0 0.0
    %1266 = vmatpush1.msra.mxu0 0.0
    %1267 = vmatprep.subr.mxu0 0.0
    %1268 = vmatpush1.msra.mxu0 0.0
    %1269 = vmatprep.subr.mxu0 0.0
    %1270 = vmatpush1.msra.mxu0 0.0
    %1271 = vmatprep.subr.mxu0 0.0
    %1272 = vmatpush1.msra.mxu0 0.0
    %1273 = vmatprep.subr.mxu0 0.0
    %1274 = vmatpush1.msra.mxu0 0.0
    %1275 = vmatprep.subr.mxu0 0.0
    %1276 = vmatpush1.msra.mxu0 0.0
    %1277 = vmatprep.subr.mxu0 0.0
    %1278 = vmatpush1.msra.mxu0 0.0
    %1279 = vmatprep.subr.mxu0 0.0
    %1280 = vmatpush1.msra.mxu0 0.0
    %1281 = vmatprep.subr.mxu0 0.0
    %1282 = vmatpush1.msra.mxu0 0.0
    %1283 = vmatprep.subr.mxu0 0.0
    %1284 = vmatpush1.msra.mxu0 0.0
    %1285 = vmatprep.subr.mxu0 0.0
    %1286 = vmatpush1.msra.mxu0 0.0
    %1287 = vmatprep.subr.mxu0 0.0
    %1288 = vmatpush1.msra.mxu0 0.0
    %1289 = vmatprep.subr.mxu0 0.0
    %1290 = vmatpush1.msra.mxu0 0.0
    %1291 = vmatprep.subr.mxu0 0.0
    %1292 = vmatpush1.msra.mxu0 0.0
    %1293 = vmatprep.subr.mxu0 0.0
    %1294 = vmatpush1.msra.mxu0 0.0
    %1295 = vmatprep.subr.mxu0 0.0
    %1296 = vmatpush1.msra.mxu0 0.0
    %1297 = vmatprep.subr.mxu0 0.0
    %1298 = vmatpush1.msra.mxu0 0.0
    %1299 = vmatprep.subr.mxu0 0.0
    %1300 = vmatpush1.msra.mxu0 0.0
    %1301 = vmatprep.subr.mxu0 0.0
    %1302 = vmatpush1.msra.mxu0 0.0
    %1303 = vmatprep.subr.mxu0 0.0
    %1304 = vmatpush1.msra.mxu0 0.0
    %1305 = vmatprep.subr.mxu0 0.0
    %1306 = vmatpush1.msra.mxu0 0.0
    %1307 = vmatprep.subr.mxu0 0.0
    %1308 = vmatpush1.msra.mxu0 0.0
    %1309 = vmatprep.subr.mxu0 0.0
    %1310 = vmatpush1.msra.mxu0 0.0
    %1311 = vmatprep.subr.mxu0 0.0
    %1312 = vmatpush1.msra.mxu0 0.0
    %1313 = vmatprep.mubr.f32.mxu0 0.0
    %1314 = vmatmul.mubr.f32.gmra.mrb[0].mxu0 %v1247
    %v1315 = vpop.f32.mrb[0].mxu0
    %v1316 = vadd.f32 0.0, %v1315
    %v1317 = vpop.f32.mrb[0].mxu0
    %1318 = vdwg.mxu0
    %v1320 = vsel %vm865, %v951, 0
    %1322 = vmatprep.subr.mxu0 0.0
    %1323 = vmatpush1.msra.mxu0 %v239
    %1324 = vmatprep.subr.mxu0 0.0
    %1325 = vmatpush1.msra.mxu0 0.0
    %1326 = vmatprep.subr.mxu0 0.0
    %1327 = vmatpush1.msra.mxu0 0.0
    %1328 = vmatprep.subr.mxu0 0.0
    %1329 = vmatpush1.msra.mxu0 0.0
    %1330 = vmatprep.subr.mxu0 0.0
    %1331 = vmatpush1.msra.mxu0 0.0
    %1332 = vmatprep.subr.mxu0 0.0
    %1333 = vmatpush1.msra.mxu0 0.0
    %1334 = vmatprep.subr.mxu0 0.0
    %1335 = vmatpush1.msra.mxu0 0.0
    %1336 = vmatprep.subr.mxu0 0.0
    %1337 = vmatpush1.msra.mxu0 0.0
    %1338 = vmatprep.subr.mxu0 0.0
    %1339 = vmatpush1.msra.mxu0 0.0
    %1340 = vmatprep.subr.mxu0 0.0
    %1341 = vmatpush1.msra.mxu0 0.0
    %1342 = vmatprep.subr.mxu0 0.0
    %1343 = vmatpush1.msra.mxu0 0.0
    %1344 = vmatprep.subr.mxu0 0.0
    %1345 = vmatpush1.msra.mxu0 0.0
    %1346 = vmatprep.subr.mxu0 0.0
    %1347 = vmatpush1.msra.mxu0 0.0
    %1348 = vmatprep.subr.mxu0 0.0
    %1349 = vmatpush1.msra.mxu0 0.0
    %1350 = vmatprep.subr.mxu0 0.0
    %1351 = vmatpush1.msra.mxu0 0.0
    %1352 = vmatprep.subr.mxu0 0.0
    %1353 = vmatpush1.msra.mxu0 0.0
    %1354 = vmatprep.subr.mxu0 0.0
    %1355 = vmatpush1.msra.mxu0 0.0
    %1356 = vmatprep.subr.mxu0 0.0
    %1357 = vmatpush1.msra.mxu0 0.0
    %1358 = vmatprep.subr.mxu0 0.0
    %1359 = vmatpush1.msra.mxu0 0.0
    %1360 = vmatprep.subr.mxu0 0.0
    %1361 = vmatpush1.msra.mxu0 0.0
    %1362 = vmatprep.subr.mxu0 0.0
    %1363 = vmatpush1.msra.mxu0 0.0
    %1364 = vmatprep.subr.mxu0 0.0
    %1365 = vmatpush1.msra.mxu0 0.0
    %1366 = vmatprep.subr.mxu0 0.0
    %1367 = vmatpush1.msra.mxu0 0.0
    %1368 = vmatprep.subr.mxu0 0.0
    %1369 = vmatpush1.msra.mxu0 0.0
    %1370 = vmatprep.subr.mxu0 0.0
    %1371 = vmatpush1.msra.mxu0 0.0
    %1372 = vmatprep.subr.mxu0 0.0
    %1373 = vmatpush1.msra.mxu0 0.0
    %1374 = vmatprep.subr.mxu0 0.0
    %1375 = vmatpush1.msra.mxu0 0.0
    %1376 = vmatprep.subr.mxu0 0.0
    %1377 = vmatpush1.msra.mxu0 0.0
    %1378 = vmatprep.subr.mxu0 0.0
    %1379 = vmatpush1.msra.mxu0 0.0
    %1380 = vmatprep.subr.mxu0 0.0
    %1381 = vmatpush1.msra.mxu0 0.0
    %1382 = vmatprep.subr.mxu0 0.0
    %1383 = vmatpush1.msra.mxu0 0.0
    %1384 = vmatprep.subr.mxu0 0.0
    %1385 = vmatpush1.msra.mxu0 0.0
    %1386 = vmatprep.mubr.f32.mxu0 0.0
    %1387 = vmatmul.mubr.f32.gmra.mrb[0].mxu0 %v1320
    %v1388 = vpop.f32.mrb[0].mxu0
    %v1389 = vadd.f32 0.0, %v1388
    %v1390 = vpop.f32.mrb[0].mxu0
    %1391 = vdwg.mxu0
    %v1393 = vsel %vm865, %v952, 0
    %1395 = vmatprep.subr.mxu0 0.0
    %1396 = vmatpush1.msra.mxu0 %v243
    %1397 = vmatprep.subr.mxu0 0.0
    %1398 = vmatpush1.msra.mxu0 0.0
    %1399 = vmatprep.subr.mxu0 0.0
    %1400 = vmatpush1.msra.mxu0 0.0
    %1401 = vmatprep.subr.mxu0 0.0
    %1402 = vmatpush1.msra.mxu0 0.0
    %1403 = vmatprep.subr.mxu0 0.0
    %1404 = vmatpush1.msra.mxu0 0.0
    %1405 = vmatprep.subr.mxu0 0.0
    %1406 = vmatpush1.msra.mxu0 0.0
    %1407 = vmatprep.subr.mxu0 0.0
    %1408 = vmatpush1.msra.mxu0 0.0
    %1409 = vmatprep.subr.mxu0 0.0
    %1410 = vmatpush1.msra.mxu0 0.0
    %1411 = vmatprep.subr.mxu0 0.0
    %1412 = vmatpush1.msra.mxu0 0.0
    %1413 = vmatprep.subr.mxu0 0.0
    %1414 = vmatpush1.msra.mxu0 0.0
    %1415 = vmatprep.subr.mxu0 0.0
    %1416 = vmatpush1.msra.mxu0 0.0
    %1417 = vmatprep.subr.mxu0 0.0
    %1418 = vmatpush1.msra.mxu0 0.0
    %1419 = vmatprep.subr.mxu0 0.0
    %1420 = vmatpush1.msra.mxu0 0.0
    %1421 = vmatprep.subr.mxu0 0.0
    %1422 = vmatpush1.msra.mxu0 0.0
    %1423 = vmatprep.subr.mxu0 0.0
    %1424 = vmatpush1.msra.mxu0 0.0
    %1425 = vmatprep.subr.mxu0 0.0
    %1426 = vmatpush1.msra.mxu0 0.0
    %1427 = vmatprep.subr.mxu0 0.0
    %1428 = vmatpush1.msra.mxu0 0.0
    %1429 = vmatprep.subr.mxu0 0.0
    %1430 = vmatpush1.msra.mxu0 0.0
    %1431 = vmatprep.subr.mxu0 0.0
    %1432 = vmatpush1.msra.mxu0 0.0
    %1433 = vmatprep.subr.mxu0 0.0
    %1434 = vmatpush1.msra.mxu0 0.0
    %1435 = vmatprep.subr.mxu0 0.0
    %1436 = vmatpush1.msra.mxu0 0.0
    %1437 = vmatprep.subr.mxu0 0.0
    %1438 = vmatpush1.msra.mxu0 0.0
    %1439 = vmatprep.subr.mxu0 0.0
    %1440 = vmatpush1.msra.mxu0 0.0
    %1441 = vmatprep.subr.mxu0 0.0
    %1442 = vmatpush1.msra.mxu0 0.0
    %1443 = vmatprep.subr.mxu0 0.0
    %1444 = vmatpush1.msra.mxu0 0.0
    %1445 = vmatprep.subr.mxu0 0.0
    %1446 = vmatpush1.msra.mxu0 0.0
    %1447 = vmatprep.subr.mxu0 0.0
    %1448 = vmatpush1.msra.mxu0 0.0
    %1449 = vmatprep.subr.mxu0 0.0
    %1450 = vmatpush1.msra.mxu0 0.0
    %1451 = vmatprep.subr.mxu0 0.0
    %1452 = vmatpush1.msra.mxu0 0.0
    %1453 = vmatprep.subr.mxu0 0.0
    %1454 = vmatpush1.msra.mxu0 0.0
    %1455 = vmatprep.subr.mxu0 0.0
    %1456 = vmatpush1.msra.mxu0 0.0
    %1457 = vmatprep.subr.mxu0 0.0
    %1458 = vmatpush1.msra.mxu0 0.0
    %1459 = vmatprep.mubr.f32.mxu0 0.0
    %1460 = vmatmul.mubr.f32.gmra.mrb[0].mxu0 %v1393
    %v1461 = vpop.f32.mrb[0].mxu0
    %v1462 = vadd.f32 0.0, %v1461
    %v1463 = vpop.f32.mrb[0].mxu0
    %1464 = vdwg.mxu0
    %v1466 = vsel %vm865, %v953, 0
    %1468 = vmatprep.subr.mxu0 0.0
    %1469 = vmatpush1.msra.mxu0 %v245
    %1470 = vmatprep.subr.mxu0 0.0
    %1471 = vmatpush1.msra.mxu0 0.0
    %1472 = vmatprep.subr.mxu0 0.0
    %1473 = vmatpush1.msra.mxu0 0.0
    %1474 = vmatprep.subr.mxu0 0.0
    %1475 = vmatpush1.msra.mxu0 0.0
    %1476 = vmatprep.subr.mxu0 0.0
    %1477 = vmatpush1.msra.mxu0 0.0
    %1478 = vmatprep.subr.mxu0 0.0
    %1479 = vmatpush1.msra.mxu0 0.0
    %1480 = vmatprep.subr.mxu0 0.0
    %1481 = vmatpush1.msra.mxu0 0.0
    %1482 = vmatprep.subr.mxu0 0.0
    %1483 = vmatpush1.msra.mxu0 0.0
    %1484 = vmatprep.subr.mxu0 0.0
    %1485 = vmatpush1.msra.mxu0 0.0
    %1486 = vmatprep.subr.mxu0 0.0
    %1487 = vmatpush1.msra.mxu0 0.0
    %1488 = vmatprep.subr.mxu0 0.0
    %1489 = vmatpush1.msra.mxu0 0.0
    %1490 = vmatprep.subr.mxu0 0.0
    %1491 = vmatpush1.msra.mxu0 0.0
    %1492 = vmatprep.subr.mxu0 0.0
    %1493 = vmatpush1.msra.mxu0 0.0
    %1494 = vmatprep.subr.mxu0 0.0
    %1495 = vmatpush1.msra.mxu0 0.0
    %1496 = vmatprep.subr.mxu0 0.0
    %1497 = vmatpush1.msra.mxu0 0.0
    %1498 = vmatprep.subr.mxu0 0.0
    %1499 = vmatpush1.msra.mxu0 0.0
    %1500 = vmatprep.subr.mxu0 0.0
    %1501 = vmatpush1.msra.mxu0 0.0
    %1502 = vmatprep.subr.mxu0 0.0
    %1503 = vmatpush1.msra.mxu0 0.0
    %1504 = vmatprep.subr.mxu0 0.0
    %1505 = vmatpush1.msra.mxu0 0.0
    %1506 = vmatprep.subr.mxu0 0.0
    %1507 = vmatpush1.msra.mxu0 0.0
    %1508 = vmatprep.subr.mxu0 0.0
    %1509 = vmatpush1.msra.mxu0 0.0
    %1510 = vmatprep.subr.mxu0 0.0
    %1511 = vmatpush1.msra.mxu0 0.0
    %1512 = vmatprep.subr.mxu0 0.0
    %1513 = vmatpush1.msra.mxu0 0.0
    %1514 = vmatprep.subr.mxu0 0.0
    %1515 = vmatpush1.msra.mxu0 0.0
    %1516 = vmatprep.subr.mxu0 0.0
    %1517 = vmatpush1.msra.mxu0 0.0
    %1518 = vmatprep.subr.mxu0 0.0
    %1519 = vmatpush1.msra.mxu0 0.0
    %1520 = vmatprep.subr.mxu0 0.0
    %1521 = vmatpush1.msra.mxu0 0.0
    %1522 = vmatprep.subr.mxu0 0.0
    %1523 = vmatpush1.msra.mxu0 0.0
    %1524 = vmatprep.subr.mxu0 0.0
    %1525 = vmatpush1.msra.mxu0 0.0
    %1526 = vmatprep.subr.mxu0 0.0
    %1527 = vmatpush1.msra.mxu0 0.0
    %1528 = vmatprep.subr.mxu0 0.0
    %1529 = vmatpush1.msra.mxu0 0.0
    %1530 = vmatprep.subr.mxu0 0.0
    %1531 = vmatpush1.msra.mxu0 0.0
    %1532 = vmatprep.mubr.f32.mxu0 0.0
    %1533 = vmatmul.mubr.f32.gmra.mrb[0].mxu0 %v1466
    %v1534 = vpop.f32.mrb[0].mxu0
    %v1535 = vadd.f32 0.0, %v1534
    %v1536 = vpop.f32.mrb[0].mxu0
    %1537 = vdwg.mxu0
    %v1538 = vld [vmem:[#allocation5] sm:$0xff]
    %v1539 = vld [vmem:[#allocation5 + $0x8] sm:$0xff]
    %v1540 = vld [vmem:[#allocation5 + $0x10] sm:$0xff]
    %v1541 = vld [vmem:[#allocation5 + $0x18] sm:$0xff]
    %v1542 = vld [vmem:[#allocation5 + $0x20] sm:$0xff]
    %v1543 = vld [vmem:[#allocation5 + $0x28] sm:$0xff]
    %v1544 = vld [vmem:[#allocation5 + $0x30] sm:$0xff]
    %v1545 = vld [vmem:[#allocation5 + $0x38] sm:$0xff]
    %v1546 = vld [vmem:[#allocation5 + $0x40] sm:$0xff]
    %v1547 = vld [vmem:[#allocation5 + $0x48] sm:$0xff]
    %v1548 = vld [vmem:[#allocation5 + $0x50] sm:$0xff]
    %v1549 = vld [vmem:[#allocation5 + $0x58] sm:$0xff]
    %v1550 = vld [vmem:[#allocation5 + $0x60] sm:$0xff]
    %v1551 = vld [vmem:[#allocation5 + $0x68] sm:$0xff]
    %v1552 = vld [vmem:[#allocation5 + $0x70] sm:$0xff]
    %v1553 = vld [vmem:[#allocation5 + $0x78] sm:$0xff]
    %v1555 = vsel %vm250, %v1024, 0
    %1557 = vmatprep.subr.mxu0 0.0
    %1558 = vmatpush1.msra.mxu0 %v1538
    %1559 = vmatprep.subr.mxu0 0.0
    %1560 = vmatpush1.msra.mxu0 %v1539
    %1561 = vmatprep.subr.mxu0 0.0
    %1562 = vmatpush1.msra.mxu0 0.0
    %1563 = vmatprep.subr.mxu0 0.0
    %1564 = vmatpush1.msra.mxu0 0.0
    %1565 = vmatprep.subr.mxu0 0.0
    %1566 = vmatpush1.msra.mxu0 0.0
    %1567 = vmatprep.subr.mxu0 0.0
    %1568 = vmatpush1.msra.mxu0 0.0
    %1569 = vmatprep.subr.mxu0 0.0
    %1570 = vmatpush1.msra.mxu0 0.0
    %1571 = vmatprep.subr.mxu0 0.0
    %1572 = vmatpush1.msra.mxu0 0.0
    %1573 = vmatprep.subr.mxu0 0.0
    %1574 = vmatpush1.msra.mxu0 0.0
    %1575 = vmatprep.subr.mxu0 0.0
    %1576 = vmatpush1.msra.mxu0 0.0
    %1577 = vmatprep.subr.mxu0 0.0
    %1578 = vmatpush1.msra.mxu0 0.0
    %1579 = vmatprep.subr.mxu0 0.0
    %1580 = vmatpush1.msra.mxu0 0.0
    %1581 = vmatprep.subr.mxu0 0.0
    %1582 = vmatpush1.msra.mxu0 0.0
    %1583 = vmatprep.subr.mxu0 0.0
    %1584 = vmatpush1.msra.mxu0 0.0
    %1585 = vmatprep.subr.mxu0 0.0
    %1586 = vmatpush1.msra.mxu0 0.0
    %1587 = vmatprep.subr.mxu0 0.0
    %1588 = vmatpush1.msra.mxu0 0.0
    %1589 = vmatprep.subr.mxu0 0.0
    %1590 = vmatpush1.msra.mxu0 0.0
    %1591 = vmatprep.subr.mxu0 0.0
    %1592 = vmatpush1.msra.mxu0 0.0
    %1593 = vmatprep.subr.mxu0 0.0
    %1594 = vmatpush1.msra.mxu0 0.0
    %1595 = vmatprep.subr.mxu0 0.0
    %1596 = vmatpush1.msra.mxu0 0.0
    %1597 = vmatprep.subr.mxu0 0.0
    %1598 = vmatpush1.msra.mxu0 0.0
    %1599 = vmatprep.subr.mxu0 0.0
    %1600 = vmatpush1.msra.mxu0 0.0
    %1601 = vmatprep.subr.mxu0 0.0
    %1602 = vmatpush1.msra.mxu0 0.0
    %1603 = vmatprep.subr.mxu0 0.0
    %1604 = vmatpush1.msra.mxu0 0.0
    %1605 = vmatprep.subr.mxu0 0.0
    %1606 = vmatpush1.msra.mxu0 0.0
    %1607 = vmatprep.subr.mxu0 0.0
    %1608 = vmatpush1.msra.mxu0 0.0
    %1609 = vmatprep.subr.mxu0 0.0
    %1610 = vmatpush1.msra.mxu0 0.0
    %1611 = vmatprep.subr.mxu0 0.0
    %1612 = vmatpush1.msra.mxu0 0.0
    %1613 = vmatprep.subr.mxu0 0.0
    %1614 = vmatpush1.msra.mxu0 0.0
    %1615 = vmatprep.subr.mxu0 0.0
    %1616 = vmatpush1.msra.mxu0 0.0
    %1617 = vmatprep.subr.mxu0 0.0
    %1618 = vmatpush1.msra.mxu0 0.0
    %1619 = vmatprep.subr.mxu0 0.0
    %1620 = vmatpush1.msra.mxu0 0.0
    %1621 = vmatprep.mubr.f32.mxu0 0.0
    %1622 = vmatmul.mubr.f32.gmra.mrb[0].mxu0 %v1555
    %v1623 = vpop.f32.mrb[0].mxu0
    %v1624 = vadd.f32 0.0, %v1623
    %v1625 = vpop.f32.mrb[0].mxu0
    %1626 = vdwg.mxu0
    %v1628 = vsel %vm250, %v1097, 0
    %1630 = vmatprep.subr.mxu0 0.0
    %1631 = vmatpush1.msra.mxu0 %v1540
    %1632 = vmatprep.subr.mxu0 0.0
    %1633 = vmatpush1.msra.mxu0 %v1541
    %1634 = vmatprep.subr.mxu0 0.0
    %1635 = vmatpush1.msra.mxu0 0.0
    %1636 = vmatprep.subr.mxu0 0.0
    %1637 = vmatpush1.msra.mxu0 0.0
    %1638 = vmatprep.subr.mxu0 0.0
    %1639 = vmatpush1.msra.mxu0 0.0
    %1640 = vmatprep.subr.mxu0 0.0
    %1641 = vmatpush1.msra.mxu0 0.0
    %1642 = vmatprep.subr.mxu0 0.0
    %1643 = vmatpush1.msra.mxu0 0.0
    %1644 = vmatprep.subr.mxu0 0.0
    %1645 = vmatpush1.msra.mxu0 0.0
    %1646 = vmatprep.subr.mxu0 0.0
    %1647 = vmatpush1.msra.mxu0 0.0
    %1648 = vmatprep.subr.mxu0 0.0
    %1649 = vmatpush1.msra.mxu0 0.0
    %1650 = vmatprep.subr.mxu0 0.0
    %1651 = vmatpush1.msra.mxu0 0.0
    %1652 = vmatprep.subr.mxu0 0.0
    %1653 = vmatpush1.msra.mxu0 0.0
    %1654 = vmatprep.subr.mxu0 0.0
    %1655 = vmatpush1.msra.mxu0 0.0
    %1656 = vmatprep.subr.mxu0 0.0
    %1657 = vmatpush1.msra.mxu0 0.0
    %1658 = vmatprep.subr.mxu0 0.0
    %1659 = vmatpush1.msra.mxu0 0.0
    %1660 = vmatprep.subr.mxu0 0.0
    %1661 = vmatpush1.msra.mxu0 0.0
    %1662 = vmatprep.subr.mxu0 0.0
    %1663 = vmatpush1.msra.mxu0 0.0
    %1664 = vmatprep.subr.mxu0 0.0
    %1665 = vmatpush1.msra.mxu0 0.0
    %1666 = vmatprep.subr.mxu0 0.0
    %1667 = vmatpush1.msra.mxu0 0.0
    %1668 = vmatprep.subr.mxu0 0.0
    %1669 = vmatpush1.msra.mxu0 0.0
    %1670 = vmatprep.subr.mxu0 0.0
    %1671 = vmatpush1.msra.mxu0 0.0
    %1672 = vmatprep.subr.mxu0 0.0
    %1673 = vmatpush1.msra.mxu0 0.0
    %1674 = vmatprep.subr.mxu0 0.0
    %1675 = vmatpush1.msra.mxu0 0.0
    %1676 = vmatprep.subr.mxu0 0.0
    %1677 = vmatpush1.msra.mxu0 0.0
    %1678 = vmatprep.subr.mxu0 0.0
    %1679 = vmatpush1.msra.mxu0 0.0
    %1680 = vmatprep.subr.mxu0 0.0
    %1681 = vmatpush1.msra.mxu0 0.0
    %1682 = vmatprep.subr.mxu0 0.0
    %1683 = vmatpush1.msra.mxu0 0.0
    %1684 = vmatprep.subr.mxu0 0.0
    %1685 = vmatpush1.msra.mxu0 0.0
    %1686 = vmatprep.subr.mxu0 0.0
    %1687 = vmatpush1.msra.mxu0 0.0
    %1688 = vmatprep.subr.mxu0 0.0
    %1689 = vmatpush1.msra.mxu0 0.0
    %1690 = vmatprep.subr.mxu0 0.0
    %1691 = vmatpush1.msra.mxu0 0.0
    %1692 = vmatprep.subr.mxu0 0.0
    %1693 = vmatpush1.msra.mxu0 0.0
    %1694 = vmatprep.mubr.f32.mxu0 0.0
    %1695 = vmatmul.mubr.f32.gmra.mrb[0].mxu0 %v1628
    %v1696 = vpop.f32.mrb[0].mxu0
    %v1697 = vadd.f32 0.0, %v1696
    %v1698 = vpop.f32.mrb[0].mxu0
    %1699 = vdwg.mxu0
    %v1701 = vsel %vm250, %v1170, 0
    %1703 = vmatprep.subr.mxu0 0.0
    %1704 = vmatpush1.msra.mxu0 %v1542
    %1705 = vmatprep.subr.mxu0 0.0
    %1706 = vmatpush1.msra.mxu0 %v1543
    %1707 = vmatprep.subr.mxu0 0.0
    %1708 = vmatpush1.msra.mxu0 0.0
    %1709 = vmatprep.subr.mxu0 0.0
    %1710 = vmatpush1.msra.mxu0 0.0
    %1711 = vmatprep.subr.mxu0 0.0
    %1712 = vmatpush1.msra.mxu0 0.0
    %1713 = vmatprep.subr.mxu0 0.0
    %1714 = vmatpush1.msra.mxu0 0.0
    %1715 = vmatprep.subr.mxu0 0.0
    %1716 = vmatpush1.msra.mxu0 0.0
    %1717 = vmatprep.subr.mxu0 0.0
    %1718 = vmatpush1.msra.mxu0 0.0
    %1719 = vmatprep.subr.mxu0 0.0
    %1720 = vmatpush1.msra.mxu0 0.0
    %1721 = vmatprep.subr.mxu0 0.0
    %1722 = vmatpush1.msra.mxu0 0.0
    %1723 = vmatprep.subr.mxu0 0.0
    %1724 = vmatpush1.msra.mxu0 0.0
    %1725 = vmatprep.subr.mxu0 0.0
    %1726 = vmatpush1.msra.mxu0 0.0
    %1727 = vmatprep.subr.mxu0 0.0
    %1728 = vmatpush1.msra.mxu0 0.0
    %1729 = vmatprep.subr.mxu0 0.0
    %1730 = vmatpush1.msra.mxu0 0.0
    %1731 = vmatprep.subr.mxu0 0.0
    %1732 = vmatpush1.msra.mxu0 0.0
    %1733 = vmatprep.subr.mxu0 0.0
    %1734 = vmatpush1.msra.mxu0 0.0
    %1735 = vmatprep.subr.mxu0 0.0
    %1736 = vmatpush1.msra.mxu0 0.0
    %1737 = vmatprep.subr.mxu0 0.0
    %1738 = vmatpush1.msra.mxu0 0.0
    %1739 = vmatprep.subr.mxu0 0.0
    %1740 = vmatpush1.msra.mxu0 0.0
    %1741 = vmatprep.subr.mxu0 0.0
    %1742 = vmatpush1.msra.mxu0 0.0
    %1743 = vmatprep.subr.mxu0 0.0
    %1744 = vmatpush1.msra.mxu0 0.0
    %1745 = vmatprep.subr.mxu0 0.0
    %1746 = vmatpush1.msra.mxu0 0.0
    %1747 = vmatprep.subr.mxu0 0.0
    %1748 = vmatpush1.msra.mxu0 0.0
    %1749 = vmatprep.subr.mxu0 0.0
    %1750 = vmatpush1.msra.mxu0 0.0
    %1751 = vmatprep.subr.mxu0 0.0
    %1752 = vmatpush1.msra.mxu0 0.0
    %1753 = vmatprep.subr.mxu0 0.0
    %1754 = vmatpush1.msra.mxu0 0.0
    %1755 = vmatprep.subr.mxu0 0.0
    %1756 = vmatpush1.msra.mxu0 0.0
    %1757 = vmatprep.subr.mxu0 0.0
    %1758 = vmatpush1.msra.mxu0 0.0
    %1759 = vmatprep.subr.mxu0 0.0
    %1760 = vmatpush1.msra.mxu0 0.0
    %1761 = vmatprep.subr.mxu0 0.0
    %1762 = vmatpush1.msra.mxu0 0.0
    %1763 = vmatprep.subr.mxu0 0.0
    %1764 = vmatpush1.msra.mxu0 0.0
    %1765 = vmatprep.subr.mxu0 0.0
    %1766 = vmatpush1.msra.mxu0 0.0
    %1767 = vmatprep.mubr.f32.mxu0 0.0
    %1768 = vmatmul.mubr.f32.gmra.mrb[0].mxu0 %v1701
    %v1769 = vpop.f32.mrb[0].mxu0
    %v1770 = vadd.f32 0.0, %v1769
    %v1771 = vpop.f32.mrb[0].mxu0
    %1772 = vdwg.mxu0
    %v1774 = vsel %vm250, %v1243, 0
    %1776 = vmatprep.subr.mxu0 0.0
    %1777 = vmatpush1.msra.mxu0 %v1544
    %1778 = vmatprep.subr.mxu0 0.0
    %1779 = vmatpush1.msra.mxu0 %v1545
    %1780 = vmatprep.subr.mxu0 0.0
    %1781 = vmatpush1.msra.mxu0 0.0
    %1782 = vmatprep.subr.mxu0 0.0
    %1783 = vmatpush1.msra.mxu0 0.0
    %1784 = vmatprep.subr.mxu0 0.0
    %1785 = vmatpush1.msra.mxu0 0.0
    %1786 = vmatprep.subr.mxu0 0.0
    %1787 = vmatpush1.msra.mxu0 0.0
    %1788 = vmatprep.subr.mxu0 0.0
    %1789 = vmatpush1.msra.mxu0 0.0
    %1790 = vmatprep.subr.mxu0 0.0
    %1791 = vmatpush1.msra.mxu0 0.0
    %1792 = vmatprep.subr.mxu0 0.0
    %1793 = vmatpush1.msra.mxu0 0.0
    %1794 = vmatprep.subr.mxu0 0.0
    %1795 = vmatpush1.msra.mxu0 0.0
    %1796 = vmatprep.subr.mxu0 0.0
    %1797 = vmatpush1.msra.mxu0 0.0
    %1798 = vmatprep.subr.mxu0 0.0
    %1799 = vmatpush1.msra.mxu0 0.0
    %1800 = vmatprep.subr.mxu0 0.0
    %1801 = vmatpush1.msra.mxu0 0.0
    %1802 = vmatprep.subr.mxu0 0.0
    %1803 = vmatpush1.msra.mxu0 0.0
    %1804 = vmatprep.subr.mxu0 0.0
    %1805 = vmatpush1.msra.mxu0 0.0
    %1806 = vmatprep.subr.mxu0 0.0
    %1807 = vmatpush1.msra.mxu0 0.0
    %1808 = vmatprep.subr.mxu0 0.0
    %1809 = vmatpush1.msra.mxu0 0.0
    %1810 = vmatprep.subr.mxu0 0.0
    %1811 = vmatpush1.msra.mxu0 0.0
    %1812 = vmatprep.subr.mxu0 0.0
    %1813 = vmatpush1.msra.mxu0 0.0
    %1814 = vmatprep.subr.mxu0 0.0
    %1815 = vmatpush1.msra.mxu0 0.0
    %1816 = vmatprep.subr.mxu0 0.0
    %1817 = vmatpush1.msra.mxu0 0.0
    %1818 = vmatprep.subr.mxu0 0.0
    %1819 = vmatpush1.msra.mxu0 0.0
    %1820 = vmatprep.subr.mxu0 0.0
    %1821 = vmatpush1.msra.mxu0 0.0
    %1822 = vmatprep.subr.mxu0 0.0
    %1823 = vmatpush1.msra.mxu0 0.0
    %1824 = vmatprep.subr.mxu0 0.0
    %1825 = vmatpush1.msra.mxu0 0.0
    %1826 = vmatprep.subr.mxu0 0.0
    %1827 = vmatpush1.msra.mxu0 0.0
    %1828 = vmatprep.subr.mxu0 0.0
    %1829 = vmatpush1.msra.mxu0 0.0
    %1830 = vmatprep.subr.mxu0 0.0
    %1831 = vmatpush1.msra.mxu0 0.0
    %1832 = vmatprep.subr.mxu0 0.0
    %1833 = vmatpush1.msra.mxu0 0.0
    %1834 = vmatprep.subr.mxu0 0.0
    %1835 = vmatpush1.msra.mxu0 0.0
    %1836 = vmatprep.subr.mxu0 0.0
    %1837 = vmatpush1.msra.mxu0 0.0
    %1838 = vmatprep.subr.mxu0 0.0
    %1839 = vmatpush1.msra.mxu0 0.0
    %1840 = vmatprep.mubr.f32.mxu0 0.0
    %1841 = vmatmul.mubr.f32.gmra.mrb[0].mxu0 %v1774
    %v1842 = vpop.f32.mrb[0].mxu0
    %v1843 = vadd.f32 0.0, %v1842
    %v1844 = vpop.f32.mrb[0].mxu0
    %1845 = vdwg.mxu0
    %v1847 = vsel %vm250, %v1316, 0
    %1849 = vmatprep.subr.mxu0 0.0
    %1850 = vmatpush1.msra.mxu0 %v1546
    %1851 = vmatprep.subr.mxu0 0.0
    %1852 = vmatpush1.msra.mxu0 %v1547
    %1853 = vmatprep.subr.mxu0 0.0
    %1854 = vmatpush1.msra.mxu0 0.0
    %1855 = vmatprep.subr.mxu0 0.0
    %1856 = vmatpush1.msra.mxu0 0.0
    %1857 = vmatprep.subr.mxu0 0.0
    %1858 = vmatpush1.msra.mxu0 0.0
    %1859 = vmatprep.subr.mxu0 0.0
    %1860 = vmatpush1.msra.mxu0 0.0
    %1861 = vmatprep.subr.mxu0 0.0
    %1862 = vmatpush1.msra.mxu0 0.0
    %1863 = vmatprep.subr.mxu0 0.0
    %1864 = vmatpush1.msra.mxu0 0.0
    %1865 = vmatprep.subr.mxu0 0.0
    %1866 = vmatpush1.msra.mxu0 0.0
    %1867 = vmatprep.subr.mxu0 0.0
    %1868 = vmatpush1.msra.mxu0 0.0
    %1869 = vmatprep.subr.mxu0 0.0
    %1870 = vmatpush1.msra.mxu0 0.0
    %1871 = vmatprep.subr.mxu0 0.0
    %1872 = vmatpush1.msra.mxu0 0.0
    %1873 = vmatprep.subr.mxu0 0.0
    %1874 = vmatpush1.msra.mxu0 0.0
    %1875 = vmatprep.subr.mxu0 0.0
    %1876 = vmatpush1.msra.mxu0 0.0
    %1877 = vmatprep.subr.mxu0 0.0
    %1878 = vmatpush1.msra.mxu0 0.0
    %1879 = vmatprep.subr.mxu0 0.0
    %1880 = vmatpush1.msra.mxu0 0.0
    %1881 = vmatprep.subr.mxu0 0.0
    %1882 = vmatpush1.msra.mxu0 0.0
    %1883 = vmatprep.subr.mxu0 0.0
    %1884 = vmatpush1.msra.mxu0 0.0
    %1885 = vmatprep.subr.mxu0 0.0
    %1886 = vmatpush1.msra.mxu0 0.0
    %1887 = vmatprep.subr.mxu0 0.0
    %1888 = vmatpush1.msra.mxu0 0.0
    %1889 = vmatprep.subr.mxu0 0.0
    %1890 = vmatpush1.msra.mxu0 0.0
    %1891 = vmatprep.subr.mxu0 0.0
    %1892 = vmatpush1.msra.mxu0 0.0
    %1893 = vmatprep.subr.mxu0 0.0
    %1894 = vmatpush1.msra.mxu0 0.0
    %1895 = vmatprep.subr.mxu0 0.0
    %1896 = vmatpush1.msra.mxu0 0.0
    %1897 = vmatprep.subr.mxu0 0.0
    %1898 = vmatpush1.msra.mxu0 0.0
    %1899 = vmatprep.subr.mxu0 0.0
    %1900 = vmatpush1.msra.mxu0 0.0
    %1901 = vmatprep.subr.mxu0 0.0
    %1902 = vmatpush1.msra.mxu0 0.0
    %1903 = vmatprep.subr.mxu0 0.0
    %1904 = vmatpush1.msra.mxu0 0.0
    %1905 = vmatprep.subr.mxu0 0.0
    %1906 = vmatpush1.msra.mxu0 0.0
    %1907 = vmatprep.subr.mxu0 0.0
    %1908 = vmatpush1.msra.mxu0 0.0
    %1909 = vmatprep.subr.mxu0 0.0
    %1910 = vmatpush1.msra.mxu0 0.0
    %1911 = vmatprep.subr.mxu0 0.0
    %1912 = vmatpush1.msra.mxu0 0.0
    %1913 = vmatprep.mubr.f32.mxu0 0.0
    %1914 = vmatmul.mubr.f32.gmra.mrb[0].mxu0 %v1847
    %v1915 = vpop.f32.mrb[0].mxu0
    %v1916 = vadd.f32 0.0, %v1915
    %v1917 = vpop.f32.mrb[0].mxu0
    %1918 = vdwg.mxu0
    %v1920 = vsel %vm250, %v1389, 0
    %1922 = vmatprep.subr.mxu0 0.0
    %1923 = vmatpush1.msra.mxu0 %v1548
    %1924 = vmatprep.subr.mxu0 0.0
    %1925 = vmatpush1.msra.mxu0 %v1549
    %1926 = vmatprep.subr.mxu0 0.0
    %1927 = vmatpush1.msra.mxu0 0.0
    %1928 = vmatprep.subr.mxu0 0.0
    %1929 = vmatpush1.msra.mxu0 0.0
    %1930 = vmatprep.subr.mxu0 0.0
    %1931 = vmatpush1.msra.mxu0 0.0
    %1932 = vmatprep.subr.mxu0 0.0
    %1933 = vmatpush1.msra.mxu0 0.0
    %1934 = vmatprep.subr.mxu0 0.0
    %1935 = vmatpush1.msra.mxu0 0.0
    %1936 = vmatprep.subr.mxu0 0.0
    %1937 = vmatpush1.msra.mxu0 0.0
    %1938 = vmatprep.subr.mxu0 0.0
    %1939 = vmatpush1.msra.mxu0 0.0
    %1940 = vmatprep.subr.mxu0 0.0
    %1941 = vmatpush1.msra.mxu0 0.0
    %1942 = vmatprep.subr.mxu0 0.0
    %1943 = vmatpush1.msra.mxu0 0.0
    %1944 = vmatprep.subr.mxu0 0.0
    %1945 = vmatpush1.msra.mxu0 0.0
    %1946 = vmatprep.subr.mxu0 0.0
    %1947 = vmatpush1.msra.mxu0 0.0
    %1948 = vmatprep.subr.mxu0 0.0
    %1949 = vmatpush1.msra.mxu0 0.0
    %1950 = vmatprep.subr.mxu0 0.0
    %1951 = vmatpush1.msra.mxu0 0.0
    %1952 = vmatprep.subr.mxu0 0.0
    %1953 = vmatpush1.msra.mxu0 0.0
    %1954 = vmatprep.subr.mxu0 0.0
    %1955 = vmatpush1.msra.mxu0 0.0
    %1956 = vmatprep.subr.mxu0 0.0
    %1957 = vmatpush1.msra.mxu0 0.0
    %1958 = vmatprep.subr.mxu0 0.0
    %1959 = vmatpush1.msra.mxu0 0.0
    %1960 = vmatprep.subr.mxu0 0.0
    %1961 = vmatpush1.msra.mxu0 0.0
    %1962 = vmatprep.subr.mxu0 0.0
    %1963 = vmatpush1.msra.mxu0 0.0
    %1964 = vmatprep.subr.mxu0 0.0
    %1965 = vmatpush1.msra.mxu0 0.0
    %1966 = vmatprep.subr.mxu0 0.0
    %1967 = vmatpush1.msra.mxu0 0.0
    %1968 = vmatprep.subr.mxu0 0.0
    %1969 = vmatpush1.msra.mxu0 0.0
    %1970 = vmatprep.subr.mxu0 0.0
    %1971 = vmatpush1.msra.mxu0 0.0
    %1972 = vmatprep.subr.mxu0 0.0
    %1973 = vmatpush1.msra.mxu0 0.0
    %1974 = vmatprep.subr.mxu0 0.0
    %1975 = vmatpush1.msra.mxu0 0.0
    %1976 = vmatprep.subr.mxu0 0.0
    %1977 = vmatpush1.msra.mxu0 0.0
    %1978 = vmatprep.subr.mxu0 0.0
    %1979 = vmatpush1.msra.mxu0 0.0
    %1980 = vmatprep.subr.mxu0 0.0
    %1981 = vmatpush1.msra.mxu0 0.0
    %1982 = vmatprep.subr.mxu0 0.0
    %1983 = vmatpush1.msra.mxu0 0.0
    %1984 = vmatprep.subr.mxu0 0.0
    %1985 = vmatpush1.msra.mxu0 0.0
    %1986 = vmatprep.mubr.f32.mxu0 0.0
    %1987 = vmatmul.mubr.f32.gmra.mrb[0].mxu0 %v1920
    %v1988 = vpop.f32.mrb[0].mxu0
    %v1989 = vadd.f32 0.0, %v1988
    %v1990 = vpop.f32.mrb[0].mxu0
    %1991 = vdwg.mxu0
    %v1993 = vsel %vm250, %v1462, 0
    %1995 = vmatprep.subr.mxu0 0.0
    %1996 = vmatpush1.msra.mxu0 %v1550
    %1997 = vmatprep.subr.mxu0 0.0
    %1998 = vmatpush1.msra.mxu0 %v1551
    %1999 = vmatprep.subr.mxu0 0.0
    %2000 = vmatpush1.msra.mxu0 0.0
    %2001 = vmatprep.subr.mxu0 0.0
    %2002 = vmatpush1.msra.mxu0 0.0
    %2003 = vmatprep.subr.mxu0 0.0
    %2004 = vmatpush1.msra.mxu0 0.0
    %2005 = vmatprep.subr.mxu0 0.0
    %2006 = vmatpush1.msra.mxu0 0.0
    %2007 = vmatprep.subr.mxu0 0.0
    %2008 = vmatpush1.msra.mxu0 0.0
    %2009 = vmatprep.subr.mxu0 0.0
    %2010 = vmatpush1.msra.mxu0 0.0
    %2011 = vmatprep.subr.mxu0 0.0
    %2012 = vmatpush1.msra.mxu0 0.0
    %2013 = vmatprep.subr.mxu0 0.0
    %2014 = vmatpush1.msra.mxu0 0.0
    %2015 = vmatprep.subr.mxu0 0.0
    %2016 = vmatpush1.msra.mxu0 0.0
    %2017 = vmatprep.subr.mxu0 0.0
    %2018 = vmatpush1.msra.mxu0 0.0
    %2019 = vmatprep.subr.mxu0 0.0
    %2020 = vmatpush1.msra.mxu0 0.0
    %2021 = vmatprep.subr.mxu0 0.0
    %2022 = vmatpush1.msra.mxu0 0.0
    %2023 = vmatprep.subr.mxu0 0.0
    %2024 = vmatpush1.msra.mxu0 0.0
    %2025 = vmatprep.subr.mxu0 0.0
    %2026 = vmatpush1.msra.mxu0 0.0
    %2027 = vmatprep.subr.mxu0 0.0
    %2028 = vmatpush1.msra.mxu0 0.0
    %2029 = vmatprep.subr.mxu0 0.0
    %2030 = vmatpush1.msra.mxu0 0.0
    %2031 = vmatprep.subr.mxu0 0.0
    %2032 = vmatpush1.msra.mxu0 0.0
    %2033 = vmatprep.subr.mxu0 0.0
    %2034 = vmatpush1.msra.mxu0 0.0
    %2035 = vmatprep.subr.mxu0 0.0
    %2036 = vmatpush1.msra.mxu0 0.0
    %2037 = vmatprep.subr.mxu0 0.0
    %2038 = vmatpush1.msra.mxu0 0.0
    %2039 = vmatprep.subr.mxu0 0.0
    %2040 = vmatpush1.msra.mxu0 0.0
    %2041 = vmatprep.subr.mxu0 0.0
    %2042 = vmatpush1.msra.mxu0 0.0
    %2043 = vmatprep.subr.mxu0 0.0
    %2044 = vmatpush1.msra.mxu0 0.0
    %2045 = vmatprep.subr.mxu0 0.0
    %2046 = vmatpush1.msra.mxu0 0.0
    %2047 = vmatprep.subr.mxu0 0.0
    %2048 = vmatpush1.msra.mxu0 0.0
    %2049 = vmatprep.subr.mxu0 0.0
    %2050 = vmatpush1.msra.mxu0 0.0
    %2051 = vmatprep.subr.mxu0 0.0
    %2052 = vmatpush1.msra.mxu0 0.0
    %2053 = vmatprep.subr.mxu0 0.0
    %2054 = vmatpush1.msra.mxu0 0.0
    %2055 = vmatprep.subr.mxu0 0.0
    %2056 = vmatpush1.msra.mxu0 0.0
    %2057 = vmatprep.subr.mxu0 0.0
    %2058 = vmatpush1.msra.mxu0 0.0
    %2059 = vmatprep.mubr.f32.mxu0 0.0
    %2060 = vmatmul.mubr.f32.gmra.mrb[0].mxu0 %v1993
    %v2061 = vpop.f32.mrb[0].mxu0
    %v2062 = vadd.f32 0.0, %v2061
    %v2063 = vpop.f32.mrb[0].mxu0
    %2064 = vdwg.mxu0
    %v2066 = vsel %vm250, %v1535, 0
    %2068 = vmatprep.subr.mxu0 0.0
    %2069 = vmatpush1.msra.mxu0 %v1552
    %2070 = vmatprep.subr.mxu0 0.0
    %2071 = vmatpush1.msra.mxu0 %v1553
    %2072 = vmatprep.subr.mxu0 0.0
    %2073 = vmatpush1.msra.mxu0 0.0
    %2074 = vmatprep.subr.mxu0 0.0
    %2075 = vmatpush1.msra.mxu0 0.0
    %2076 = vmatprep.subr.mxu0 0.0
    %2077 = vmatpush1.msra.mxu0 0.0
    %2078 = vmatprep.subr.mxu0 0.0
    %2079 = vmatpush1.msra.mxu0 0.0
    %2080 = vmatprep.subr.mxu0 0.0
    %2081 = vmatpush1.msra.mxu0 0.0
    %2082 = vmatprep.subr.mxu0 0.0
    %2083 = vmatpush1.msra.mxu0 0.0
    %2084 = vmatprep.subr.mxu0 0.0
    %2085 = vmatpush1.msra.mxu0 0.0
    %2086 = vmatprep.subr.mxu0 0.0
    %2087 = vmatpush1.msra.mxu0 0.0
    %2088 = vmatprep.subr.mxu0 0.0
    %2089 = vmatpush1.msra.mxu0 0.0
    %2090 = vmatprep.subr.mxu0 0.0
    %2091 = vmatpush1.msra.mxu0 0.0
    %2092 = vmatprep.subr.mxu0 0.0
    %2093 = vmatpush1.msra.mxu0 0.0
    %2094 = vmatprep.subr.mxu0 0.0
    %2095 = vmatpush1.msra.mxu0 0.0
    %2096 = vmatprep.subr.mxu0 0.0
    %2097 = vmatpush1.msra.mxu0 0.0
    %2098 = vmatprep.subr.mxu0 0.0
    %2099 = vmatpush1.msra.mxu0 0.0
    %2100 = vmatprep.subr.mxu0 0.0
    %2101 = vmatpush1.msra.mxu0 0.0
    %2102 = vmatprep.subr.mxu0 0.0
    %2103 = vmatpush1.msra.mxu0 0.0
    %2104 = vmatprep.subr.mxu0 0.0
    %2105 = vmatpush1.msra.mxu0 0.0
    %2106 = vmatprep.subr.mxu0 0.0
    %2107 = vmatpush1.msra.mxu0 0.0
    %2108 = vmatprep.subr.mxu0 0.0
    %2109 = vmatpush1.msra.mxu0 0.0
    %2110 = vmatprep.subr.mxu0 0.0
    %2111 = vmatpush1.msra.mxu0 0.0
    %2112 = vmatprep.subr.mxu0 0.0
    %2113 = vmatpush1.msra.mxu0 0.0
    %2114 = vmatprep.subr.mxu0 0.0
    %2115 = vmatpush1.msra.mxu0 0.0
    %2116 = vmatprep.subr.mxu0 0.0
    %2117 = vmatpush1.msra.mxu0 0.0
    %2118 = vmatprep.subr.mxu0 0.0
    %2119 = vmatpush1.msra.mxu0 0.0
    %2120 = vmatprep.subr.mxu0 0.0
    %2121 = vmatpush1.msra.mxu0 0.0
    %2122 = vmatprep.subr.mxu0 0.0
    %2123 = vmatpush1.msra.mxu0 0.0
    %2124 = vmatprep.subr.mxu0 0.0
    %2125 = vmatpush1.msra.mxu0 0.0
    %2126 = vmatprep.subr.mxu0 0.0
    %2127 = vmatpush1.msra.mxu0 0.0
    %2128 = vmatprep.subr.mxu0 0.0
    %2129 = vmatpush1.msra.mxu0 0.0
    %2130 = vmatprep.subr.mxu0 0.0
    %2131 = vmatpush1.msra.mxu0 0.0
    %2132 = vmatprep.mubr.f32.mxu0 0.0
    %2133 = vmatmul.mubr.f32.gmra.mrb[0].mxu0 %v2066
    %v2134 = vpop.f32.mrb[0].mxu0
    %v2135 = vadd.f32 0.0, %v2134
    %v2136 = vpop.f32.mrb[0].mxu0
    %2137 = vdwg.mxu0
    %v2138 = vsel %vm80, %v1624, 0.0
    %v2139 = vsel %vm80, %v1770, 0.0
    %v2140 = vadd.f32 %v2138, %v2139
    %v2141 = vsel %vm80, %v1916, 0.0
    %v2142 = vadd.f32 %v2140, %v2141
    %v2143 = vsel %vm80, %v2062, 0.0
    %v2144 = vadd.f32 %v2142, %v2143
    %v2145 = vsel %vm80, %v1697, 0.0
    %v2146 = vsel %vm80, %v1843, 0.0
    %v2147 = vadd.f32 %v2145, %v2146
    %v2148 = vsel %vm80, %v1989, 0.0
    %v2149 = vadd.f32 %v2147, %v2148
    %v2150 = vsel %vm80, %v2135, 0.0
    %v2151 = vadd.f32 %v2149, %v2150
    %v2152 = vld [vmem:[%s6] sm:$0x1]
    %v2154 = vlaneseq
    %v2155 = vshrl.u32 %v2154, 7
    %v2156 = vsub.s32 0, %v2155
    %v2157 = vrot.slane %v2152, %v2156
    %v2159 = vadd.f32 %v2144, %v2157
    %v2160 = vadd.f32 %v2151, %v2157
    %v2161 = vadd.f32 %v76, %v2159
    %v2162 = vadd.f32 %v77, %v2160
    %v2163 = vld [vmem:[%s7] sm:$0x1]
    %v2164 = vld [vmem:[%s8] sm:$0x1]
    %v2165 = vsel %vm80, %v2161, 0.0
    %2166 = vadd.xlane.f32.xlu0 %v2165
    %v2167 = vpop.xlane.xlu0 %2166
    %v2168 = vsel %vm80, %v2162, 0.0
    %2169 = vadd.xlane.f32.xlu0 %v2168
    %v2170 = vpop.xlane.xlu0 %2169
    %v2171 = vmul.f32 %v2167, 0.03125
    %v2172 = vmul.f32 %v2170, 0.03125
    %v2173 = vsub.f32 %v2161, %v2171
    %v2174 = vsub.f32 %v2162, %v2172
    %v2175 = vmul.f32 %v2173, %v2173
    %v2176 = vmul.f32 %v2174, %v2174
    %v2177 = vsel %vm80, %v2175, 0.0
    %2178 = vadd.xlane.f32.xlu0 %v2177
    %v2179 = vpop.xlane.xlu0 %2178
    %v2180 = vsel %vm80, %v2176, 0.0
    %2181 = vadd.xlane.f32.xlu0 %v2180
    %v2182 = vpop.xlane.xlu0 %2181
    %v2183 = vmul.f32 %v2179, 0.03125
    %v2184 = vmul.f32 %v2182, 0.03125
    %v2185 = vadd.f32 %v2183, 1e-05
    %v2186 = vadd.f32 %v2184, 1e-05
    %v2187 = vrsqrt.pop %v2185
    %v2188 = vrsqrt.pop %v2186
    %v2189 = vmul.f32 %v2173, %v2187
    %v2190 = vmul.f32 %v2174, %v2188
    %v2192 = vlaneseq
    %v2193 = vshrl.u32 %v2192, 7
    %v2194 = vsub.s32 0, %v2193
    %v2195 = vrot.slane %v2163, %v2194
    %v2197 = vmul.f32 %v2189, %v2195
    %v2198 = vmul.f32 %v2190, %v2195
    %v2200 = vlaneseq
    %v2201 = vshrl.u32 %v2200, 7
    %v2202 = vsub.s32 0, %v2201
    %v2203 = vrot.slane %v2164, %v2202
    %v2205 = vadd.f32 %v2197, %v2203
    %v2206 = vadd.f32 %v2198, %v2203
    %v2207 = vld [vmem:[%s9] sm:$0xff]
    %v2208 = vld [vmem:[%s9 + $0x8] sm:$0xff]
    %v2209 = vld [vmem:[%s9 + $0x10] sm:$0xff]
    %v2210 = vld [vmem:[%s9 + $0x18] sm:$0xff]
    %v2211 = vld [vmem:[%s10] sm:$0x1]
    %v2213 = vlaneseq
    %v2214 = vshrl.u32 %v2213, 7
    %v2215 = vsub.s32 0, %v2214
    %v2216 = vrot.slane %v2211, %v2215
    %v2219 = vsel %vm80, %v2205, 0
    %v2222 = vsel %vm80, %v2206, 0
    %2224 = vmatprep.subr.mxu0 0.0
    %2225 = vmatpush1.msra.mxu0 %v2207
    %2226 = vmatprep.subr.mxu0 0.0
    %2227 = vmatpush1.msra.mxu0 %v2208
    %2228 = vmatprep.subr.mxu0 0.0
    %2229 = vmatpush1.msra.mxu0 %v2209
    %2230 = vmatprep.subr.mxu0 0.0
    %2231 = vmatpush1.msra.mxu0 %v2210
    %2232 = vmatprep.subr.mxu0 0.0
    %2233 = vmatpush1.msra.mxu0 0.0
    %2234 = vmatprep.subr.mxu0 0.0
    %2235 = vmatpush1.msra.mxu0 0.0
    %2236 = vmatprep.subr.mxu0 0.0
    %2237 = vmatpush1.msra.mxu0 0.0
    %2238 = vmatprep.subr.mxu0 0.0
    %2239 = vmatpush1.msra.mxu0 0.0
    %2240 = vmatprep.subr.mxu0 0.0
    %2241 = vmatpush1.msra.mxu0 0.0
    %2242 = vmatprep.subr.mxu0 0.0
    %2243 = vmatpush1.msra.mxu0 0.0
    %2244 = vmatprep.subr.mxu0 0.0
    %2245 = vmatpush1.msra.mxu0 0.0
    %2246 = vmatprep.subr.mxu0 0.0
    %2247 = vmatpush1.msra.mxu0 0.0
    %2248 = vmatprep.subr.mxu0 0.0
    %2249 = vmatpush1.msra.mxu0 0.0
    %2250 = vmatprep.subr.mxu0 0.0
    %2251 = vmatpush1.msra.mxu0 0.0
    %2252 = vmatprep.subr.mxu0 0.0
    %2253 = vmatpush1.msra.mxu0 0.0
    %2254 = vmatprep.subr.mxu0 0.0
    %2255 = vmatpush1.msra.mxu0 0.0
    %2256 = vmatprep.subr.mxu0 0.0
    %2257 = vmatpush1.msra.mxu0 0.0
    %2258 = vmatprep.subr.mxu0 0.0
    %2259 = vmatpush1.msra.mxu0 0.0
    %2260 = vmatprep.subr.mxu0 0.0
    %2261 = vmatpush1.msra.mxu0 0.0
    %2262 = vmatprep.subr.mxu0 0.0
    %2263 = vmatpush1.msra.mxu0 0.0
    %2264 = vmatprep.subr.mxu0 0.0
    %2265 = vmatpush1.msra.mxu0 0.0
    %2266 = vmatprep.subr.mxu0 0.0
    %2267 = vmatpush1.msra.mxu0 0.0
    %2268 = vmatprep.subr.mxu0 0.0
    %2269 = vmatpush1.msra.mxu0 0.0
    %2270 = vmatprep.subr.mxu0 0.0
    %2271 = vmatpush1.msra.mxu0 0.0
    %2272 = vmatprep.subr.mxu0 0.0
    %2273 = vmatpush1.msra.mxu0 0.0
    %2274 = vmatprep.subr.mxu0 0.0
    %2275 = vmatpush1.msra.mxu0 0.0
    %2276 = vmatprep.subr.mxu0 0.0
    %2277 = vmatpush1.msra.mxu0 0.0
    %2278 = vmatprep.subr.mxu0 0.0
    %2279 = vmatpush1.msra.mxu0 0.0
    %2280 = vmatprep.subr.mxu0 0.0
    %2281 = vmatpush1.msra.mxu0 0.0
    %2282 = vmatprep.subr.mxu0 0.0
    %2283 = vmatpush1.msra.mxu0 0.0
    %2284 = vmatprep.subr.mxu0 0.0
    %2285 = vmatpush1.msra.mxu0 0.0
    %2286 = vmatprep.subr.mxu0 0.0
    %2287 = vmatpush1.msra.mxu0 0.0
    %2288 = vmatprep.mubr.f32.mxu0 0.0
    %2289 = vmatmul.mubr.f32.gmra.mrb[0].mxu0 %v2219
    %v2290 = vpop.f32.mrb[0].mxu0
    %v2291 = vadd.f32 %v2216, %v2290
    %v2292 = vpop.f32.mrb[0].mxu0
    %2293 = vmatprep.mubr.f32.mxu0 0.0
    %2294 = vmatmul.mubr.f32.gmra.mrb[0].mxu0 %v2222
    %v2295 = vpop.f32.mrb[0].mxu0
    %v2296 = vadd.f32 %v2216, %v2295
    %v2297 = vpop.f32.mrb[0].mxu0
    %2298 = vdwg.mxu0
    %v2299 = vmul.f32 %v2291, 0.5
    %v2300 = vmul.f32 %v2296, 0.5
    %v2301 = vmul.f32 %v2291, %v2291
    %v2302 = vmul.f32 %v2296, %v2296
    %v2303 = vmul.f32 %v2301, %v2291
    %v2304 = vmul.f32 %v2302, %v2296
    %v2305 = vmul.f32 %v2303, 0.044715
    %v2306 = vmul.f32 %v2304, 0.044715
    %v2307 = vadd.f32 %v2291, %v2305
    %v2308 = vadd.f32 %v2296, %v2306
    %v2309 = vmul.f32 %v2307, 0.7978846
    %v2310 = vmul.f32 %v2308, 0.7978846
    %v2311 = vtanh.pop %v2309
    %v2312 = vtanh.pop %v2310
    %v2313 = vadd.f32 %v2311, 1.0
    %v2314 = vadd.f32 %v2312, 1.0
    %v2315 = vmul.f32 %v2299, %v2313
    %v2316 = vmul.f32 %v2300, %v2314
    %v2317 = vld [vmem:[%s11] sm:$0xff]
    %v2318 = vld [vmem:[%s11 + $0x8] sm:$0xff]
    %v2319 = vld [vmem:[%s11 + $0x10] sm:$0xff]
    %v2320 = vld [vmem:[%s11 + $0x18] sm:$0xff]
    %v2321 = vld [vmem:[%s11 + $0x20] sm:$0xff]
    %v2322 = vld [vmem:[%s11 + $0x28] sm:$0xff]
    %v2323 = vld [vmem:[%s11 + $0x30] sm:$0xff]
    %v2324 = vld [vmem:[%s11 + $0x38] sm:$0xff]
    %v2325 = vld [vmem:[%s12] sm:$0x1]
    %v2327 = vlaneseq
    %v2328 = vshrl.u32 %v2327, 7
    %v2329 = vsub.s32 0, %v2328
    %v2330 = vrot.slane %v2325, %v2329
    %vm2332 = vcmask 523264
    %v2334 = vsel %vm2332, %v2315, 0
    %v2337 = vsel %vm2332, %v2316, 0
    %2339 = vmatprep.subr.mxu0 0.0
    %2340 = vmatpush1.msra.mxu0 %v2317
    %2341 = vmatprep.subr.mxu0 0.0
    %2342 = vmatpush1.msra.mxu0 %v2318
    %2343 = vmatprep.subr.mxu0 0.0
    %2344 = vmatpush1.msra.mxu0 %v2319
    %2345 = vmatprep.subr.mxu0 0.0
    %2346 = vmatpush1.msra.mxu0 %v2320
    %2347 = vmatprep.subr.mxu0 0.0
    %2348 = vmatpush1.msra.mxu0 %v2321
    %2349 = vmatprep.subr.mxu0 0.0
    %2350 = vmatpush1.msra.mxu0 %v2322
    %2351 = vmatprep.subr.mxu0 0.0
    %2352 = vmatpush1.msra.mxu0 %v2323
    %2353 = vmatprep.subr.mxu0 0.0
    %2354 = vmatpush1.msra.mxu0 %v2324
    %2355 = vmatprep.subr.mxu0 0.0
    %2356 = vmatpush1.msra.mxu0 0.0
    %2357 = vmatprep.subr.mxu0 0.0
    %2358 = vmatpush1.msra.mxu0 0.0
    %2359 = vmatprep.subr.mxu0 0.0
    %2360 = vmatpush1.msra.mxu0 0.0
    %2361 = vmatprep.subr.mxu0 0.0
    %2362 = vmatpush1.msra.mxu0 0.0
    %2363 = vmatprep.subr.mxu0 0.0
    %2364 = vmatpush1.msra.mxu0 0.0
    %2365 = vmatprep.subr.mxu0 0.0
    %2366 = vmatpush1.msra.mxu0 0.0
    %2367 = vmatprep.subr.mxu0 0.0
    %2368 = vmatpush1.msra.mxu0 0.0
    %2369 = vmatprep.subr.mxu0 0.0
    %2370 = vmatpush1.msra.mxu0 0.0
    %2371 = vmatprep.subr.mxu0 0.0
    %2372 = vmatpush1.msra.mxu0 0.0
    %2373 = vmatprep.subr.mxu0 0.0
    %2374 = vmatpush1.msra.mxu0 0.0
    %2375 = vmatprep.subr.mxu0 0.0
    %2376 = vmatpush1.msra.mxu0 0.0
    %2377 = vmatprep.subr.mxu0 0.0
    %2378 = vmatpush1.msra.mxu0 0.0
    %2379 = vmatprep.subr.mxu0 0.0
    %2380 = vmatpush1.msra.mxu0 0.0
    %2381 = vmatprep.subr.mxu0 0.0
    %2382 = vmatpush1.msra.mxu0 0.0
    %2383 = vmatprep.subr.mxu0 0.0
    %2384 = vmatpush1.msra.mxu0 0.0
    %2385 = vmatprep.subr.mxu0 0.0
    %2386 = vmatpush1.msra.mxu0 0.0
    %2387 = vmatprep.subr.mxu0 0.0
    %2388 = vmatpush1.msra.mxu0 0.0
    %2389 = vmatprep.subr.mxu0 0.0
    %2390 = vmatpush1.msra.mxu0 0.0
    %2391 = vmatprep.subr.mxu0 0.0
    %2392 = vmatpush1.msra.mxu0 0.0
    %2393 = vmatprep.subr.mxu0 0.0
    %2394 = vmatpush1.msra.mxu0 0.0
    %2395 = vmatprep.subr.mxu0 0.0
    %2396 = vmatpush1.msra.mxu0 0.0
    %2397 = vmatprep.subr.mxu0 0.0
    %2398 = vmatpush1.msra.mxu0 0.0
    %2399 = vmatprep.subr.mxu0 0.0
    %2400 = vmatpush1.msra.mxu0 0.0
    %2401 = vmatprep.subr.mxu0 0.0
    %2402 = vmatpush1.msra.mxu0 0.0
    %2403 = vmatprep.mubr.f32.mxu0 0.0
    %2404 = vmatmul.mubr.f32.gmra.mrb[0].mxu0 %v2334
    %v2405 = vpop.f32.mrb[0].mxu0
    %v2406 = vadd.f32 %v2330, %v2405
    %v2407 = vpop.f32.mrb[0].mxu0
    %2408 = vmatprep.mubr.f32.mxu0 0.0
    %2409 = vmatmul.mubr.f32.gmra.mrb[0].mxu0 %v2337
    %v2410 = vpop.f32.mrb[0].mxu0
    %v2411 = vadd.f32 %v2330, %v2410
    %v2412 = vpop.f32.mrb[0].mxu0
    %2413 = vdwg.mxu0
    %v2414 = vadd.f32 %v2161, %v2406
    %v2415 = vadd.f32 %v2162, %v2411
    %s2416 = scalar_lea.vmem %s2, 1
    %v2417 = vld [vmem:[%s2416] sm:$0x1]
    %s2418 = scalar_lea.vmem %s3, 1
    %v2419 = vld [vmem:[%s2418] sm:$0x1]
    %v2420 = vsel %vm80, %v2414, 0.0
    %2421 = vadd.xlane.f32.xlu0 %v2420
    %v2422 = vpop.xlane.xlu0 %2421
    %v2423 = vsel %vm80, %v2415, 0.0
    %2424 = vadd.xlane.f32.xlu0 %v2423
    %v2425 = vpop.xlane.xlu0 %2424
    %v2426 = vmul.f32 %v2422, 0.03125
    %v2427 = vmul.f32 %v2425, 0.03125
    %v2428 = vsub.f32 %v2414, %v2426
    %v2429 = vsub.f32 %v2415, %v2427
    %v2430 = vmul.f32 %v2428, %v2428
    %v2431 = vmul.f32 %v2429, %v2429
    %v2432 = vsel %vm80, %v2430, 0.0
    %2433 = vadd.xlane.f32.xlu0 %v2432
    %v2434 = vpop.xlane.xlu0 %2433
    %v2435 = vsel %vm80, %v2431, 0.0
    %2436 = vadd.xlane.f32.xlu0 %v2435
    %v2437 = vpop.xlane.xlu0 %2436
    %v2438 = vmul.f32 %v2434, 0.03125
    %v2439 = vmul.f32 %v2437, 0.03125
    %v2440 = vadd.f32 %v2438, 1e-05
    %v2441 = vadd.f32 %v2439, 1e-05
    %v2442 = vrsqrt.pop %v2440
    %v2443 = vrsqrt.pop %v2441
    %v2444 = vmul.f32 %v2428, %v2442
    %v2445 = vmul.f32 %v2429, %v2443
    %v2447 = vlaneseq
    %v2448 = vshrl.u32 %v2447, 7
    %v2449 = vsub.s32 0, %v2448
    %v2450 = vrot.slane %v2417, %v2449
    %v2452 = vmul.f32 %v2444, %v2450
    %v2453 = vmul.f32 %v2445, %v2450
    %v2455 = vlaneseq
    %v2456 = vshrl.u32 %v2455, 7
    %v2457 = vsub.s32 0, %v2456
    %v2458 = vrot.slane %v2419, %v2457
    %v2460 = vadd.f32 %v2452, %v2458
    %v2461 = vadd.f32 %v2453, %v2458
    %s2462 = scalar_lea.vmem %s4, 64
    %v2463 = vld [vmem:[%s2462] sm:$0xff]
    %v2464 = vld [vmem:[%s2462 + $0x8] sm:$0xff]
    %v2465 = vld [vmem:[%s2462 + $0x10] sm:$0xff]
    %v2466 = vld [vmem:[%s2462 + $0x18] sm:$0xff]
    %v2467 = vld [vmem:[%s2462 + $0x20] sm:$0xff]
    %v2468 = vld [vmem:[%s2462 + $0x28] sm:$0xff]
    %v2469 = vld [vmem:[%s2462 + $0x30] sm:$0xff]
    %v2470 = vld [vmem:[%s2462 + $0x38] sm:$0xff]
    %v2472 = vsel %vm80, %v2460, 0
    %v2475 = vsel %vm80, %v2461, 0
    %2477 = vmatprep.subr.mxu0 %v2464
    %2478 = vmatpush1.msra.mxu0 %v2463
    %2479 = vmatprep.subr.mxu0 %v2466
    %2480 = vmatpush1.msra.mxu0 %v2465
    %2481 = vmatprep.subr.mxu0 %v2468
    %2482 = vmatpush1.msra.mxu0 %v2467
    %2483 = vmatprep.subr.mxu0 %v2470
    %2484 = vmatpush1.msra.mxu0 %v2469
    %2485 = vmatprep.subr.mxu0 0.0
    %2486 = vmatpush1.msra.mxu0 0.0
    %2487 = vmatprep.subr.mxu0 0.0
    %2488 = vmatpush1.msra.mxu0 0.0
    %2489 = vmatprep.subr.mxu0 0.0
    %2490 = vmatpush1.msra.mxu0 0.0
    %2491 = vmatprep.subr.mxu0 0.0
    %2492 = vmatpush1.msra.mxu0 0.0
    %2493 = vmatprep.subr.mxu0 0.0
    %2494 = vmatpush1.msra.mxu0 0.0
    %2495 = vmatprep.subr.mxu0 0.0
    %2496 = vmatpush1.msra.mxu0 0.0
    %2497 = vmatprep.subr.mxu0 0.0
    %2498 = vmatpush1.msra.mxu0 0.0
    %2499 = vmatprep.subr.mxu0 0.0
    %2500 = vmatpush1.msra.mxu0 0.0
    %2501 = vmatprep.subr.mxu0 0.0
    %2502 = vmatpush1.msra.mxu0 0.0
    %2503 = vmatprep.subr.mxu0 0.0
    %2504 = vmatpush1.msra.mxu0 0.0
    %2505 = vmatprep.subr.mxu0 0.0
    %2506 = vmatpush1.msra.mxu0 0.0
    %2507 = vmatprep.subr.mxu0 0.0
    %2508 = vmatpush1.msra.mxu0 0.0
    %2509 = vmatprep.subr.mxu0 0.0
    %2510 = vmatpush1.msra.mxu0 0.0
    %2511 = vmatprep.subr.mxu0 0.0
    %2512 = vmatpush1.msra.mxu0 0.0
    %2513 = vmatprep.subr.mxu0 0.0
    %2514 = vmatpush1.msra.mxu0 0.0
    %2515 = vmatprep.subr.mxu0 0.0
    %2516 = vmatpush1.msra.mxu0 0.0
    %2517 = vmatprep.subr.mxu0 0.0
    %2518 = vmatpush1.msra.mxu0 0.0
    %2519 = vmatprep.subr.mxu0 0.0
    %2520 = vmatpush1.msra.mxu0 0.0
    %2521 = vmatprep.subr.mxu0 0.0
    %2522 = vmatpush1.msra.mxu0 0.0
    %2523 = vmatprep.subr.mxu0 0.0
    %2524 = vmatpush1.msra.mxu0 0.0
    %2525 = vmatprep.subr.mxu0 0.0
    %2526 = vmatpush1.msra.mxu0 0.0
    %2527 = vmatprep.subr.mxu0 0.0
    %2528 = vmatpush1.msra.mxu0 0.0
    %2529 = vmatprep.subr.mxu0 0.0
    %2530 = vmatpush1.msra.mxu0 0.0
    %2531 = vmatprep.subr.mxu0 0.0
    %2532 = vmatpush1.msra.mxu0 0.0
    %2533 = vmatprep.subr.mxu0 0.0
    %2534 = vmatpush1.msra.mxu0 0.0
    %2535 = vmatprep.subr.mxu0 0.0
    %2536 = vmatpush1.msra.mxu0 0.0
    %2537 = vmatprep.subr.mxu0 0.0
    %2538 = vmatpush1.msra.mxu0 0.0
    %2539 = vmatprep.subr.mxu0 0.0
    %2540 = vmatpush1.msra.mxu0 0.0
    %2541 = vmatprep.mubr.f32.mxu0 0.0
    %2542 = vmatmul.mubr.f32.gmra.mrb[0].mxu0 %v2472
    %v2543 = vpop.f32.mrb[0].mxu0
    %v2544 = vadd.f32 0.0, %v2543
    %v2545 = vpop.f32.mrb[0].mxu0
    %v2546 = vadd.f32 0.0, %v2545
    %2547 = vmatprep.mubr.f32.mxu0 0.0
    %2548 = vmatmul.mubr.f32.gmra.mrb[0].mxu0 %v2475
    %v2549 = vpop.f32.mrb[0].mxu0
    %v2550 = vadd.f32 0.0, %v2549
    %v2551 = vpop.f32.mrb[0].mxu0
    %v2552 = vadd.f32 0.0, %v2551
    %2553 = vdwg.mxu0
    %2556 = vrot.lane.b32.xlu0 %v2544, 112
    %v2557 = vpop.permute.xlu0 %2556
    %2558 = vrot.lane.b32.xlu0 %v2550, 112
    %v2559 = vpop.permute.xlu0 %2558
    %2560 = vrot.lane.b32.xlu0 %v2544, 96
    %v2561 = vpop.permute.xlu0 %2560
    %2562 = vrot.lane.b32.xlu0 %v2550, 96
    %v2563 = vpop.permute.xlu0 %2562
    %2564 = vrot.lane.b32.xlu0 %v2544, 80
    %v2565 = vpop.permute.xlu0 %2564
    %2566 = vrot.lane.b32.xlu0 %v2550, 80
    %v2567 = vpop.permute.xlu0 %2566
    %2570 = vrot.lane.b32.xlu0 %v2546, 112
    %v2571 = vpop.permute.xlu0 %2570
    %2572 = vrot.lane.b32.xlu0 %v2552, 112
    %v2573 = vpop.permute.xlu0 %2572
    %2576 = vrot.lane.b32.xlu0 %v2546, 96
    %v2577 = vpop.permute.xlu0 %2576
    %2578 = vrot.lane.b32.xlu0 %v2552, 96
    %v2579 = vpop.permute.xlu0 %2578
    %2582 = vrot.lane.b32.xlu0 %v2546, 80
    %v2583 = vpop.permute.xlu0 %2582
    %2584 = vrot.lane.b32.xlu0 %v2552, 80
    %v2585 = vpop.permute.xlu0 %2584
    %2588 = vrot.lane.b32.xlu0 %v2544, 64
    %v2589 = vpop.permute.xlu0 %2588
    %v2590 = vsel %vm250, %v2544, 0
    %v2592 = vsel %vm250, %v2589, 0
    %2594 = vmatprep.subr.mxu0 0.0
    %2595 = vmatpush1.xpose.msra.mxu0 %v2592
    %2596 = vmatprep.subr.mxu0 0.0
    %2597 = vmatpush1.xpose.msra.mxu0 0.0
    %2598 = vmatprep.subr.mxu0 0.0
    %2599 = vmatpush1.xpose.msra.mxu0 0.0
    %2600 = vmatprep.subr.mxu0 0.0
    %2601 = vmatpush1.xpose.msra.mxu0 0.0
    %2602 = vmatprep.subr.mxu0 0.0
    %2603 = vmatpush1.xpose.msra.mxu0 0.0
    %2604 = vmatprep.subr.mxu0 0.0
    %2605 = vmatpush1.xpose.msra.mxu0 0.0
    %2606 = vmatprep.subr.mxu0 0.0
    %2607 = vmatpush1.xpose.msra.mxu0 0.0
    %2608 = vmatprep.subr.mxu0 0.0
    %2609 = vmatpush1.xpose.msra.mxu0 0.0
    %2610 = vmatprep.subr.mxu0 0.0
    %2611 = vmatpush1.xpose.msra.mxu0 0.0
    %2612 = vmatprep.subr.mxu0 0.0
    %2613 = vmatpush1.xpose.msra.mxu0 0.0
    %2614 = vmatprep.subr.mxu0 0.0
    %2615 = vmatpush1.xpose.msra.mxu0 0.0
    %2616 = vmatprep.subr.mxu0 0.0
    %2617 = vmatpush1.xpose.msra.mxu0 0.0
    %2618 = vmatprep.subr.mxu0 0.0
    %2619 = vmatpush1.xpose.msra.mxu0 0.0
    %2620 = vmatprep.subr.mxu0 0.0
    %2621 = vmatpush1.xpose.msra.mxu0 0.0
    %2622 = vmatprep.subr.mxu0 0.0
    %2623 = vmatpush1.xpose.msra.mxu0 0.0
    %2624 = vmatprep.subr.mxu0 0.0
    %2625 = vmatpush1.xpose.msra.mxu0 0.0
    %2626 = vmatprep.subr.mxu0 0.0
    %2627 = vmatpush1.xpose.msra.mxu0 0.0
    %2628 = vmatprep.subr.mxu0 0.0
    %2629 = vmatpush1.xpose.msra.mxu0 0.0
    %2630 = vmatprep.subr.mxu0 0.0
    %2631 = vmatpush1.xpose.msra.mxu0 0.0
    %2632 = vmatprep.subr.mxu0 0.0
    %2633 = vmatpush1.xpose.msra.mxu0 0.0
    %2634 = vmatprep.subr.mxu0 0.0
    %2635 = vmatpush1.xpose.msra.mxu0 0.0
    %2636 = vmatprep.subr.mxu0 0.0
    %2637 = vmatpush1.xpose.msra.mxu0 0.0
    %2638 = vmatprep.subr.mxu0 0.0
    %2639 = vmatpush1.xpose.msra.mxu0 0.0
    %2640 = vmatprep.subr.mxu0 0.0
    %2641 = vmatpush1.xpose.msra.mxu0 0.0
    %2642 = vmatprep.subr.mxu0 0.0
    %2643 = vmatpush1.xpose.msra.mxu0 0.0
    %2644 = vmatprep.subr.mxu0 0.0
    %2645 = vmatpush1.xpose.msra.mxu0 0.0
    %2646 = vmatprep.subr.mxu0 0.0
    %2647 = vmatpush1.xpose.msra.mxu0 0.0
    %2648 = vmatprep.subr.mxu0 0.0
    %2649 = vmatpush1.xpose.msra.mxu0 0.0
    %2650 = vmatprep.subr.mxu0 0.0
    %2651 = vmatpush1.xpose.msra.mxu0 0.0
    %2652 = vmatprep.subr.mxu0 0.0
    %2653 = vmatpush1.xpose.msra.mxu0 0.0
    %2654 = vmatprep.subr.mxu0 0.0
    %2655 = vmatpush1.xpose.msra.mxu0 0.0
    %2656 = vmatprep.subr.mxu0 0.0
    %2657 = vmatpush1.xpose.msra.mxu0 0.0
    %2658 = vmatprep.mubr.f32.mxu0 0.0
    %2659 = vmatmul.mubr.f32.gmra.mrb[0].mxu0 %v2590
    %v2660 = vpop.f32.mrb[0].mxu0
    %v2661 = vadd.f32 0.0, %v2660
    %v2662 = vpop.f32.mrb[0].mxu0
    %2663 = vdwg.mxu0
    %2664 = vrot.lane.b32.xlu0 %v2550, 64
    %v2665 = vpop.permute.xlu0 %2664
    %v2666 = vsel %vm250, %v2550, 0
    %v2668 = vsel %vm250, %v2665, 0
    %2670 = vmatprep.subr.mxu0 0.0
    %2671 = vmatpush1.xpose.msra.mxu0 %v2668
    %2672 = vmatprep.subr.mxu0 0.0
    %2673 = vmatpush1.xpose.msra.mxu0 0.0
    %2674 = vmatprep.subr.mxu0 0.0
    %2675 = vmatpush1.xpose.msra.mxu0 0.0
    %2676 = vmatprep.subr.mxu0 0.0
    %2677 = vmatpush1.xpose.msra.mxu0 0.0
    %2678 = vmatprep.subr.mxu0 0.0
    %2679 = vmatpush1.xpose.msra.mxu0 0.0
    %2680 = vmatprep.subr.mxu0 0.0
    %2681 = vmatpush1.xpose.msra.mxu0 0.0
    %2682 = vmatprep.subr.mxu0 0.0
    %2683 = vmatpush1.xpose.msra.mxu0 0.0
    %2684 = vmatprep.subr.mxu0 0.0
    %2685 = vmatpush1.xpose.msra.mxu0 0.0
    %2686 = vmatprep.subr.mxu0 0.0
    %2687 = vmatpush1.xpose.msra.mxu0 0.0
    %2688 = vmatprep.subr.mxu0 0.0
    %2689 = vmatpush1.xpose.msra.mxu0 0.0
    %2690 = vmatprep.subr.mxu0 0.0
    %2691 = vmatpush1.xpose.msra.mxu0 0.0
    %2692 = vmatprep.subr.mxu0 0.0
    %2693 = vmatpush1.xpose.msra.mxu0 0.0
    %2694 = vmatprep.subr.mxu0 0.0
    %2695 = vmatpush1.xpose.msra.mxu0 0.0
    %2696 = vmatprep.subr.mxu0 0.0
    %2697 = vmatpush1.xpose.msra.mxu0 0.0
    %2698 = vmatprep.subr.mxu0 0.0
    %2699 = vmatpush1.xpose.msra.mxu0 0.0
    %2700 = vmatprep.subr.mxu0 0.0
    %2701 = vmatpush1.xpose.msra.mxu0 0.0
    %2702 = vmatprep.subr.mxu0 0.0
    %2703 = vmatpush1.xpose.msra.mxu0 0.0
    %2704 = vmatprep.subr.mxu0 0.0
    %2705 = vmatpush1.xpose.msra.mxu0 0.0
    %2706 = vmatprep.subr.mxu0 0.0
    %2707 = vmatpush1.xpose.msra.mxu0 0.0
    %2708 = vmatprep.subr.mxu0 0.0
    %2709 = vmatpush1.xpose.msra.mxu0 0.0
    %2710 = vmatprep.subr.mxu0 0.0
    %2711 = vmatpush1.xpose.msra.mxu0 0.0
    %2712 = vmatprep.subr.mxu0 0.0
    %2713 = vmatpush1.xpose.msra.mxu0 0.0
    %2714 = vmatprep.subr.mxu0 0.0
    %2715 = vmatpush1.xpose.msra.mxu0 0.0
    %2716 = vmatprep.subr.mxu0 0.0
    %2717 = vmatpush1.xpose.msra.mxu0 0.0
    %2718 = vmatprep.subr.mxu0 0.0
    %2719 = vmatpush1.xpose.msra.mxu0 0.0
    %2720 = vmatprep.subr.mxu0 0.0
    %2721 = vmatpush1.xpose.msra.mxu0 0.0
    %2722 = vmatprep.subr.mxu0 0.0
    %2723 = vmatpush1.xpose.msra.mxu0 0.0
    %2724 = vmatprep.subr.mxu0 0.0
    %2725 = vmatpush1.xpose.msra.mxu0 0.0
    %2726 = vmatprep.subr.mxu0 0.0
    %2727 = vmatpush1.xpose.msra.mxu0 0.0
    %2728 = vmatprep.subr.mxu0 0.0
    %2729 = vmatpush1.xpose.msra.mxu0 0.0
    %2730 = vmatprep.subr.mxu0 0.0
    %2731 = vmatpush1.xpose.msra.mxu0 0.0
    %2732 = vmatprep.subr.mxu0 0.0
    %2733 = vmatpush1.xpose.msra.mxu0 0.0
    %2734 = vmatprep.mubr.f32.mxu0 0.0
    %2735 = vmatmul.mubr.f32.gmra.mrb[0].mxu0 %v2666
    %v2736 = vpop.f32.mrb[0].mxu0
    %v2737 = vadd.f32 0.0, %v2736
    %v2738 = vpop.f32.mrb[0].mxu0
    %2739 = vdwg.mxu0
    %2740 = vrot.lane.b32.xlu0 %v2557, 64
    %v2741 = vpop.permute.xlu0 %2740
    %v2742 = vsel %vm250, %v2557, 0
    %v2744 = vsel %vm250, %v2741, 0
    %2746 = vmatprep.subr.mxu0 0.0
    %2747 = vmatpush1.xpose.msra.mxu0 %v2744
    %2748 = vmatprep.subr.mxu0 0.0
    %2749 = vmatpush1.xpose.msra.mxu0 0.0
    %2750 = vmatprep.subr.mxu0 0.0
    %2751 = vmatpush1.xpose.msra.mxu0 0.0
    %2752 = vmatprep.subr.mxu0 0.0
    %2753 = vmatpush1.xpose.msra.mxu0 0.0
    %2754 = vmatprep.subr.mxu0 0.0
    %2755 = vmatpush1.xpose.msra.mxu0 0.0
    %2756 = vmatprep.subr.mxu0 0.0
    %2757 = vmatpush1.xpose.msra.mxu0 0.0
    %2758 = vmatprep.subr.mxu0 0.0
    %2759 = vmatpush1.xpose.msra.mxu0 0.0
    %2760 = vmatprep.subr.mxu0 0.0
    %2761 = vmatpush1.xpose.msra.mxu0 0.0
    %2762 = vmatprep.subr.mxu0 0.0
    %2763 = vmatpush1.xpose.msra.mxu0 0.0
    %2764 = vmatprep.subr.mxu0 0.0
    %2765 = vmatpush1.xpose.msra.mxu0 0.0
    %2766 = vmatprep.subr.mxu0 0.0
    %2767 = vmatpush1.xpose.msra.mxu0 0.0
    %2768 = vmatprep.subr.mxu0 0.0
    %2769 = vmatpush1.xpose.msra.mxu0 0.0
    %2770 = vmatprep.subr.mxu0 0.0
    %2771 = vmatpush1.xpose.msra.mxu0 0.0
    %2772 = vmatprep.subr.mxu0 0.0
    %2773 = vmatpush1.xpose.msra.mxu0 0.0
    %2774 = vmatprep.subr.mxu0 0.0
    %2775 = vmatpush1.xpose.msra.mxu0 0.0
    %2776 = vmatprep.subr.mxu0 0.0
    %2777 = vmatpush1.xpose.msra.mxu0 0.0
    %2778 = vmatprep.subr.mxu0 0.0
    %2779 = vmatpush1.xpose.msra.mxu0 0.0
    %2780 = vmatprep.subr.mxu0 0.0
    %2781 = vmatpush1.xpose.msra.mxu0 0.0
    %2782 = vmatprep.subr.mxu0 0.0
    %2783 = vmatpush1.xpose.msra.mxu0 0.0
    %2784 = vmatprep.subr.mxu0 0.0
    %2785 = vmatpush1.xpose.msra.mxu0 0.0
    %2786 = vmatprep.subr.mxu0 0.0
    %2787 = vmatpush1.xpose.msra.mxu0 0.0
    %2788 = vmatprep.subr.mxu0 0.0
    %2789 = vmatpush1.xpose.msra.mxu0 0.0
    %2790 = vmatprep.subr.mxu0 0.0
    %2791 = vmatpush1.xpose.msra.mxu0 0.0
    %2792 = vmatprep.subr.mxu0 0.0
    %2793 = vmatpush1.xpose.msra.mxu0 0.0
    %2794 = vmatprep.subr.mxu0 0.0
    %2795 = vmatpush1.xpose.msra.mxu0 0.0
    %2796 = vmatprep.subr.mxu0 0.0
    %2797 = vmatpush1.xpose.msra.mxu0 0.0
    %2798 = vmatprep.subr.mxu0 0.0
    %2799 = vmatpush1.xpose.msra.mxu0 0.0
    %2800 = vmatprep.subr.mxu0 0.0
    %2801 = vmatpush1.xpose.msra.mxu0 0.0
    %2802 = vmatprep.subr.mxu0 0.0
    %2803 = vmatpush1.xpose.msra.mxu0 0.0
    %2804 = vmatprep.subr.mxu0 0.0
    %2805 = vmatpush1.xpose.msra.mxu0 0.0
    %2806 = vmatprep.subr.mxu0 0.0
    %2807 = vmatpush1.xpose.msra.mxu0 0.0
    %2808 = vmatprep.subr.mxu0 0.0
    %2809 = vmatpush1.xpose.msra.mxu0 0.0
    %2810 = vmatprep.mubr.f32.mxu0 0.0
    %2811 = vmatmul.mubr.f32.gmra.mrb[0].mxu0 %v2742
    %v2812 = vpop.f32.mrb[0].mxu0
    %v2813 = vadd.f32 0.0, %v2812
    %v2814 = vpop.f32.mrb[0].mxu0
    %2815 = vdwg.mxu0
    %2816 = vrot.lane.b32.xlu0 %v2559, 64
    %v2817 = vpop.permute.xlu0 %2816
    %v2818 = vsel %vm250, %v2559, 0
    %v2820 = vsel %vm250, %v2817, 0
    %2822 = vmatprep.subr.mxu0 0.0
    %2823 = vmatpush1.xpose.msra.mxu0 %v2820
    %2824 = vmatprep.subr.mxu0 0.0
    %2825 = vmatpush1.xpose.msra.mxu0 0.0
    %2826 = vmatprep.subr.mxu0 0.0
    %2827 = vmatpush1.xpose.msra.mxu0 0.0
    %2828 = vmatprep.subr.mxu0 0.0
    %2829 = vmatpush1.xpose.msra.mxu0 0.0
    %2830 = vmatprep.subr.mxu0 0.0
    %2831 = vmatpush1.xpose.msra.mxu0 0.0
    %2832 = vmatprep.subr.mxu0 0.0
    %2833 = vmatpush1.xpose.msra.mxu0 0.0
    %2834 = vmatprep.subr.mxu0 0.0
    %2835 = vmatpush1.xpose.msra.mxu0 0.0
    %2836 = vmatprep.subr.mxu0 0.0
    %2837 = vmatpush1.xpose.msra.mxu0 0.0
    %2838 = vmatprep.subr.mxu0 0.0
    %2839 = vmatpush1.xpose.msra.mxu0 0.0
    %2840 = vmatprep.subr.mxu0 0.0
    %2841 = vmatpush1.xpose.msra.mxu0 0.0
    %2842 = vmatprep.subr.mxu0 0.0
    %2843 = vmatpush1.xpose.msra.mxu0 0.0
    %2844 = vmatprep.subr.mxu0 0.0
    %2845 = vmatpush1.xpose.msra.mxu0 0.0
    %2846 = vmatprep.subr.mxu0 0.0
    %2847 = vmatpush1.xpose.msra.mxu0 0.0
    %2848 = vmatprep.subr.mxu0 0.0
    %2849 = vmatpush1.xpose.msra.mxu0 0.0
    %2850 = vmatprep.subr.mxu0 0.0
    %2851 = vmatpush1.xpose.msra.mxu0 0.0
    %2852 = vmatprep.subr.mxu0 0.0
    %2853 = vmatpush1.xpose.msra.mxu0 0.0
    %2854 = vmatprep.subr.mxu0 0.0
    %2855 = vmatpush1.xpose.msra.mxu0 0.0
    %2856 = vmatprep.subr.mxu0 0.0
    %2857 = vmatpush1.xpose.msra.mxu0 0.0
    %2858 = vmatprep.subr.mxu0 0.0
    %2859 = vmatpush1.xpose.msra.mxu0 0.0
    %2860 = vmatprep.subr.mxu0 0.0
    %2861 = vmatpush1.xpose.msra.mxu0 0.0
    %2862 = vmatprep.subr.mxu0 0.0
    %2863 = vmatpush1.xpose.msra.mxu0 0.0
    %2864 = vmatprep.subr.mxu0 0.0
    %2865 = vmatpush1.xpose.msra.mxu0 0.0
    %2866 = vmatprep.subr.mxu0 0.0
    %2867 = vmatpush1.xpose.msra.mxu0 0.0
    %2868 = vmatprep.subr.mxu0 0.0
    %2869 = vmatpush1.xpose.msra.mxu0 0.0
    %2870 = vmatprep.subr.mxu0 0.0
    %2871 = vmatpush1.xpose.msra.mxu0 0.0
    %2872 = vmatprep.subr.mxu0 0.0
    %2873 = vmatpush1.xpose.msra.mxu0 0.0
    %2874 = vmatprep.subr.mxu0 0.0
    %2875 = vmatpush1.xpose.msra.mxu0 0.0
    %2876 = vmatprep.subr.mxu0 0.0
    %2877 = vmatpush1.xpose.msra.mxu0 0.0
    %2878 = vmatprep.subr.mxu0 0.0
    %2879 = vmatpush1.xpose.msra.mxu0 0.0
    %2880 = vmatprep.subr.mxu0 0.0
    %2881 = vmatpush1.xpose.msra.mxu0 0.0
    %2882 = vmatprep.subr.mxu0 0.0
    %2883 = vmatpush1.xpose.msra.mxu0 0.0
    %2884 = vmatprep.subr.mxu0 0.0
    %2885 = vmatpush1.xpose.msra.mxu0 0.0
    %2886 = vmatprep.mubr.f32.mxu0 0.0
    %2887 = vmatmul.mubr.f32.gmra.mrb[0].mxu0 %v2818
    %v2888 = vpop.f32.mrb[0].mxu0
    %v2889 = vadd.f32 0.0, %v2888
    %v2890 = vpop.f32.mrb[0].mxu0
    %2891 = vdwg.mxu0
    %2892 = vrot.lane.b32.xlu0 %v2561, 64
    %v2893 = vpop.permute.xlu0 %2892
    %v2894 = vsel %vm250, %v2561, 0
    %v2896 = vsel %vm250, %v2893, 0
    %2898 = vmatprep.subr.mxu0 0.0
    %2899 = vmatpush1.xpose.msra.mxu0 %v2896
    %2900 = vmatprep.subr.mxu0 0.0
    %2901 = vmatpush1.xpose.msra.mxu0 0.0
    %2902 = vmatprep.subr.mxu0 0.0
    %2903 = vmatpush1.xpose.msra.mxu0 0.0
    %2904 = vmatprep.subr.mxu0 0.0
    %2905 = vmatpush1.xpose.msra.mxu0 0.0
    %2906 = vmatprep.subr.mxu0 0.0
    %2907 = vmatpush1.xpose.msra.mxu0 0.0
    %2908 = vmatprep.subr.mxu0 0.0
    %2909 = vmatpush1.xpose.msra.mxu0 0.0
    %2910 = vmatprep.subr.mxu0 0.0
    %2911 = vmatpush1.xpose.msra.mxu0 0.0
    %2912 = vmatprep.subr.mxu0 0.0
    %2913 = vmatpush1.xpose.msra.mxu0 0.0
    %2914 = vmatprep.subr.mxu0 0.0
    %2915 = vmatpush1.xpose.msra.mxu0 0.0
    %2916 = vmatprep.subr.mxu0 0.0
    %2917 = vmatpush1.xpose.msra.mxu0 0.0
    %2918 = vmatprep.subr.mxu0 0.0
    %2919 = vmatpush1.xpose.msra.mxu0 0.0
    %2920 = vmatprep.subr.mxu0 0.0
    %2921 = vmatpush1.xpose.msra.mxu0 0.0
    %2922 = vmatprep.subr.mxu0 0.0
    %2923 = vmatpush1.xpose.msra.mxu0 0.0
    %2924 = vmatprep.subr.mxu0 0.0
    %2925 = vmatpush1.xpose.msra.mxu0 0.0
    %2926 = vmatprep.subr.mxu0 0.0
    %2927 = vmatpush1.xpose.msra.mxu0 0.0
    %2928 = vmatprep.subr.mxu0 0.0
    %2929 = vmatpush1.xpose.msra.mxu0 0.0
    %2930 = vmatprep.subr.mxu0 0.0
    %2931 = vmatpush1.xpose.msra.mxu0 0.0
    %2932 = vmatprep.subr.mxu0 0.0
    %2933 = vmatpush1.xpose.msra.mxu0 0.0
    %2934 = vmatprep.subr.mxu0 0.0
    %2935 = vmatpush1.xpose.msra.mxu0 0.0
    %2936 = vmatprep.subr.mxu0 0.0
    %2937 = vmatpush1.xpose.msra.mxu0 0.0
    %2938 = vmatprep.subr.mxu0 0.0
    %2939 = vmatpush1.xpose.msra.mxu0 0.0
    %2940 = vmatprep.subr.mxu0 0.0
    %2941 = vmatpush1.xpose.msra.mxu0 0.0
    %2942 = vmatprep.subr.mxu0 0.0
    %2943 = vmatpush1.xpose.msra.mxu0 0.0
    %2944 = vmatprep.subr.mxu0 0.0
    %2945 = vmatpush1.xpose.msra.mxu0 0.0
    %2946 = vmatprep.subr.mxu0 0.0
    %2947 = vmatpush1.xpose.msra.mxu0 0.0
    %2948 = vmatprep.subr.mxu0 0.0
    %2949 = vmatpush1.xpose.msra.mxu0 0.0
    %2950 = vmatprep.subr.mxu0 0.0
    %2951 = vmatpush1.xpose.msra.mxu0 0.0
    %2952 = vmatprep.subr.mxu0 0.0
    %2953 = vmatpush1.xpose.msra.mxu0 0.0
    %2954 = vmatprep.subr.mxu0 0.0
    %2955 = vmatpush1.xpose.msra.mxu0 0.0
    %2956 = vmatprep.subr.mxu0 0.0
    %2957 = vmatpush1.xpose.msra.mxu0 0.0
    %2958 = vmatprep.subr.mxu0 0.0
    %2959 = vmatpush1.xpose.msra.mxu0 0.0
    %2960 = vmatprep.subr.mxu0 0.0
    %2961 = vmatpush1.xpose.msra.mxu0 0.0
    %2962 = vmatprep.mubr.f32.mxu0 0.0
    %2963 = vmatmul.mubr.f32.gmra.mrb[0].mxu0 %v2894
    %v2964 = vpop.f32.mrb[0].mxu0
    %v2965 = vadd.f32 0.0, %v2964
    %v2966 = vpop.f32.mrb[0].mxu0
    %2967 = vdwg.mxu0
    %2968 = vrot.lane.b32.xlu0 %v2563, 64
    %v2969 = vpop.permute.xlu0 %2968
    %v2970 = vsel %vm250, %v2563, 0
    %v2972 = vsel %vm250, %v2969, 0
    %2974 = vmatprep.subr.mxu0 0.0
    %2975 = vmatpush1.xpose.msra.mxu0 %v2972
    %2976 = vmatprep.subr.mxu0 0.0
    %2977 = vmatpush1.xpose.msra.mxu0 0.0
    %2978 = vmatprep.subr.mxu0 0.0
    %2979 = vmatpush1.xpose.msra.mxu0 0.0
    %2980 = vmatprep.subr.mxu0 0.0
    %2981 = vmatpush1.xpose.msra.mxu0 0.0
    %2982 = vmatprep.subr.mxu0 0.0
    %2983 = vmatpush1.xpose.msra.mxu0 0.0
    %2984 = vmatprep.subr.mxu0 0.0
    %2985 = vmatpush1.xpose.msra.mxu0 0.0
    %2986 = vmatprep.subr.mxu0 0.0
    %2987 = vmatpush1.xpose.msra.mxu0 0.0
    %2988 = vmatprep.subr.mxu0 0.0
    %2989 = vmatpush1.xpose.msra.mxu0 0.0
    %2990 = vmatprep.subr.mxu0 0.0
    %2991 = vmatpush1.xpose.msra.mxu0 0.0
    %2992 = vmatprep.subr.mxu0 0.0
    %2993 = vmatpush1.xpose.msra.mxu0 0.0
    %2994 = vmatprep.subr.mxu0 0.0
    %2995 = vmatpush1.xpose.msra.mxu0 0.0
    %2996 = vmatprep.subr.mxu0 0.0
    %2997 = vmatpush1.xpose.msra.mxu0 0.0
    %2998 = vmatprep.subr.mxu0 0.0
    %2999 = vmatpush1.xpose.msra.mxu0 0.0
    %3000 = vmatprep.subr.mxu0 0.0
    %3001 = vmatpush1.xpose.msra.mxu0 0.0
    %3002 = vmatprep.subr.mxu0 0.0
    %3003 = vmatpush1.xpose.msra.mxu0 0.0
    %3004 = vmatprep.subr.mxu0 0.0
    %3005 = vmatpush1.xpose.msra.mxu0 0.0
    %3006 = vmatprep.subr.mxu0 0.0
    %3007 = vmatpush1.xpose.msra.mxu0 0.0
    %3008 = vmatprep.subr.mxu0 0.0
    %3009 = vmatpush1.xpose.msra.mxu0 0.0
    %3010 = vmatprep.subr.mxu0 0.0
    %3011 = vmatpush1.xpose.msra.mxu0 0.0
    %3012 = vmatprep.subr.mxu0 0.0
    %3013 = vmatpush1.xpose.msra.mxu0 0.0
    %3014 = vmatprep.subr.mxu0 0.0
    %3015 = vmatpush1.xpose.msra.mxu0 0.0
    %3016 = vmatprep.subr.mxu0 0.0
    %3017 = vmatpush1.xpose.msra.mxu0 0.0
    %3018 = vmatprep.subr.mxu0 0.0
    %3019 = vmatpush1.xpose.msra.mxu0 0.0
    %3020 = vmatprep.subr.mxu0 0.0
    %3021 = vmatpush1.xpose.msra.mxu0 0.0
    %3022 = vmatprep.subr.mxu0 0.0
    %3023 = vmatpush1.xpose.msra.mxu0 0.0
    %3024 = vmatprep.subr.mxu0 0.0
    %3025 = vmatpush1.xpose.msra.mxu0 0.0
    %3026 = vmatprep.subr.mxu0 0.0
    %3027 = vmatpush1.xpose.msra.mxu0 0.0
    %3028 = vmatprep.subr.mxu0 0.0
    %3029 = vmatpush1.xpose.msra.mxu0 0.0
    %3030 = vmatprep.subr.mxu0 0.0
    %3031 = vmatpush1.xpose.msra.mxu0 0.0
    %3032 = vmatprep.subr.mxu0 0.0
    %3033 = vmatpush1.xpose.msra.mxu0 0.0
    %3034 = vmatprep.subr.mxu0 0.0
    %3035 = vmatpush1.xpose.msra.mxu0 0.0
    %3036 = vmatprep.subr.mxu0 0.0
    %3037 = vmatpush1.xpose.msra.mxu0 0.0
    %3038 = vmatprep.mubr.f32.mxu0 0.0
    %3039 = vmatmul.mubr.f32.gmra.mrb[0].mxu0 %v2970
    %v3040 = vpop.f32.mrb[0].mxu0
    %v3041 = vadd.f32 0.0, %v3040
    %v3042 = vpop.f32.mrb[0].mxu0
    %3043 = vdwg.mxu0
    %3044 = vrot.lane.b32.xlu0 %v2565, 64
    %v3045 = vpop.permute.xlu0 %3044
    %v3046 = vsel %vm250, %v2565, 0
    %v3048 = vsel %vm250, %v3045, 0
    %3050 = vmatprep.subr.mxu0 0.0
    %3051 = vmatpush1.xpose.msra.mxu0 %v3048
    %3052 = vmatprep.subr.mxu0 0.0
    %3053 = vmatpush1.xpose.msra.mxu0 0.0
    %3054 = vmatprep.subr.mxu0 0.0
    %3055 = vmatpush1.xpose.msra.mxu0 0.0
    %3056 = vmatprep.subr.mxu0 0.0
    %3057 = vmatpush1.xpose.msra.mxu0 0.0
    %3058 = vmatprep.subr.mxu0 0.0
    %3059 = vmatpush1.xpose.msra.mxu0 0.0
    %3060 = vmatprep.subr.mxu0 0.0
    %3061 = vmatpush1.xpose.msra.mxu0 0.0
    %3062 = vmatprep.subr.mxu0 0.0
    %3063 = vmatpush1.xpose.msra.mxu0 0.0
    %3064 = vmatprep.subr.mxu0 0.0
    %3065 = vmatpush1.xpose.msra.mxu0 0.0
    %3066 = vmatprep.subr.mxu0 0.0
    %3067 = vmatpush1.xpose.msra.mxu0 0.0
    %3068 = vmatprep.subr.mxu0 0.0
    %3069 = vmatpush1.xpose.msra.mxu0 0.0
    %3070 = vmatprep.subr.mxu0 0.0
    %3071 = vmatpush1.xpose.msra.mxu0 0.0
    %3072 = vmatprep.subr.mxu0 0.0
    %3073 = vmatpush1.xpose.msra.mxu0 0.0
    %3074 = vmatprep.subr.mxu0 0.0
    %3075 = vmatpush1.xpose.msra.mxu0 0.0
    %3076 = vmatprep.subr.mxu0 0.0
    %3077 = vmatpush1.xpose.msra.mxu0 0.0
    %3078 = vmatprep.subr.mxu0 0.0
    %3079 = vmatpush1.xpose.msra.mxu0 0.0
    %3080 = vmatprep.subr.mxu0 0.0
    %3081 = vmatpush1.xpose.msra.mxu0 0.0
    %3082 = vmatprep.subr.mxu0 0.0
    %3083 = vmatpush1.xpose.msra.mxu0 0.0
    %3084 = vmatprep.subr.mxu0 0.0
    %3085 = vmatpush1.xpose.msra.mxu0 0.0
    %3086 = vmatprep.subr.mxu0 0.0
    %3087 = vmatpush1.xpose.msra.mxu0 0.0
    %3088 = vmatprep.subr.mxu0 0.0
    %3089 = vmatpush1.xpose.msra.mxu0 0.0
    %3090 = vmatprep.subr.mxu0 0.0
    %3091 = vmatpush1.xpose.msra.mxu0 0.0
    %3092 = vmatprep.subr.mxu0 0.0
    %3093 = vmatpush1.xpose.msra.mxu0 0.0
    %3094 = vmatprep.subr.mxu0 0.0
    %3095 = vmatpush1.xpose.msra.mxu0 0.0
    %3096 = vmatprep.subr.mxu0 0.0
    %3097 = vmatpush1.xpose.msra.mxu0 0.0
    %3098 = vmatprep.subr.mxu0 0.0
    %3099 = vmatpush1.xpose.msra.mxu0 0.0
    %3100 = vmatprep.subr.mxu0 0.0
    %3101 = vmatpush1.xpose.msra.mxu0 0.0
    %3102 = vmatprep.subr.mxu0 0.0
    %3103 = vmatpush1.xpose.msra.mxu0 0.0
    %3104 = vmatprep.subr.mxu0 0.0
    %3105 = vmatpush1.xpose.msra.mxu0 0.0
    %3106 = vmatprep.subr.mxu0 0.0
    %3107 = vmatpush1.xpose.msra.mxu0 0.0
    %3108 = vmatprep.subr.mxu0 0.0
    %3109 = vmatpush1.xpose.msra.mxu0 0.0
    %3110 = vmatprep.subr.mxu0 0.0
    %3111 = vmatpush1.xpose.msra.mxu0 0.0
    %3112 = vmatprep.subr.mxu0 0.0
    %3113 = vmatpush1.xpose.msra.mxu0 0.0
    %3114 = vmatprep.mubr.f32.mxu0 0.0
    %3115 = vmatmul.mubr.f32.gmra.mrb[0].mxu0 %v3046
    %v3116 = vpop.f32.mrb[0].mxu0
    %v3117 = vadd.f32 0.0, %v3116
    %v3118 = vpop.f32.mrb[0].mxu0
    %3119 = vdwg.mxu0
    %3120 = vrot.lane.b32.xlu0 %v2567, 64
    %v3121 = vpop.permute.xlu0 %3120
    %v3122 = vsel %vm250, %v2567, 0
    %v3124 = vsel %vm250, %v3121, 0
    %3126 = vmatprep.subr.mxu0 0.0
    %3127 = vmatpush1.xpose.msra.mxu0 %v3124
    %3128 = vmatprep.subr.mxu0 0.0
    %3129 = vmatpush1.xpose.msra.mxu0 0.0
    %3130 = vmatprep.subr.mxu0 0.0
    %3131 = vmatpush1.xpose.msra.mxu0 0.0
    %3132 = vmatprep.subr.mxu0 0.0
    %3133 = vmatpush1.xpose.msra.mxu0 0.0
    %3134 = vmatprep.subr.mxu0 0.0
    %3135 = vmatpush1.xpose.msra.mxu0 0.0
    %3136 = vmatprep.subr.mxu0 0.0
    %3137 = vmatpush1.xpose.msra.mxu0 0.0
    %3138 = vmatprep.subr.mxu0 0.0
    %3139 = vmatpush1.xpose.msra.mxu0 0.0
    %3140 = vmatprep.subr.mxu0 0.0
    %3141 = vmatpush1.xpose.msra.mxu0 0.0
    %3142 = vmatprep.subr.mxu0 0.0
    %3143 = vmatpush1.xpose.msra.mxu0 0.0
    %3144 = vmatprep.subr.mxu0 0.0
    %3145 = vmatpush1.xpose.msra.mxu0 0.0
    %3146 = vmatprep.subr.mxu0 0.0
    %3147 = vmatpush1.xpose.msra.mxu0 0.0
    %3148 = vmatprep.subr.mxu0 0.0
    %3149 = vmatpush1.xpose.msra.mxu0 0.0
    %3150 = vmatprep.subr.mxu0 0.0
    %3151 = vmatpush1.xpose.msra.mxu0 0.0
    %3152 = vmatprep.subr.mxu0 0.0
    %3153 = vmatpush1.xpose.msra.mxu0 0.0
    %3154 = vmatprep.subr.mxu0 0.0
    %3155 = vmatpush1.xpose.msra.mxu0 0.0
    %3156 = vmatprep.subr.mxu0 0.0
    %3157 = vmatpush1.xpose.msra.mxu0 0.0
    %3158 = vmatprep.subr.mxu0 0.0
    %3159 = vmatpush1.xpose.msra.mxu0 0.0
    %3160 = vmatprep.subr.mxu0 0.0
    %3161 = vmatpush1.xpose.msra.mxu0 0.0
    %3162 = vmatprep.subr.mxu0 0.0
    %3163 = vmatpush1.xpose.msra.mxu0 0.0
    %3164 = vmatprep.subr.mxu0 0.0
    %3165 = vmatpush1.xpose.msra.mxu0 0.0
    %3166 = vmatprep.subr.mxu0 0.0
    %3167 = vmatpush1.xpose.msra.mxu0 0.0
    %3168 = vmatprep.subr.mxu0 0.0
    %3169 = vmatpush1.xpose.msra.mxu0 0.0
    %3170 = vmatprep.subr.mxu0 0.0
    %3171 = vmatpush1.xpose.msra.mxu0 0.0
    %3172 = vmatprep.subr.mxu0 0.0
    %3173 = vmatpush1.xpose.msra.mxu0 0.0
    %3174 = vmatprep.subr.mxu0 0.0
    %3175 = vmatpush1.xpose.msra.mxu0 0.0
    %3176 = vmatprep.subr.mxu0 0.0
    %3177 = vmatpush1.xpose.msra.mxu0 0.0
    %3178 = vmatprep.subr.mxu0 0.0
    %3179 = vmatpush1.xpose.msra.mxu0 0.0
    %3180 = vmatprep.subr.mxu0 0.0
    %3181 = vmatpush1.xpose.msra.mxu0 0.0
    %3182 = vmatprep.subr.mxu0 0.0
    %3183 = vmatpush1.xpose.msra.mxu0 0.0
    %3184 = vmatprep.subr.mxu0 0.0
    %3185 = vmatpush1.xpose.msra.mxu0 0.0
    %3186 = vmatprep.subr.mxu0 0.0
    %3187 = vmatpush1.xpose.msra.mxu0 0.0
    %3188 = vmatprep.subr.mxu0 0.0
    %3189 = vmatpush1.xpose.msra.mxu0 0.0
    %3190 = vmatprep.mubr.f32.mxu0 0.0
    %3191 = vmatmul.mubr.f32.gmra.mrb[0].mxu0 %v3122
    %v3192 = vpop.f32.mrb[0].mxu0
    %v3193 = vadd.f32 0.0, %v3192
    %v3194 = vpop.f32.mrb[0].mxu0
    %3195 = vdwg.mxu0
    %v3196 = vmul.f32 %v2661, 0.25
    %v3197 = vmul.f32 %v2737, 0.25
    %v3198 = vmul.f32 %v2813, 0.25
    %v3199 = vmul.f32 %v2889, 0.25
    %v3200 = vmul.f32 %v2965, 0.25
    %v3201 = vmul.f32 %v3041, 0.25
    %v3202 = vmul.f32 %v3117, 0.25
    %v3203 = vmul.f32 %v3193, 0.25
    %v3204 = vsel %vm865, %v3196, -inf
    %3205 = vmax.xlane.f32.xlu0 %v3204
    %v3206 = vpop.xlane.xlu0 %3205
    %v3207 = vsel %vm865, %v3197, -inf
    %3208 = vmax.xlane.f32.xlu0 %v3207
    %v3209 = vpop.xlane.xlu0 %3208
    %v3210 = vsel %vm865, %v3198, -inf
    %3211 = vmax.xlane.f32.xlu0 %v3210
    %v3212 = vpop.xlane.xlu0 %3211
    %v3213 = vsel %vm865, %v3199, -inf
    %3214 = vmax.xlane.f32.xlu0 %v3213
    %v3215 = vpop.xlane.xlu0 %3214
    %v3216 = vsel %vm865, %v3200, -inf
    %3217 = vmax.xlane.f32.xlu0 %v3216
    %v3218 = vpop.xlane.xlu0 %3217
    %v3219 = vsel %vm865, %v3201, -inf
    %3220 = vmax.xlane.f32.xlu0 %v3219
    %v3221 = vpop.xlane.xlu0 %3220
    %v3222 = vsel %vm865, %v3202, -inf
    %3223 = vmax.xlane.f32.xlu0 %v3222
    %v3224 = vpop.xlane.xlu0 %3223
    %v3225 = vsel %vm865, %v3203, -inf
    %3226 = vmax.xlane.f32.xlu0 %v3225
    %v3227 = vpop.xlane.xlu0 %3226
    %v3228 = vsub.f32 %v3196, %v3206
    %v3229 = vsub.f32 %v3197, %v3209
    %v3230 = vsub.f32 %v3198, %v3212
    %v3231 = vsub.f32 %v3199, %v3215
    %v3232 = vsub.f32 %v3200, %v3218
    %v3233 = vsub.f32 %v3201, %v3221
    %v3234 = vsub.f32 %v3202, %v3224
    %v3235 = vsub.f32 %v3203, %v3227
    %v3236 = vmul.f32 %v3228, 1.442695
    %v3237 = vpow.pop %v3236
    %v3238 = vmul.f32 %v3229, 1.442695
    %v3239 = vpow.pop %v3238
    %v3240 = vmul.f32 %v3230, 1.442695
    %v3241 = vpow.pop %v3240
    %v3242 = vmul.f32 %v3231, 1.442695
    %v3243 = vpow.pop %v3242
    %v3244 = vmul.f32 %v3232, 1.442695
    %v3245 = vpow.pop %v3244
    %v3246 = vmul.f32 %v3233, 1.442695
    %v3247 = vpow.pop %v3246
    %v3248 = vmul.f32 %v3234, 1.442695
    %v3249 = vpow.pop %v3248
    %v3250 = vmul.f32 %v3235, 1.442695
    %v3251 = vpow.pop %v3250
    %v3252 = vsel %vm865, %v3237, 0.0
    %3253 = vadd.xlane.f32.xlu0 %v3252
    %v3254 = vpop.xlane.xlu0 %3253
    %v3255 = vsel %vm865, %v3239, 0.0
    %3256 = vadd.xlane.f32.xlu0 %v3255
    %v3257 = vpop.xlane.xlu0 %3256
    %v3258 = vsel %vm865, %v3241, 0.0
    %3259 = vadd.xlane.f32.xlu0 %v3258
    %v3260 = vpop.xlane.xlu0 %3259
    %v3261 = vsel %vm865, %v3243, 0.0
    %3262 = vadd.xlane.f32.xlu0 %v3261
    %v3263 = vpop.xlane.xlu0 %3262
    %v3264 = vsel %vm865, %v3245, 0.0
    %3265 = vadd.xlane.f32.xlu0 %v3264
    %v3266 = vpop.xlane.xlu0 %3265
    %v3267 = vsel %vm865, %v3247, 0.0
    %3268 = vadd.xlane.f32.xlu0 %v3267
    %v3269 = vpop.xlane.xlu0 %3268
    %v3270 = vsel %vm865, %v3249, 0.0
    %3271 = vadd.xlane.f32.xlu0 %v3270
    %v3272 = vpop.xlane.xlu0 %3271
    %v3273 = vsel %vm865, %v3251, 0.0
    %3274 = vadd.xlane.f32.xlu0 %v3273
    %v3275 = vpop.xlane.xlu0 %3274
    %v3276 = vrcp.pop %v3254
    %v3277 = vrcp.pop %v3257
    %v3278 = vrcp.pop %v3260
    %v3279 = vrcp.pop %v3263
    %v3280 = vrcp.pop %v3266
    %v3281 = vrcp.pop %v3269
    %v3282 = vrcp.pop %v3272
    %v3283 = vrcp.pop %v3275
    %v3284 = vmul.f32 %v3237, %v3276
    %v3285 = vmul.f32 %v3239, %v3277
    %v3286 = vmul.f32 %v3241, %v3278
    %v3287 = vmul.f32 %v3243, %v3279
    %v3288 = vmul.f32 %v3245, %v3280
    %v3289 = vmul.f32 %v3247, %v3281
    %v3290 = vmul.f32 %v3249, %v3282
    %v3291 = vmul.f32 %v3251, %v3283
    %v3293 = vsel %vm865, %v3284, 0
    %3295 = vmatprep.subr.mxu0 0.0
    %3296 = vmatpush1.msra.mxu0 %v2546
    %3297 = vmatprep.subr.mxu0 0.0
    %3298 = vmatpush1.msra.mxu0 0.0
    %3299 = vmatprep.subr.mxu0 0.0
    %3300 = vmatpush1.msra.mxu0 0.0
    %3301 = vmatprep.subr.mxu0 0.0
    %3302 = vmatpush1.msra.mxu0 0.0
    %3303 = vmatprep.subr.mxu0 0.0
    %3304 = vmatpush1.msra.mxu0 0.0
    %3305 = vmatprep.subr.mxu0 0.0
    %3306 = vmatpush1.msra.mxu0 0.0
    %3307 = vmatprep.subr.mxu0 0.0
    %3308 = vmatpush1.msra.mxu0 0.0
    %3309 = vmatprep.subr.mxu0 0.0
    %3310 = vmatpush1.msra.mxu0 0.0
    %3311 = vmatprep.subr.mxu0 0.0
    %3312 = vmatpush1.msra.mxu0 0.0
    %3313 = vmatprep.subr.mxu0 0.0
    %3314 = vmatpush1.msra.mxu0 0.0
    %3315 = vmatprep.subr.mxu0 0.0
    %3316 = vmatpush1.msra.mxu0 0.0
    %3317 = vmatprep.subr.mxu0 0.0
    %3318 = vmatpush1.msra.mxu0 0.0
    %3319 = vmatprep.subr.mxu0 0.0
    %3320 = vmatpush1.msra.mxu0 0.0
    %3321 = vmatprep.subr.mxu0 0.0
    %3322 = vmatpush1.msra.mxu0 0.0
    %3323 = vmatprep.subr.mxu0 0.0
    %3324 = vmatpush1.msra.mxu0 0.0
    %3325 = vmatprep.subr.mxu0 0.0
    %3326 = vmatpush1.msra.mxu0 0.0
    %3327 = vmatprep.subr.mxu0 0.0
    %3328 = vmatpush1.msra.mxu0 0.0
    %3329 = vmatprep.subr.mxu0 0.0
    %3330 = vmatpush1.msra.mxu0 0.0
    %3331 = vmatprep.subr.mxu0 0.0
    %3332 = vmatpush1.msra.mxu0 0.0
    %3333 = vmatprep.subr.mxu0 0.0
    %3334 = vmatpush1.msra.mxu0 0.0
    %3335 = vmatprep.subr.mxu0 0.0
    %3336 = vmatpush1.msra.mxu0 0.0
    %3337 = vmatprep.subr.mxu0 0.0
    %3338 = vmatpush1.msra.mxu0 0.0
    %3339 = vmatprep.subr.mxu0 0.0
    %3340 = vmatpush1.msra.mxu0 0.0
    %3341 = vmatprep.subr.mxu0 0.0
    %3342 = vmatpush1.msra.mxu0 0.0
    %3343 = vmatprep.subr.mxu0 0.0
    %3344 = vmatpush1.msra.mxu0 0.0
    %3345 = vmatprep.subr.mxu0 0.0
    %3346 = vmatpush1.msra.mxu0 0.0
    %3347 = vmatprep.subr.mxu0 0.0
    %3348 = vmatpush1.msra.mxu0 0.0
    %3349 = vmatprep.subr.mxu0 0.0
    %3350 = vmatpush1.msra.mxu0 0.0
    %3351 = vmatprep.subr.mxu0 0.0
    %3352 = vmatpush1.msra.mxu0 0.0
    %3353 = vmatprep.subr.mxu0 0.0
    %3354 = vmatpush1.msra.mxu0 0.0
    %3355 = vmatprep.subr.mxu0 0.0
    %3356 = vmatpush1.msra.mxu0 0.0
    %3357 = vmatprep.subr.mxu0 0.0
    %3358 = vmatpush1.msra.mxu0 0.0
    %3359 = vmatprep.mubr.f32.mxu0 0.0
    %3360 = vmatmul.mubr.f32.gmra.mrb[0].mxu0 %v3293
    %v3361 = vpop.f32.mrb[0].mxu0
    %v3362 = vadd.f32 0.0, %v3361
    %v3363 = vpop.f32.mrb[0].mxu0
    %3364 = vdwg.mxu0
    %v3366 = vsel %vm865, %v3285, 0
    %3368 = vmatprep.subr.mxu0 0.0
    %3369 = vmatpush1.msra.mxu0 %v2552
    %3370 = vmatprep.subr.mxu0 0.0
    %3371 = vmatpush1.msra.mxu0 0.0
    %3372 = vmatprep.subr.mxu0 0.0
    %3373 = vmatpush1.msra.mxu0 0.0
    %3374 = vmatprep.subr.mxu0 0.0
    %3375 = vmatpush1.msra.mxu0 0.0
    %3376 = vmatprep.subr.mxu0 0.0
    %3377 = vmatpush1.msra.mxu0 0.0
    %3378 = vmatprep.subr.mxu0 0.0
    %3379 = vmatpush1.msra.mxu0 0.0
    %3380 = vmatprep.subr.mxu0 0.0
    %3381 = vmatpush1.msra.mxu0 0.0
    %3382 = vmatprep.subr.mxu0 0.0
    %3383 = vmatpush1.msra.mxu0 0.0
    %3384 = vmatprep.subr.mxu0 0.0
    %3385 = vmatpush1.msra.mxu0 0.0
    %3386 = vmatprep.subr.mxu0 0.0
    %3387 = vmatpush1.msra.mxu0 0.0
    %3388 = vmatprep.subr.mxu0 0.0
    %3389 = vmatpush1.msra.mxu0 0.0
    %3390 = vmatprep.subr.mxu0 0.0
    %3391 = vmatpush1.msra.mxu0 0.0
    %3392 = vmatprep.subr.mxu0 0.0
    %3393 = vmatpush1.msra.mxu0 0.0
    %3394 = vmatprep.subr.mxu0 0.0
    %3395 = vmatpush1.msra.mxu0 0.0
    %3396 = vmatprep.subr.mxu0 0.0
    %3397 = vmatpush1.msra.mxu0 0.0
    %3398 = vmatprep.subr.mxu0 0.0
    %3399 = vmatpush1.msra.mxu0 0.0
    %3400 = vmatprep.subr.mxu0 0.0
    %3401 = vmatpush1.msra.mxu0 0.0
    %3402 = vmatprep.subr.mxu0 0.0
    %3403 = vmatpush1.msra.mxu0 0.0
    %3404 = vmatprep.subr.mxu0 0.0
    %3405 = vmatpush1.msra.mxu0 0.0
    %3406 = vmatprep.subr.mxu0 0.0
    %3407 = vmatpush1.msra.mxu0 0.0
    %3408 = vmatprep.subr.mxu0 0.0
    %3409 = vmatpush1.msra.mxu0 0.0
    %3410 = vmatprep.subr.mxu0 0.0
    %3411 = vmatpush1.msra.mxu0 0.0
    %3412 = vmatprep.subr.mxu0 0.0
    %3413 = vmatpush1.msra.mxu0 0.0
    %3414 = vmatprep.subr.mxu0 0.0
    %3415 = vmatpush1.msra.mxu0 0.0
    %3416 = vmatprep.subr.mxu0 0.0
    %3417 = vmatpush1.msra.mxu0 0.0
    %3418 = vmatprep.subr.mxu0 0.0
    %3419 = vmatpush1.msra.mxu0 0.0
    %3420 = vmatprep.subr.mxu0 0.0
    %3421 = vmatpush1.msra.mxu0 0.0
    %3422 = vmatprep.subr.mxu0 0.0
    %3423 = vmatpush1.msra.mxu0 0.0
    %3424 = vmatprep.subr.mxu0 0.0
    %3425 = vmatpush1.msra.mxu0 0.0
    %3426 = vmatprep.subr.mxu0 0.0
    %3427 = vmatpush1.msra.mxu0 0.0
    %3428 = vmatprep.subr.mxu0 0.0
    %3429 = vmatpush1.msra.mxu0 0.0
    %3430 = vmatprep.subr.mxu0 0.0
    %3431 = vmatpush1.msra.mxu0 0.0
    %3432 = vmatprep.mubr.f32.mxu0 0.0
    %3433 = vmatmul.mubr.f32.gmra.mrb[0].mxu0 %v3366
    %v3434 = vpop.f32.mrb[0].mxu0
    %v3435 = vadd.f32 0.0, %v3434
    %v3436 = vpop.f32.mrb[0].mxu0
    %3437 = vdwg.mxu0
    %v3439 = vsel %vm865, %v3286, 0
    %3441 = vmatprep.subr.mxu0 0.0
    %3442 = vmatpush1.msra.mxu0 %v2571
    %3443 = vmatprep.subr.mxu0 0.0
    %3444 = vmatpush1.msra.mxu0 0.0
    %3445 = vmatprep.subr.mxu0 0.0
    %3446 = vmatpush1.msra.mxu0 0.0
    %3447 = vmatprep.subr.mxu0 0.0
    %3448 = vmatpush1.msra.mxu0 0.0
    %3449 = vmatprep.subr.mxu0 0.0
    %3450 = vmatpush1.msra.mxu0 0.0
    %3451 = vmatprep.subr.mxu0 0.0
    %3452 = vmatpush1.msra.mxu0 0.0
    %3453 = vmatprep.subr.mxu0 0.0
    %3454 = vmatpush1.msra.mxu0 0.0
    %3455 = vmatprep.subr.mxu0 0.0
    %3456 = vmatpush1.msra.mxu0 0.0
    %3457 = vmatprep.subr.mxu0 0.0
    %3458 = vmatpush1.msra.mxu0 0.0
    %3459 = vmatprep.subr.mxu0 0.0
    %3460 = vmatpush1.msra.mxu0 0.0
    %3461 = vmatprep.subr.mxu0 0.0
    %3462 = vmatpush1.msra.mxu0 0.0
    %3463 = vmatprep.subr.mxu0 0.0
    %3464 = vmatpush1.msra.mxu0 0.0
    %3465 = vmatprep.subr.mxu0 0.0
    %3466 = vmatpush1.msra.mxu0 0.0
    %3467 = vmatprep.subr.mxu0 0.0
    %3468 = vmatpush1.msra.mxu0 0.0
    %3469 = vmatprep.subr.mxu0 0.0
    %3470 = vmatpush1.msra.mxu0 0.0
    %3471 = vmatprep.subr.mxu0 0.0
    %3472 = vmatpush1.msra.mxu0 0.0
    %3473 = vmatprep.subr.mxu0 0.0
    %3474 = vmatpush1.msra.mxu0 0.0
    %3475 = vmatprep.subr.mxu0 0.0
    %3476 = vmatpush1.msra.mxu0 0.0
    %3477 = vmatprep.subr.mxu0 0.0
    %3478 = vmatpush1.msra.mxu0 0.0
    %3479 = vmatprep.subr.mxu0 0.0
    %3480 = vmatpush1.msra.mxu0 0.0
    %3481 = vmatprep.subr.mxu0 0.0
    %3482 = vmatpush1.msra.mxu0 0.0
    %3483 = vmatprep.subr.mxu0 0.0
    %3484 = vmatpush1.msra.mxu0 0.0
    %3485 = vmatprep.subr.mxu0 0.0
    %3486 = vmatpush1.msra.mxu0 0.0
    %3487 = vmatprep.subr.mxu0 0.0
    %3488 = vmatpush1.msra.mxu0 0.0
    %3489 = vmatprep.subr.mxu0 0.0
    %3490 = vmatpush1.msra.mxu0 0.0
    %3491 = vmatprep.subr.mxu0 0.0
    %3492 = vmatpush1.msra.mxu0 0.0
    %3493 = vmatprep.subr.mxu0 0.0
    %3494 = vmatpush1.msra.mxu0 0.0
    %3495 = vmatprep.subr.mxu0 0.0
    %3496 = vmatpush1.msra.mxu0 0.0
    %3497 = vmatprep.subr.mxu0 0.0
    %3498 = vmatpush1.msra.mxu0 0.0
    %3499 = vmatprep.subr.mxu0 0.0
    %3500 = vmatpush1.msra.mxu0 0.0
    %3501 = vmatprep.subr.mxu0 0.0
    %3502 = vmatpush1.msra.mxu0 0.0
    %3503 = vmatprep.subr.mxu0 0.0
    %3504 = vmatpush1.msra.mxu0 0.0
    %3505 = vmatprep.mubr.f32.mxu0 0.0
    %3506 = vmatmul.mubr.f32.gmra.mrb[0].mxu0 %v3439
    %v3507 = vpop.f32.mrb[0].mxu0
    %v3508 = vadd.f32 0.0, %v3507
    %v3509 = vpop.f32.mrb[0].mxu0
    %3510 = vdwg.mxu0
    %v3512 = vsel %vm865, %v3287, 0
    %3514 = vmatprep.subr.mxu0 0.0
    %3515 = vmatpush1.msra.mxu0 %v2573
    %3516 = vmatprep.subr.mxu0 0.0
    %3517 = vmatpush1.msra.mxu0 0.0
    %3518 = vmatprep.subr.mxu0 0.0
    %3519 = vmatpush1.msra.mxu0 0.0
    %3520 = vmatprep.subr.mxu0 0.0
    %3521 = vmatpush1.msra.mxu0 0.0
    %3522 = vmatprep.subr.mxu0 0.0
    %3523 = vmatpush1.msra.mxu0 0.0
    %3524 = vmatprep.subr.mxu0 0.0
    %3525 = vmatpush1.msra.mxu0 0.0
    %3526 = vmatprep.subr.mxu0 0.0
    %3527 = vmatpush1.msra.mxu0 0.0
    %3528 = vmatprep.subr.mxu0 0.0
    %3529 = vmatpush1.msra.mxu0 0.0
    %3530 = vmatprep.subr.mxu0 0.0
    %3531 = vmatpush1.msra.mxu0 0.0
    %3532 = vmatprep.subr.mxu0 0.0
    %3533 = vmatpush1.msra.mxu0 0.0
    %3534 = vmatprep.subr.mxu0 0.0
    %3535 = vmatpush1.msra.mxu0 0.0
    %3536 = vmatprep.subr.mxu0 0.0
    %3537 = vmatpush1.msra.mxu0 0.0
    %3538 = vmatprep.subr.mxu0 0.0
    %3539 = vmatpush1.msra.mxu0 0.0
    %3540 = vmatprep.subr.mxu0 0.0
    %3541 = vmatpush1.msra.mxu0 0.0
    %3542 = vmatprep.subr.mxu0 0.0
    %3543 = vmatpush1.msra.mxu0 0.0
    %3544 = vmatprep.subr.mxu0 0.0
    %3545 = vmatpush1.msra.mxu0 0.0
    %3546 = vmatprep.subr.mxu0 0.0
    %3547 = vmatpush1.msra.mxu0 0.0
    %3548 = vmatprep.subr.mxu0 0.0
    %3549 = vmatpush1.msra.mxu0 0.0
    %3550 = vmatprep.subr.mxu0 0.0
    %3551 = vmatpush1.msra.mxu0 0.0
    %3552 = vmatprep.subr.mxu0 0.0
    %3553 = vmatpush1.msra.mxu0 0.0
    %3554 = vmatprep.subr.mxu0 0.0
    %3555 = vmatpush1.msra.mxu0 0.0
    %3556 = vmatprep.subr.mxu0 0.0
    %3557 = vmatpush1.msra.mxu0 0.0
    %3558 = vmatprep.subr.mxu0 0.0
    %3559 = vmatpush1.msra.mxu0 0.0
    %3560 = vmatprep.subr.mxu0 0.0
    %3561 = vmatpush1.msra.mxu0 0.0
    %3562 = vmatprep.subr.mxu0 0.0
    %3563 = vmatpush1.msra.mxu0 0.0
    %3564 = vmatprep.subr.mxu0 0.0
    %3565 = vmatpush1.msra.mxu0 0.0
    %3566 = vmatprep.subr.mxu0 0.0
    %3567 = vmatpush1.msra.mxu0 0.0
    %3568 = vmatprep.subr.mxu0 0.0
    %3569 = vmatpush1.msra.mxu0 0.0
    %3570 = vmatprep.subr.mxu0 0.0
    %3571 = vmatpush1.msra.mxu0 0.0
    %3572 = vmatprep.subr.mxu0 0.0
    %3573 = vmatpush1.msra.mxu0 0.0
    %3574 = vmatprep.subr.mxu0 0.0
    %3575 = vmatpush1.msra.mxu0 0.0
    %3576 = vmatprep.subr.mxu0 0.0
    %3577 = vmatpush1.msra.mxu0 0.0
    %3578 = vmatprep.mubr.f32.mxu0 0.0
    %3579 = vmatmul.mubr.f32.gmra.mrb[0].mxu0 %v3512
    %v3580 = vpop.f32.mrb[0].mxu0
    %v3581 = vadd.f32 0.0, %v3580
    %v3582 = vpop.f32.mrb[0].mxu0
    %3583 = vdwg.mxu0
    %v3585 = vsel %vm865, %v3288, 0
    %3587 = vmatprep.subr.mxu0 0.0
    %3588 = vmatpush1.msra.mxu0 %v2577
    %3589 = vmatprep.subr.mxu0 0.0
    %3590 = vmatpush1.msra.mxu0 0.0
    %3591 = vmatprep.subr.mxu0 0.0
    %3592 = vmatpush1.msra.mxu0 0.0
    %3593 = vmatprep.subr.mxu0 0.0
    %3594 = vmatpush1.msra.mxu0 0.0
    %3595 = vmatprep.subr.mxu0 0.0
    %3596 = vmatpush1.msra.mxu0 0.0
    %3597 = vmatprep.subr.mxu0 0.0
    %3598 = vmatpush1.msra.mxu0 0.0
    %3599 = vmatprep.subr.mxu0 0.0
    %3600 = vmatpush1.msra.mxu0 0.0
    %3601 = vmatprep.subr.mxu0 0.0
    %3602 = vmatpush1.msra.mxu0 0.0
    %3603 = vmatprep.subr.mxu0 0.0
    %3604 = vmatpush1.msra.mxu0 0.0
    %3605 = vmatprep.subr.mxu0 0.0
    %3606 = vmatpush1.msra.mxu0 0.0
    %3607 = vmatprep.subr.mxu0 0.0
    %3608 = vmatpush1.msra.mxu0 0.0
    %3609 = vmatprep.subr.mxu0 0.0
    %3610 = vmatpush1.msra.mxu0 0.0
    %3611 = vmatprep.subr.mxu0 0.0
    %3612 = vmatpush1.msra.mxu0 0.0
    %3613 = vmatprep.subr.mxu0 0.0
    %3614 = vmatpush1.msra.mxu0 0.0
    %3615 = vmatprep.subr.mxu0 0.0
    %3616 = vmatpush1.msra.mxu0 0.0
    %3617 = vmatprep.subr.mxu0 0.0
    %3618 = vmatpush1.msra.mxu0 0.0
    %3619 = vmatprep.subr.mxu0 0.0
    %3620 = vmatpush1.msra.mxu0 0.0
    %3621 = vmatprep.subr.mxu0 0.0
    %3622 = vmatpush1.msra.mxu0 0.0
    %3623 = vmatprep.subr.mxu0 0.0
    %3624 = vmatpush1.msra.mxu0 0.0
    %3625 = vmatprep.subr.mxu0 0.0
    %3626 = vmatpush1.msra.mxu0 0.0
    %3627 = vmatprep.subr.mxu0 0.0
    %3628 = vmatpush1.msra.mxu0 0.0
    %3629 = vmatprep.subr.mxu0 0.0
    %3630 = vmatpush1.msra.mxu0 0.0
    %3631 = vmatprep.subr.mxu0 0.0
    %3632 = vmatpush1.msra.mxu0 0.0
    %3633 = vmatprep.subr.mxu0 0.0
    %3634 = vmatpush1.msra.mxu0 0.0
    %3635 = vmatprep.subr.mxu0 0.0
    %3636 = vmatpush1.msra.mxu0 0.0
    %3637 = vmatprep.subr.mxu0 0.0
    %3638 = vmatpush1.msra.mxu0 0.0
    %3639 = vmatprep.subr.mxu0 0.0
    %3640 = vmatpush1.msra.mxu0 0.0
    %3641 = vmatprep.subr.mxu0 0.0
    %3642 = vmatpush1.msra.mxu0 0.0
    %3643 = vmatprep.subr.mxu0 0.0
    %3644 = vmatpush1.msra.mxu0 0.0
    %3645 = vmatprep.subr.mxu0 0.0
    %3646 = vmatpush1.msra.mxu0 0.0
    %3647 = vmatprep.subr.mxu0 0.0
    %3648 = vmatpush1.msra.mxu0 0.0
    %3649 = vmatprep.subr.mxu0 0.0
    %3650 = vmatpush1.msra.mxu0 0.0
    %3651 = vmatprep.mubr.f32.mxu0 0.0
    %3652 = vmatmul.mubr.f32.gmra.mrb[0].mxu0 %v3585
    %v3653 = vpop.f32.mrb[0].mxu0
    %v3654 = vadd.f32 0.0, %v3653
    %v3655 = vpop.f32.mrb[0].mxu0
    %3656 = vdwg.mxu0
    %v3658 = vsel %vm865, %v3289, 0
    %3660 = vmatprep.subr.mxu0 0.0
    %3661 = vmatpush1.msra.mxu0 %v2579
    %3662 = vmatprep.subr.mxu0 0.0
    %3663 = vmatpush1.msra.mxu0 0.0
    %3664 = vmatprep.subr.mxu0 0.0
    %3665 = vmatpush1.msra.mxu0 0.0
    %3666 = vmatprep.subr.mxu0 0.0
    %3667 = vmatpush1.msra.mxu0 0.0
    %3668 = vmatprep.subr.mxu0 0.0
    %3669 = vmatpush1.msra.mxu0 0.0
    %3670 = vmatprep.subr.mxu0 0.0
    %3671 = vmatpush1.msra.mxu0 0.0
    %3672 = vmatprep.subr.mxu0 0.0
    %3673 = vmatpush1.msra.mxu0 0.0
    %3674 = vmatprep.subr.mxu0 0.0
    %3675 = vmatpush1.msra.mxu0 0.0
    %3676 = vmatprep.subr.mxu0 0.0
    %3677 = vmatpush1.msra.mxu0 0.0
    %3678 = vmatprep.subr.mxu0 0.0
    %3679 = vmatpush1.msra.mxu0 0.0
    %3680 = vmatprep.subr.mxu0 0.0
    %3681 = vmatpush1.msra.mxu0 0.0
    %3682 = vmatprep.subr.mxu0 0.0
    %3683 = vmatpush1.msra.mxu0 0.0
    %3684 = vmatprep.subr.mxu0 0.0
    %3685 = vmatpush1.msra.mxu0 0.0
    %3686 = vmatprep.subr.mxu0 0.0
    %3687 = vmatpush1.msra.mxu0 0.0
    %3688 = vmatprep.subr.mxu0 0.0
    %3689 = vmatpush1.msra.mxu0 0.0
    %3690 = vmatprep.subr.mxu0 0.0
    %3691 = vmatpush1.msra.mxu0 0.0
    %3692 = vmatprep.subr.mxu0 0.0
    %3693 = vmatpush1.msra.mxu0 0.0
    %3694 = vmatprep.subr.mxu0 0.0
    %3695 = vmatpush1.msra.mxu0 0.0
    %3696 = vmatprep.subr.mxu0 0.0
    %3697 = vmatpush1.msra.mxu0 0.0
    %3698 = vmatprep.subr.mxu0 0.0
    %3699 = vmatpush1.msra.mxu0 0.0
    %3700 = vmatprep.subr.mxu0 0.0
    %3701 = vmatpush1.msra.mxu0 0.0
    %3702 = vmatprep.subr.mxu0 0.0
    %3703 = vmatpush1.msra.mxu0 0.0
    %3704 = vmatprep.subr.mxu0 0.0
    %3705 = vmatpush1.msra.mxu0 0.0
    %3706 = vmatprep.subr.mxu0 0.0
    %3707 = vmatpush1.msra.mxu0 0.0
    %3708 = vmatprep.subr.mxu0 0.0
    %3709 = vmatpush1.msra.mxu0 0.0
    %3710 = vmatprep.subr.mxu0 0.0
    %3711 = vmatpush1.msra.mxu0 0.0
    %3712 = vmatprep.subr.mxu0 0.0
    %3713 = vmatpush1.msra.mxu0 0.0
    %3714 = vmatprep.subr.mxu0 0.0
    %3715 = vmatpush1.msra.mxu0 0.0
    %3716 = vmatprep.subr.mxu0 0.0
    %3717 = vmatpush1.msra.mxu0 0.0
    %3718 = vmatprep.subr.mxu0 0.0
    %3719 = vmatpush1.msra.mxu0 0.0
    %3720 = vmatprep.subr.mxu0 0.0
    %3721 = vmatpush1.msra.mxu0 0.0
    %3722 = vmatprep.subr.mxu0 0.0
    %3723 = vmatpush1.msra.mxu0 0.0
    %3724 = vmatprep.mubr.f32.mxu0 0.0
    %3725 = vmatmul.mubr.f32.gmra.mrb[0].mxu0 %v3658
    %v3726 = vpop.f32.mrb[0].mxu0
    %v3727 = vadd.f32 0.0, %v3726
    %v3728 = vpop.f32.mrb[0].mxu0
    %3729 = vdwg.mxu0
    %v3731 = vsel %vm865, %v3290, 0
    %3733 = vmatprep.subr.mxu0 0.0
    %3734 = vmatpush1.msra.mxu0 %v2583
    %3735 = vmatprep.subr.mxu0 0.0
    %3736 = vmatpush1.msra.mxu0 0.0
    %3737 = vmatprep.subr.mxu0 0.0
    %3738 = vmatpush1.msra.mxu0 0.0
    %3739 = vmatprep.subr.mxu0 0.0
    %3740 = vmatpush1.msra.mxu0 0.0
    %3741 = vmatprep.subr.mxu0 0.0
    %3742 = vmatpush1.msra.mxu0 0.0
    %3743 = vmatprep.subr.mxu0 0.0
    %3744 = vmatpush1.msra.mxu0 0.0
    %3745 = vmatprep.subr.mxu0 0.0
    %3746 = vmatpush1.msra.mxu0 0.0
    %3747 = vmatprep.subr.mxu0 0.0
    %3748 = vmatpush1.msra.mxu0 0.0
    %3749 = vmatprep.subr.mxu0 0.0
    %3750 = vmatpush1.msra.mxu0 0.0
    %3751 = vmatprep.subr.mxu0 0.0
    %3752 = vmatpush1.msra.mxu0 0.0
    %3753 = vmatprep.subr.mxu0 0.0
    %3754 = vmatpush1.msra.mxu0 0.0
    %3755 = vmatprep.subr.mxu0 0.0
    %3756 = vmatpush1.msra.mxu0 0.0
    %3757 = vmatprep.subr.mxu0 0.0
    %3758 = vmatpush1.msra.mxu0 0.0
    %3759 = vmatprep.subr.mxu0 0.0
    %3760 = vmatpush1.msra.mxu0 0.0
    %3761 = vmatprep.subr.mxu0 0.0
    %3762 = vmatpush1.msra.mxu0 0.0
    %3763 = vmatprep.subr.mxu0 0.0
    %3764 = vmatpush1.msra.mxu0 0.0
    %3765 = vmatprep.subr.mxu0 0.0
    %3766 = vmatpush1.msra.mxu0 0.0
    %3767 = vmatprep.subr.mxu0 0.0
    %3768 = vmatpush1.msra.mxu0 0.0
    %3769 = vmatprep.subr.mxu0 0.0
    %3770 = vmatpush1.msra.mxu0 0.0
    %3771 = vmatprep.subr.mxu0 0.0
    %3772 = vmatpush1.msra.mxu0 0.0
    %3773 = vmatprep.subr.mxu0 0.0
    %3774 = vmatpush1.msra.mxu0 0.0
    %3775 = vmatprep.subr.mxu0 0.0
    %3776 = vmatpush1.msra.mxu0 0.0
    %3777 = vmatprep.subr.mxu0 0.0
    %3778 = vmatpush1.msra.mxu0 0.0
    %3779 = vmatprep.subr.mxu0 0.0
    %3780 = vmatpush1.msra.mxu0 0.0
    %3781 = vmatprep.subr.mxu0 0.0
    %3782 = vmatpush1.msra.mxu0 0.0
    %3783 = vmatprep.subr.mxu0 0.0
    %3784 = vmatpush1.msra.mxu0 0.0
    %3785 = vmatprep.subr.mxu0 0.0
    %3786 = vmatpush1.msra.mxu0 0.0
    %3787 = vmatprep.subr.mxu0 0.0
    %3788 = vmatpush1.msra.mxu0 0.0
    %3789 = vmatprep.subr.mxu0 0.0
    %3790 = vmatpush1.msra.mxu0 0.0
    %3791 = vmatprep.subr.mxu0 0.0
    %3792 = vmatpush1.msra.mxu0 0.0
    %3793 = vmatprep.subr.mxu0 0.0
    %3794 = vmatpush1.msra.mxu0 0.0
    %3795 = vmatprep.subr.mxu0 0.0
    %3796 = vmatpush1.msra.mxu0 0.0
    %3797 = vmatprep.mubr.f32.mxu0 0.0
    %3798 = vmatmul.mubr.f32.gmra.mrb[0].mxu0 %v3731
    %v3799 = vpop.f32.mrb[0].mxu0
    %v3800 = vadd.f32 0.0, %v3799
    %v3801 = vpop.f32.mrb[0].mxu0
    %3802 = vdwg.mxu0
    %v3804 = vsel %vm865, %v3291, 0
    %3806 = vmatprep.subr.mxu0 0.0
    %3807 = vmatpush1.msra.mxu0 %v2585
    %3808 = vmatprep.subr.mxu0 0.0
    %3809 = vmatpush1.msra.mxu0 0.0
    %3810 = vmatprep.subr.mxu0 0.0
    %3811 = vmatpush1.msra.mxu0 0.0
    %3812 = vmatprep.subr.mxu0 0.0
    %3813 = vmatpush1.msra.mxu0 0.0
    %3814 = vmatprep.subr.mxu0 0.0
    %3815 = vmatpush1.msra.mxu0 0.0
    %3816 = vmatprep.subr.mxu0 0.0
    %3817 = vmatpush1.msra.mxu0 0.0
    %3818 = vmatprep.subr.mxu0 0.0
    %3819 = vmatpush1.msra.mxu0 0.0
    %3820 = vmatprep.subr.mxu0 0.0
    %3821 = vmatpush1.msra.mxu0 0.0
    %3822 = vmatprep.subr.mxu0 0.0
    %3823 = vmatpush1.msra.mxu0 0.0
    %3824 = vmatprep.subr.mxu0 0.0
    %3825 = vmatpush1.msra.mxu0 0.0
    %3826 = vmatprep.subr.mxu0 0.0
    %3827 = vmatpush1.msra.mxu0 0.0
    %3828 = vmatprep.subr.mxu0 0.0
    %3829 = vmatpush1.msra.mxu0 0.0
    %3830 = vmatprep.subr.mxu0 0.0
    %3831 = vmatpush1.msra.mxu0 0.0
    %3832 = vmatprep.subr.mxu0 0.0
    %3833 = vmatpush1.msra.mxu0 0.0
    %3834 = vmatprep.subr.mxu0 0.0
    %3835 = vmatpush1.msra.mxu0 0.0
    %3836 = vmatprep.subr.mxu0 0.0
    %3837 = vmatpush1.msra.mxu0 0.0
    %3838 = vmatprep.subr.mxu0 0.0
    %3839 = vmatpush1.msra.mxu0 0.0
    %3840 = vmatprep.subr.mxu0 0.0
    %3841 = vmatpush1.msra.mxu0 0.0
    %3842 = vmatprep.subr.mxu0 0.0
    %3843 = vmatpush1.msra.mxu0 0.0
    %3844 = vmatprep.subr.mxu0 0.0
    %3845 = vmatpush1.msra.mxu0 0.0
    %3846 = vmatprep.subr.mxu0 0.0
    %3847 = vmatpush1.msra.mxu0 0.0
    %3848 = vmatprep.subr.mxu0 0.0
    %3849 = vmatpush1.msra.mxu0 0.0
    %3850 = vmatprep.subr.mxu0 0.0
    %3851 = vmatpush1.msra.mxu0 0.0
    %3852 = vmatprep.subr.mxu0 0.0
    %3853 = vmatpush1.msra.mxu0 0.0
    %3854 = vmatprep.subr.mxu0 0.0
    %3855 = vmatpush1.msra.mxu0 0.0
    %3856 = vmatprep.subr.mxu0 0.0
    %3857 = vmatpush1.msra.mxu0 0.0
    %3858 = vmatprep.subr.mxu0 0.0
    %3859 = vmatpush1.msra.mxu0 0.0
    %3860 = vmatprep.subr.mxu0 0.0
    %3861 = vmatpush1.msra.mxu0 0.0
    %3862 = vmatprep.subr.mxu0 0.0
    %3863 = vmatpush1.msra.mxu0 0.0
    %3864 = vmatprep.subr.mxu0 0.0
    %3865 = vmatpush1.msra.mxu0 0.0
    %3866 = vmatprep.subr.mxu0 0.0
    %3867 = vmatpush1.msra.mxu0 0.0
    %3868 = vmatprep.subr.mxu0 0.0
    %3869 = vmatpush1.msra.mxu0 0.0
    %3870 = vmatprep.mubr.f32.mxu0 0.0
    %3871 = vmatmul.mubr.f32.gmra.mrb[0].mxu0 %v3804
    %v3872 = vpop.f32.mrb[0].mxu0
    %v3873 = vadd.f32 0.0, %v3872
    %v3874 = vpop.f32.mrb[0].mxu0
    %3875 = vdwg.mxu0
    %s3876 = scalar_lea.vmem [#allocation5], 128
    %v3877 = vld [vmem:[%s3876] sm:$0xff]
    %v3878 = vld [vmem:[%s3876 + $0x8] sm:$0xff]
    %v3879 = vld [vmem:[%s3876 + $0x10] sm:$0xff]
    %v3880 = vld [vmem:[%s3876 + $0x18] sm:$0xff]
    %v3881 = vld [vmem:[%s3876 + $0x20] sm:$0xff]
    %v3882 = vld [vmem:[%s3876 + $0x28] sm:$0xff]
    %v3883 = vld [vmem:[%s3876 + $0x30] sm:$0xff]
    %v3884 = vld [vmem:[%s3876 + $0x38] sm:$0xff]
    %v3885 = vld [vmem:[%s3876 + $0x40] sm:$0xff]
    %v3886 = vld [vmem:[%s3876 + $0x48] sm:$0xff]
    %v3887 = vld [vmem:[%s3876 + $0x50] sm:$0xff]
    %v3888 = vld [vmem:[%s3876 + $0x58] sm:$0xff]
    %v3889 = vld [vmem:[%s3876 + $0x60] sm:$0xff]
    %v3890 = vld [vmem:[%s3876 + $0x68] sm:$0xff]
    %v3891 = vld [vmem:[%s3876 + $0x70] sm:$0xff]
    %v3892 = vld [vmem:[%s3876 + $0x78] sm:$0xff]
    %v3894 = vsel %vm250, %v3362, 0
    %3896 = vmatprep.subr.mxu0 0.0
    %3897 = vmatpush1.msra.mxu0 %v3877
    %3898 = vmatprep.subr.mxu0 0.0
    %3899 = vmatpush1.msra.mxu0 %v3878
    %3900 = vmatprep.subr.mxu0 0.0
    %3901 = vmatpush1.msra.mxu0 0.0
    %3902 = vmatprep.subr.mxu0 0.0
    %3903 = vmatpush1.msra.mxu0 0.0
    %3904 = vmatprep.subr.mxu0 0.0
    %3905 = vmatpush1.msra.mxu0 0.0
    %3906 = vmatprep.subr.mxu0 0.0
    %3907 = vmatpush1.msra.mxu0 0.0
    %3908 = vmatprep.subr.mxu0 0.0
    %3909 = vmatpush1.msra.mxu0 0.0
    %3910 = vmatprep.subr.mxu0 0.0
    %3911 = vmatpush1.msra.mxu0 0.0
    %3912 = vmatprep.subr.mxu0 0.0
    %3913 = vmatpush1.msra.mxu0 0.0
    %3914 = vmatprep.subr.mxu0 0.0
    %3915 = vmatpush1.msra.mxu0 0.0
    %3916 = vmatprep.subr.mxu0 0.0
    %3917 = vmatpush1.msra.mxu0 0.0
    %3918 = vmatprep.subr.mxu0 0.0
    %3919 = vmatpush1.msra.mxu0 0.0
    %3920 = vmatprep.subr.mxu0 0.0
    %3921 = vmatpush1.msra.mxu0 0.0
    %3922 = vmatprep.subr.mxu0 0.0
    %3923 = vmatpush1.msra.mxu0 0.0
    %3924 = vmatprep.subr.mxu0 0.0
    %3925 = vmatpush1.msra.mxu0 0.0
    %3926 = vmatprep.subr.mxu0 0.0
    %3927 = vmatpush1.msra.mxu0 0.0
    %3928 = vmatprep.subr.mxu0 0.0
    %3929 = vmatpush1.msra.mxu0 0.0
    %3930 = vmatprep.subr.mxu0 0.0
    %3931 = vmatpush1.msra.mxu0 0.0
    %3932 = vmatprep.subr.mxu0 0.0
    %3933 = vmatpush1.msra.mxu0 0.0
    %3934 = vmatprep.subr.mxu0 0.0
    %3935 = vmatpush1.msra.mxu0 0.0
    %3936 = vmatprep.subr.mxu0 0.0
    %3937 = vmatpush1.msra.mxu0 0.0
    %3938 = vmatprep.subr.mxu0 0.0
    %3939 = vmatpush1.msra.mxu0 0.0
    %3940 = vmatprep.subr.mxu0 0.0
    %3941 = vmatpush1.msra.mxu0 0.0
    %3942 = vmatprep.subr.mxu0 0.0
    %3943 = vmatpush1.msra.mxu0 0.0
    %3944 = vmatprep.subr.mxu0 0.0
    %3945 = vmatpush1.msra.mxu0 0.0
    %3946 = vmatprep.subr.mxu0 0.0
    %3947 = vmatpush1.msra.mxu0 0.0
    %3948 = vmatprep.subr.mxu0 0.0
    %3949 = vmatpush1.msra.mxu0 0.0
    %3950 = vmatprep.subr.mxu0 0.0
    %3951 = vmatpush1.msra.mxu0 0.0
    %3952 = vmatprep.subr.mxu0 0.0
    %3953 = vmatpush1.msra.mxu0 0.0
    %3954 = vmatprep.subr.mxu0 0.0
    %3955 = vmatpush1.msra.mxu0 0.0
    %3956 = vmatprep.subr.mxu0 0.0
    %3957 = vmatpush1.msra.mxu0 0.0
    %3958 = vmatprep.subr.mxu0 0.0
    %3959 = vmatpush1.msra.mxu0 0.0
    %3960 = vmatprep.mubr.f32.mxu0 0.0
    %3961 = vmatmul.mubr.f32.gmra.mrb[0].mxu0 %v3894
    %v3962 = vpop.f32.mrb[0].mxu0
    %v3963 = vadd.f32 0.0, %v3962
    %v3964 = vpop.f32.mrb[0].mxu0
    %3965 = vdwg.mxu0
    %v3967 = vsel %vm250, %v3435, 0
    %3969 = vmatprep.subr.mxu0 0.0
    %3970 = vmatpush1.msra.mxu0 %v3879
    %3971 = vmatprep.subr.mxu0 0.0
    %3972 = vmatpush1.msra.mxu0 %v3880
    %3973 = vmatprep.subr.mxu0 0.0
    %3974 = vmatpush1.msra.mxu0 0.0
    %3975 = vmatprep.subr.mxu0 0.0
    %3976 = vmatpush1.msra.mxu0 0.0
    %3977 = vmatprep.subr.mxu0 0.0
    %3978 = vmatpush1.msra.mxu0 0.0
    %3979 = vmatprep.subr.mxu0 0.0
    %3980 = vmatpush1.msra.mxu0 0.0
    %3981 = vmatprep.subr.mxu0 0.0
    %3982 = vmatpush1.msra.mxu0 0.0
    %3983 = vmatprep.subr.mxu0 0.0
    %3984 = vmatpush1.msra.mxu0 0.0
    %3985 = vmatprep.subr.mxu0 0.0
    %3986 = vmatpush1.msra.mxu0 0.0
    %3987 = vmatprep.subr.mxu0 0.0
    %3988 = vmatpush1.msra.mxu0 0.0
    %3989 = vmatprep.subr.mxu0 0.0
    %3990 = vmatpush1.msra.mxu0 0.0
    %3991 = vmatprep.subr.mxu0 0.0
    %3992 = vmatpush1.msra.mxu0 0.0
    %3993 = vmatprep.subr.mxu0 0.0
    %3994 = vmatpush1.msra.mxu0 0.0
    %3995 = vmatprep.subr.mxu0 0.0
    %3996 = vmatpush1.msra.mxu0 0.0
    %3997 = vmatprep.subr.mxu0 0.0
    %3998 = vmatpush1.msra.mxu0 0.0
    %3999 = vmatprep.subr.mxu0 0.0
    %4000 = vmatpush1.msra.mxu0 0.0
    %4001 = vmatprep.subr.mxu0 0.0
    %4002 = vmatpush1.msra.mxu0 0.0
    %4003 = vmatprep.subr.mxu0 0.0
    %4004 = vmatpush1.msra.mxu0 0.0
    %4005 = vmatprep.subr.mxu0 0.0
    %4006 = vmatpush1.msra.mxu0 0.0
    %4007 = vmatprep.subr.mxu0 0.0
    %4008 = vmatpush1.msra.mxu0 0.0
    %4009 = vmatprep.subr.mxu0 0.0
    %4010 = vmatpush1.msra.mxu0 0.0
    %4011 = vmatprep.subr.mxu0 0.0
    %4012 = vmatpush1.msra.mxu0 0.0
    %4013 = vmatprep.subr.mxu0 0.0
    %4014 = vmatpush1.msra.mxu0 0.0
    %4015 = vmatprep.subr.mxu0 0.0
    %4016 = vmatpush1.msra.mxu0 0.0
    %4017 = vmatprep.subr.mxu0 0.0
    %4018 = vmatpush1.msra.mxu0 0.0
    %4019 = vmatprep.subr.mxu0 0.0
    %4020 = vmatpush1.msra.mxu0 0.0
    %4021 = vmatprep.subr.mxu0 0.0
    %4022 = vmatpush1.msra.mxu0 0.0
    %4023 = vmatprep.subr.mxu0 0.0
    %4024 = vmatpush1.msra.mxu0 0.0
    %4025 = vmatprep.subr.mxu0 0.0
    %4026 = vmatpush1.msra.mxu0 0.0
    %4027 = vmatprep.subr.mxu0 0.0
    %4028 = vmatpush1.msra.mxu0 0.0
    %4029 = vmatprep.subr.mxu0 0.0
    %4030 = vmatpush1.msra.mxu0 0.0
    %4031 = vmatprep.subr.mxu0 0.0
    %4032 = vmatpush1.msra.mxu0 0.0
    %4033 = vmatprep.mubr.f32.mxu0 0.0
    %4034 = vmatmul.mubr.f32.gmra.mrb[0].mxu0 %v3967
    %v4035 = vpop.f32.mrb[0].mxu0
    %v4036 = vadd.f32 0.0, %v4035
    %v4037 = vpop.f32.mrb[0].mxu0
    %4038 = vdwg.mxu0
    %v4040 = vsel %vm250, %v3508, 0
    %4042 = vmatprep.subr.mxu0 0.0
    %4043 = vmatpush1.msra.mxu0 %v3881
    %4044 = vmatprep.subr.mxu0 0.0
    %4045 = vmatpush1.msra.mxu0 %v3882
    %4046 = vmatprep.subr.mxu0 0.0
    %4047 = vmatpush1.msra.mxu0 0.0
    %4048 = vmatprep.subr.mxu0 0.0
    %4049 = vmatpush1.msra.mxu0 0.0
    %4050 = vmatprep.subr.mxu0 0.0
    %4051 = vmatpush1.msra.mxu0 0.0
    %4052 = vmatprep.subr.mxu0 0.0
    %4053 = vmatpush1.msra.mxu0 0.0
    %4054 = vmatprep.subr.mxu0 0.0
    %4055 = vmatpush1.msra.mxu0 0.0
    %4056 = vmatprep.subr.mxu0 0.0
    %4057 = vmatpush1.msra.mxu0 0.0
    %4058 = vmatprep.subr.mxu0 0.0
    %4059 = vmatpush1.msra.mxu0 0.0
    %4060 = vmatprep.subr.mxu0 0.0
    %4061 = vmatpush1.msra.mxu0 0.0
    %4062 = vmatprep.subr.mxu0 0.0
    %4063 = vmatpush1.msra.mxu0 0.0
    %4064 = vmatprep.subr.mxu0 0.0
    %4065 = vmatpush1.msra.mxu0 0.0
    %4066 = vmatprep.subr.mxu0 0.0
    %4067 = vmatpush1.msra.mxu0 0.0
    %4068 = vmatprep.subr.mxu0 0.0
    %4069 = vmatpush1.msra.mxu0 0.0
    %4070 = vmatprep.subr.mxu0 0.0
    %4071 = vmatpush1.msra.mxu0 0.0
    %4072 = vmatprep.subr.mxu0 0.0
    %4073 = vmatpush1.msra.mxu0 0.0
    %4074 = vmatprep.subr.mxu0 0.0
    %4075 = vmatpush1.msra.mxu0 0.0
    %4076 = vmatprep.subr.mxu0 0.0
    %4077 = vmatpush1.msra.mxu0 0.0
    %4078 = vmatprep.subr.mxu0 0.0
    %4079 = vmatpush1.msra.mxu0 0.0
    %4080 = vmatprep.subr.mxu0 0.0
    %4081 = vmatpush1.msra.mxu0 0.0
    %4082 = vmatprep.subr.mxu0 0.0
    %4083 = vmatpush1.msra.mxu0 0.0
    %4084 = vmatprep.subr.mxu0 0.0
    %4085 = vmatpush1.msra.mxu0 0.0
    %4086 = vmatprep.subr.mxu0 0.0
    %4087 = vmatpush1.msra.mxu0 0.0
    %4088 = vmatprep.subr.mxu0 0.0
    %4089 = vmatpush1.msra.mxu0 0.0
    %4090 = vmatprep.subr.mxu0 0.0
    %4091 = vmatpush1.msra.mxu0 0.0
    %4092 = vmatprep.subr.mxu0 0.0
    %4093 = vmatpush1.msra.mxu0 0.0
    %4094 = vmatprep.subr.mxu0 0.0
    %4095 = vmatpush1.msra.mxu0 0.0
    %4096 = vmatprep.subr.mxu0 0.0
    %4097 = vmatpush1.msra.mxu0 0.0
    %4098 = vmatprep.subr.mxu0 0.0
    %4099 = vmatpush1.msra.mxu0 0.0
    %4100 = vmatprep.subr.mxu0 0.0
    %4101 = vmatpush1.msra.mxu0 0.0
    %4102 = vmatprep.subr.mxu0 0.0
    %4103 = vmatpush1.msra.mxu0 0.0
    %4104 = vmatprep.subr.mxu0 0.0
    %4105 = vmatpush1.msra.mxu0 0.0
    %4106 = vmatprep.mubr.f32.mxu0 0.0
    %4107 = vmatmul.mubr.f32.gmra.mrb[0].mxu0 %v4040
    %v4108 = vpop.f32.mrb[0].mxu0
    %v4109 = vadd.f32 0.0, %v4108
    %v4110 = vpop.f32.mrb[0].mxu0
    %4111 = vdwg.mxu0
    %v4113 = vsel %vm250, %v3581, 0
    %4115 = vmatprep.subr.mxu0 0.0
    %4116 = vmatpush1.msra.mxu0 %v3883
    %4117 = vmatprep.subr.mxu0 0.0
    %4118 = vmatpush1.msra.mxu0 %v3884
    %4119 = vmatprep.subr.mxu0 0.0
    %4120 = vmatpush1.msra.mxu0 0.0
    %4121 = vmatprep.subr.mxu0 0.0
    %4122 = vmatpush1.msra.mxu0 0.0
    %4123 = vmatprep.subr.mxu0 0.0
    %4124 = vmatpush1.msra.mxu0 0.0
    %4125 = vmatprep.subr.mxu0 0.0
    %4126 = vmatpush1.msra.mxu0 0.0
    %4127 = vmatprep.subr.mxu0 0.0
    %4128 = vmatpush1.msra.mxu0 0.0
    %4129 = vmatprep.subr.mxu0 0.0
    %4130 = vmatpush1.msra.mxu0 0.0
    %4131 = vmatprep.subr.mxu0 0.0
    %4132 = vmatpush1.msra.mxu0 0.0
    %4133 = vmatprep.subr.mxu0 0.0
    %4134 = vmatpush1.msra.mxu0 0.0
    %4135 = vmatprep.subr.mxu0 0.0
    %4136 = vmatpush1.msra.mxu0 0.0
    %4137 = vmatprep.subr.mxu0 0.0
    %4138 = vmatpush1.msra.mxu0 0.0
    %4139 = vmatprep.subr.mxu0 0.0
    %4140 = vmatpush1.msra.mxu0 0.0
    %4141 = vmatprep.subr.mxu0 0.0
    %4142 = vmatpush1.msra.mxu0 0.0
    %4143 = vmatprep.subr.mxu0 0.0
    %4144 = vmatpush1.msra.mxu0 0.0
    %4145 = vmatprep.subr.mxu0 0.0
    %4146 = vmatpush1.msra.mxu0 0.0
    %4147 = vmatprep.subr.mxu0 0.0
    %4148 = vmatpush1.msra.mxu0 0.0
    %4149 = vmatprep.subr.mxu0 0.0
    %4150 = vmatpush1.msra.mxu0 0.0
    %4151 = vmatprep.subr.mxu0 0.0
    %4152 = vmatpush1.msra.mxu0 0.0
    %4153 = vmatprep.subr.mxu0 0.0
    %4154 = vmatpush1.msra.mxu0 0.0
    %4155 = vmatprep.subr.mxu0 0.0
    %4156 = vmatpush1.msra.mxu0 0.0
    %4157 = vmatprep.subr.mxu0 0.0
    %4158 = vmatpush1.msra.mxu0 0.0
    %4159 = vmatprep.subr.mxu0 0.0
    %4160 = vmatpush1.msra.mxu0 0.0
    %4161 = vmatprep.subr.mxu0 0.0
    %4162 = vmatpush1.msra.mxu0 0.0
    %4163 = vmatprep.subr.mxu0 0.0
    %4164 = vmatpush1.msra.mxu0 0.0
    %4165 = vmatprep.subr.mxu0 0.0
    %4166 = vmatpush1.msra.mxu0 0.0
    %4167 = vmatprep.subr.mxu0 0.0
    %4168 = vmatpush1.msra.mxu0 0.0
    %4169 = vmatprep.subr.mxu0 0.0
    %4170 = vmatpush1.msra.mxu0 0.0
    %4171 = vmatprep.subr.mxu0 0.0
    %4172 = vmatpush1.msra.mxu0 0.0
    %4173 = vmatprep.subr.mxu0 0.0
    %4174 = vmatpush1.msra.mxu0 0.0
    %4175 = vmatprep.subr.mxu0 0.0
    %4176 = vmatpush1.msra.mxu0 0.0
    %4177 = vmatprep.subr.mxu0 0.0
    %4178 = vmatpush1.msra.mxu0 0.0
    %4179 = vmatprep.mubr.f32.mxu0 0.0
    %4180 = vmatmul.mubr.f32.gmra.mrb[0].mxu0 %v4113
    %v4181 = vpop.f32.mrb[0].mxu0
    %v4182 = vadd.f32 0.0, %v4181
    %v4183 = vpop.f32.mrb[0].mxu0
    %4184 = vdwg.mxu0
    %v4186 = vsel %vm250, %v3654, 0
    %4188 = vmatprep.subr.mxu0 0.0
    %4189 = vmatpush1.msra.mxu0 %v3885
    %4190 = vmatprep.subr.mxu0 0.0
    %4191 = vmatpush1.msra.mxu0 %v3886
    %4192 = vmatprep.subr.mxu0 0.0
    %4193 = vmatpush1.msra.mxu0 0.0
    %4194 = vmatprep.subr.mxu0 0.0
    %4195 = vmatpush1.msra.mxu0 0.0
    %4196 = vmatprep.subr.mxu0 0.0
    %4197 = vmatpush1.msra.mxu0 0.0
    %4198 = vmatprep.subr.mxu0 0.0
    %4199 = vmatpush1.msra.mxu0 0.0
    %4200 = vmatprep.subr.mxu0 0.0
    %4201 = vmatpush1.msra.mxu0 0.0
    %4202 = vmatprep.subr.mxu0 0.0
    %4203 = vmatpush1.msra.mxu0 0.0
    %4204 = vmatprep.subr.mxu0 0.0
    %4205 = vmatpush1.msra.mxu0 0.0
    %4206 = vmatprep.subr.mxu0 0.0
    %4207 = vmatpush1.msra.mxu0 0.0
    %4208 = vmatprep.subr.mxu0 0.0
    %4209 = vmatpush1.msra.mxu0 0.0
    %4210 = vmatprep.subr.mxu0 0.0
    %4211 = vmatpush1.msra.mxu0 0.0
    %4212 = vmatprep.subr.mxu0 0.0
    %4213 = vmatpush1.msra.mxu0 0.0
    %4214 = vmatprep.subr.mxu0 0.0
    %4215 = vmatpush1.msra.mxu0 0.0
    %4216 = vmatprep.subr.mxu0 0.0
    %4217 = vmatpush1.msra.mxu0 0.0
    %4218 = vmatprep.subr.mxu0 0.0
    %4219 = vmatpush1.msra.mxu0 0.0
    %4220 = vmatprep.subr.mxu0 0.0
    %4221 = vmatpush1.msra.mxu0 0.0
    %4222 = vmatprep.subr.mxu0 0.0
    %4223 = vmatpush1.msra.mxu0 0.0
    %4224 = vmatprep.subr.mxu0 0.0
    %4225 = vmatpush1.msra.mxu0 0.0
    %4226 = vmatprep.subr.mxu0 0.0
    %4227 = vmatpush1.msra.mxu0 0.0
    %4228 = vmatprep.subr.mxu0 0.0
    %4229 = vmatpush1.msra.mxu0 0.0
    %4230 = vmatprep.subr.mxu0 0.0
    %4231 = vmatpush1.msra.mxu0 0.0
    %4232 = vmatprep.subr.mxu0 0.0
    %4233 = vmatpush1.msra.mxu0 0.0
    %4234 = vmatprep.subr.mxu0 0.0
    %4235 = vmatpush1.msra.mxu0 0.0
    %4236 = vmatprep.subr.mxu0 0.0
    %4237 = vmatpush1.msra.mxu0 0.0
    %4238 = vmatprep.subr.mxu0 0.0
    %4239 = vmatpush1.msra.mxu0 0.0
    %4240 = vmatprep.subr.mxu0 0.0
    %4241 = vmatpush1.msra.mxu0 0.0
    %4242 = vmatprep.subr.mxu0 0.0
    %4243 = vmatpush1.msra.mxu0 0.0
    %4244 = vmatprep.subr.mxu0 0.0
    %4245 = vmatpush1.msra.mxu0 0.0
    %4246 = vmatprep.subr.mxu0 0.0
    %4247 = vmatpush1.msra.mxu0 0.0
    %4248 = vmatprep.subr.mxu0 0.0
    %4249 = vmatpush1.msra.mxu0 0.0
    %4250 = vmatprep.subr.mxu0 0.0
    %4251 = vmatpush1.msra.mxu0 0.0
    %4252 = vmatprep.mubr.f32.mxu0 0.0
    %4253 = vmatmul.mubr.f32.gmra.mrb[0].mxu0 %v4186
    %v4254 = vpop.f32.mrb[0].mxu0
    %v4255 = vadd.f32 0.0, %v4254
    %v4256 = vpop.f32.mrb[0].mxu0
    %4257 = vdwg.mxu0
    %v4259 = vsel %vm250, %v3727, 0
    %4261 = vmatprep.subr.mxu0 0.0
    %4262 = vmatpush1.msra.mxu0 %v3887
    %4263 = vmatprep.subr.mxu0 0.0
    %4264 = vmatpush1.msra.mxu0 %v3888
    %4265 = vmatprep.subr.mxu0 0.0
    %4266 = vmatpush1.msra.mxu0 0.0
    %4267 = vmatprep.subr.mxu0 0.0
    %4268 = vmatpush1.msra.mxu0 0.0
    %4269 = vmatprep.subr.mxu0 0.0
    %4270 = vmatpush1.msra.mxu0 0.0
    %4271 = vmatprep.subr.mxu0 0.0
    %4272 = vmatpush1.msra.mxu0 0.0
    %4273 = vmatprep.subr.mxu0 0.0
    %4274 = vmatpush1.msra.mxu0 0.0
    %4275 = vmatprep.subr.mxu0 0.0
    %4276 = vmatpush1.msra.mxu0 0.0
    %4277 = vmatprep.subr.mxu0 0.0
    %4278 = vmatpush1.msra.mxu0 0.0
    %4279 = vmatprep.subr.mxu0 0.0
    %4280 = vmatpush1.msra.mxu0 0.0
    %4281 = vmatprep.subr.mxu0 0.0
    %4282 = vmatpush1.msra.mxu0 0.0
    %4283 = vmatprep.subr.mxu0 0.0
    %4284 = vmatpush1.msra.mxu0 0.0
    %4285 = vmatprep.subr.mxu0 0.0
    %4286 = vmatpush1.msra.mxu0 0.0
    %4287 = vmatprep.subr.mxu0 0.0
    %4288 = vmatpush1.msra.mxu0 0.0
    %4289 = vmatprep.subr.mxu0 0.0
    %4290 = vmatpush1.msra.mxu0 0.0
    %4291 = vmatprep.subr.mxu0 0.0
    %4292 = vmatpush1.msra.mxu0 0.0
    %4293 = vmatprep.subr.mxu0 0.0
    %4294 = vmatpush1.msra.mxu0 0.0
    %4295 = vmatprep.subr.mxu0 0.0
    %4296 = vmatpush1.msra.mxu0 0.0
    %4297 = vmatprep.subr.mxu0 0.0
    %4298 = vmatpush1.msra.mxu0 0.0
    %4299 = vmatprep.subr.mxu0 0.0
    %4300 = vmatpush1.msra.mxu0 0.0
    %4301 = vmatprep.subr.mxu0 0.0
    %4302 = vmatpush1.msra.mxu0 0.0
    %4303 = vmatprep.subr.mxu0 0.0
    %4304 = vmatpush1.msra.mxu0 0.0
    %4305 = vmatprep.subr.mxu0 0.0
    %4306 = vmatpush1.msra.mxu0 0.0
    %4307 = vmatprep.subr.mxu0 0.0
    %4308 = vmatpush1.msra.mxu0 0.0
    %4309 = vmatprep.subr.mxu0 0.0
    %4310 = vmatpush1.msra.mxu0 0.0
    %4311 = vmatprep.subr.mxu0 0.0
    %4312 = vmatpush1.msra.mxu0 0.0
    %4313 = vmatprep.subr.mxu0 0.0
    %4314 = vmatpush1.msra.mxu0 0.0
    %4315 = vmatprep.subr.mxu0 0.0
    %4316 = vmatpush1.msra.mxu0 0.0
    %4317 = vmatprep.subr.mxu0 0.0
    %4318 = vmatpush1.msra.mxu0 0.0
    %4319 = vmatprep.subr.mxu0 0.0
    %4320 = vmatpush1.msra.mxu0 0.0
    %4321 = vmatprep.subr.mxu0 0.0
    %4322 = vmatpush1.msra.mxu0 0.0
    %4323 = vmatprep.subr.mxu0 0.0
    %4324 = vmatpush1.msra.mxu0 0.0
    %4325 = vmatprep.mubr.f32.mxu0 0.0
    %4326 = vmatmul.mubr.f32.gmra.mrb[0].mxu0 %v4259
    %v4327 = vpop.f32.mrb[0].mxu0
    %v4328 = vadd.f32 0.0, %v4327
    %v4329 = vpop.f32.mrb[0].mxu0
    %4330 = vdwg.mxu0
    %v4332 = vsel %vm250, %v3800, 0
    %4334 = vmatprep.subr.mxu0 0.0
    %4335 = vmatpush1.msra.mxu0 %v3889
    %4336 = vmatprep.subr.mxu0 0.0
    %4337 = vmatpush1.msra.mxu0 %v3890
    %4338 = vmatprep.subr.mxu0 0.0
    %4339 = vmatpush1.msra.mxu0 0.0
    %4340 = vmatprep.subr.mxu0 0.0
    %4341 = vmatpush1.msra.mxu0 0.0
    %4342 = vmatprep.subr.mxu0 0.0
    %4343 = vmatpush1.msra.mxu0 0.0
    %4344 = vmatprep.subr.mxu0 0.0
    %4345 = vmatpush1.msra.mxu0 0.0
    %4346 = vmatprep.subr.mxu0 0.0
    %4347 = vmatpush1.msra.mxu0 0.0
    %4348 = vmatprep.subr.mxu0 0.0
    %4349 = vmatpush1.msra.mxu0 0.0
    %4350 = vmatprep.subr.mxu0 0.0
    %4351 = vmatpush1.msra.mxu0 0.0
    %4352 = vmatprep.subr.mxu0 0.0
    %4353 = vmatpush1.msra.mxu0 0.0
    %4354 = vmatprep.subr.mxu0 0.0
    %4355 = vmatpush1.msra.mxu0 0.0
    %4356 = vmatprep.subr.mxu0 0.0
    %4357 = vmatpush1.msra.mxu0 0.0
    %4358 = vmatprep.subr.mxu0 0.0
    %4359 = vmatpush1.msra.mxu0 0.0
    %4360 = vmatprep.subr.mxu0 0.0
    %4361 = vmatpush1.msra.mxu0 0.0
    %4362 = vmatprep.subr.mxu0 0.0
    %4363 = vmatpush1.msra.mxu0 0.0
    %4364 = vmatprep.subr.mxu0 0.0
    %4365 = vmatpush1.msra.mxu0 0.0
    %4366 = vmatprep.subr.mxu0 0.0
    %4367 = vmatpush1.msra.mxu0 0.0
    %4368 = vmatprep.subr.mxu0 0.0
    %4369 = vmatpush1.msra.mxu0 0.0
    %4370 = vmatprep.subr.mxu0 0.0
    %4371 = vmatpush1.msra.mxu0 0.0
    %4372 = vmatprep.subr.mxu0 0.0
    %4373 = vmatpush1.msra.mxu0 0.0
    %4374 = vmatprep.subr.mxu0 0.0
    %4375 = vmatpush1.msra.mxu0 0.0
    %4376 = vmatprep.subr.mxu0 0.0
    %4377 = vmatpush1.msra.mxu0 0.0
    %4378 = vmatprep.subr.mxu0 0.0
    %4379 = vmatpush1.msra.mxu0 0.0
    %4380 = vmatprep.subr.mxu0 0.0
    %4381 = vmatpush1.msra.mxu0 0.0
    %4382 = vmatprep.subr.mxu0 0.0
    %4383 = vmatpush1.msra.mxu0 0.0
    %4384 = vmatprep.subr.mxu0 0.0
    %4385 = vmatpush1.msra.mxu0 0.0
    %4386 = vmatprep.subr.mxu0 0.0
    %4387 = vmatpush1.msra.mxu0 0.0
    %4388 = vmatprep.subr.mxu0 0.0
    %4389 = vmatpush1.msra.mxu0 0.0
    %4390 = vmatprep.subr.mxu0 0.0
    %4391 = vmatpush1.msra.mxu0 0.0
    %4392 = vmatprep.subr.mxu0 0.0
    %4393 = vmatpush1.msra.mxu0 0.0
    %4394 = vmatprep.subr.mxu0 0.0
    %4395 = vmatpush1.msra.mxu0 0.0
    %4396 = vmatprep.subr.mxu0 0.0
    %4397 = vmatpush1.msra.mxu0 0.0
    %4398 = vmatprep.mubr.f32.mxu0 0.0
    %4399 = vmatmul.mubr.f32.gmra.mrb[0].mxu0 %v4332
    %v4400 = vpop.f32.mrb[0].mxu0
    %v4401 = vadd.f32 0.0, %v4400
    %v4402 = vpop.f32.mrb[0].mxu0
    %4403 = vdwg.mxu0
    %v4405 = vsel %vm250, %v3873, 0
    %4407 = vmatprep.subr.mxu0 0.0
    %4408 = vmatpush1.msra.mxu0 %v3891
    %4409 = vmatprep.subr.mxu0 0.0
    %4410 = vmatpush1.msra.mxu0 %v3892
    %4411 = vmatprep.subr.mxu0 0.0
    %4412 = vmatpush1.msra.mxu0 0.0
    %4413 = vmatprep.subr.mxu0 0.0
    %4414 = vmatpush1.msra.mxu0 0.0
    %4415 = vmatprep.subr.mxu0 0.0
    %4416 = vmatpush1.msra.mxu0 0.0
    %4417 = vmatprep.subr.mxu0 0.0
    %4418 = vmatpush1.msra.mxu0 0.0
    %4419 = vmatprep.subr.mxu0 0.0
    %4420 = vmatpush1.msra.mxu0 0.0
    %4421 = vmatprep.subr.mxu0 0.0
    %4422 = vmatpush1.msra.mxu0 0.0
    %4423 = vmatprep.subr.mxu0 0.0
    %4424 = vmatpush1.msra.mxu0 0.0
    %4425 = vmatprep.subr.mxu0 0.0
    %4426 = vmatpush1.msra.mxu0 0.0
    %4427 = vmatprep.subr.mxu0 0.0
    %4428 = vmatpush1.msra.mxu0 0.0
    %4429 = vmatprep.subr.mxu0 0.0
    %4430 = vmatpush1.msra.mxu0 0.0
    %4431 = vmatprep.subr.mxu0 0.0
    %4432 = vmatpush1.msra.mxu0 0.0
    %4433 = vmatprep.subr.mxu0 0.0
    %4434 = vmatpush1.msra.mxu0 0.0
    %4435 = vmatprep.subr.mxu0 0.0
    %4436 = vmatpush1.msra.mxu0 0.0
    %4437 = vmatprep.subr.mxu0 0.0
    %4438 = vmatpush1.msra.mxu0 0.0
    %4439 = vmatprep.subr.mxu0 0.0
    %4440 = vmatpush1.msra.mxu0 0.0
    %4441 = vmatprep.subr.mxu0 0.0
    %4442 = vmatpush1.msra.mxu0 0.0
    %4443 = vmatprep.subr.mxu0 0.0
    %4444 = vmatpush1.msra.mxu0 0.0
    %4445 = vmatprep.subr.mxu0 0.0
    %4446 = vmatpush1.msra.mxu0 0.0
    %4447 = vmatprep.subr.mxu0 0.0
    %4448 = vmatpush1.msra.mxu0 0.0
    %4449 = vmatprep.subr.mxu0 0.0
    %4450 = vmatpush1.msra.mxu0 0.0
    %4451 = vmatprep.subr.mxu0 0.0
    %4452 = vmatpush1.msra.mxu0 0.0
    %4453 = vmatprep.subr.mxu0 0.0
    %4454 = vmatpush1.msra.mxu0 0.0
    %4455 = vmatprep.subr.mxu0 0.0
    %4456 = vmatpush1.msra.mxu0 0.0
    %4457 = vmatprep.subr.mxu0 0.0
    %4458 = vmatpush1.msra.mxu0 0.0
    %4459 = vmatprep.subr.mxu0 0.0
    %4460 = vmatpush1.msra.mxu0 0.0
    %4461 = vmatprep.subr.mxu0 0.0
    %4462 = vmatpush1.msra.mxu0 0.0
    %4463 = vmatprep.subr.mxu0 0.0
    %4464 = vmatpush1.msra.mxu0 0.0
    %4465 = vmatprep.subr.mxu0 0.0
    %4466 = vmatpush1.msra.mxu0 0.0
    %4467 = vmatprep.subr.mxu0 0.0
    %4468 = vmatpush1.msra.mxu0 0.0
    %4469 = vmatprep.subr.mxu0 0.0
    %4470 = vmatpush1.msra.mxu0 0.0
    %4471 = vmatprep.mubr.f32.mxu0 0.0
    %4472 = vmatmul.mubr.f32.gmra.mrb[0].mxu0 %v4405
    %v4473 = vpop.f32.mrb[0].mxu0
    %v4474 = vadd.f32 0.0, %v4473
    %v4475 = vpop.f32.mrb[0].mxu0
    %4476 = vdwg.mxu0
    %v4477 = vsel %vm80, %v3963, 0.0
    %v4478 = vsel %vm80, %v4109, 0.0
    %v4479 = vadd.f32 %v4477, %v4478
    %v4480 = vsel %vm80, %v4255, 0.0
    %v4481 = vadd.f32 %v4479, %v4480
    %v4482 = vsel %vm80, %v4401, 0.0
    %v4483 = vadd.f32 %v4481, %v4482
    %v4484 = vsel %vm80, %v4036, 0.0
    %v4485 = vsel %vm80, %v4182, 0.0
    %v4486 = vadd.f32 %v4484, %v4485
    %v4487 = vsel %vm80, %v4328, 0.0
    %v4488 = vadd.f32 %v4486, %v4487
    %v4489 = vsel %vm80, %v4474, 0.0
    %v4490 = vadd.f32 %v4488, %v4489
    %s4491 = scalar_lea.vmem %s6, 1
    %v4492 = vld [vmem:[%s4491] sm:$0x1]
    %v4494 = vlaneseq
    %v4495 = vshrl.u32 %v4494, 7
    %v4496 = vsub.s32 0, %v4495
    %v4497 = vrot.slane %v4492, %v4496
    %v4499 = vadd.f32 %v4483, %v4497
    %v4500 = vadd.f32 %v4490, %v4497
    %v4501 = vadd.f32 %v2414, %v4499
    %v4502 = vadd.f32 %v2415, %v4500
    %s4503 = scalar_lea.vmem %s7, 1
    %v4504 = vld [vmem:[%s4503] sm:$0x1]
    %s4505 = scalar_lea.vmem %s8, 1
    %v4506 = vld [vmem:[%s4505] sm:$0x1]
    %v4507 = vsel %vm80, %v4501, 0.0
    %4508 = vadd.xlane.f32.xlu0 %v4507
    %v4509 = vpop.xlane.xlu0 %4508
    %v4510 = vsel %vm80, %v4502, 0.0
    %4511 = vadd.xlane.f32.xlu0 %v4510
    %v4512 = vpop.xlane.xlu0 %4511
    %v4513 = vmul.f32 %v4509, 0.03125
    %v4514 = vmul.f32 %v4512, 0.03125
    %v4515 = vsub.f32 %v4501, %v4513
    %v4516 = vsub.f32 %v4502, %v4514
    %v4517 = vmul.f32 %v4515, %v4515
    %v4518 = vmul.f32 %v4516, %v4516
    %v4519 = vsel %vm80, %v4517, 0.0
    %4520 = vadd.xlane.f32.xlu0 %v4519
    %v4521 = vpop.xlane.xlu0 %4520
    %v4522 = vsel %vm80, %v4518, 0.0
    %4523 = vadd.xlane.f32.xlu0 %v4522
    %v4524 = vpop.xlane.xlu0 %4523
    %v4525 = vmul.f32 %v4521, 0.03125
    %v4526 = vmul.f32 %v4524, 0.03125
    %v4527 = vadd.f32 %v4525, 1e-05
    %v4528 = vadd.f32 %v4526, 1e-05
    %v4529 = vrsqrt.pop %v4527
    %v4530 = vrsqrt.pop %v4528
    %v4531 = vmul.f32 %v4515, %v4529
    %v4532 = vmul.f32 %v4516, %v4530
    %v4534 = vlaneseq
    %v4535 = vshrl.u32 %v4534, 7
    %v4536 = vsub.s32 0, %v4535
    %v4537 = vrot.slane %v4504, %v4536
    %v4539 = vmul.f32 %v4531, %v4537
    %v4540 = vmul.f32 %v4532, %v4537
    %v4542 = vlaneseq
    %v4543 = vshrl.u32 %v4542, 7
    %v4544 = vsub.s32 0, %v4543
    %v4545 = vrot.slane %v4506, %v4544
    %v4547 = vadd.f32 %v4539, %v4545
    %v4548 = vadd.f32 %v4540, %v4545
    %s4549 = scalar_lea.vmem %s9, 32
    %v4550 = vld [vmem:[%s4549] sm:$0xff]
    %v4551 = vld [vmem:[%s4549 + $0x8] sm:$0xff]
    %v4552 = vld [vmem:[%s4549 + $0x10] sm:$0xff]
    %v4553 = vld [vmem:[%s4549 + $0x18] sm:$0xff]
    %s4554 = scalar_lea.vmem %s10, 1
    %v4555 = vld [vmem:[%s4554] sm:$0x1]
    %v4557 = vlaneseq
    %v4558 = vshrl.u32 %v4557, 7
    %v4559 = vsub.s32 0, %v4558
    %v4560 = vrot.slane %v4555, %v4559
    %v4563 = vsel %vm80, %v4547, 0
    %v4566 = vsel %vm80, %v4548, 0
    %4568 = vmatprep.subr.mxu0 0.0
    %4569 = vmatpush1.msra.mxu0 %v4550
    %4570 = vmatprep.subr.mxu0 0.0
    %4571 = vmatpush1.msra.mxu0 %v4551
    %4572 = vmatprep.subr.mxu0 0.0
    %4573 = vmatpush1.msra.mxu0 %v4552
    %4574 = vmatprep.subr.mxu0 0.0
    %4575 = vmatpush1.msra.mxu0 %v4553
    %4576 = vmatprep.subr.mxu0 0.0
    %4577 = vmatpush1.msra.mxu0 0.0
    %4578 = vmatprep.subr.mxu0 0.0
    %4579 = vmatpush1.msra.mxu0 0.0
    %4580 = vmatprep.subr.mxu0 0.0
    %4581 = vmatpush1.msra.mxu0 0.0
    %4582 = vmatprep.subr.mxu0 0.0
    %4583 = vmatpush1.msra.mxu0 0.0
    %4584 = vmatprep.subr.mxu0 0.0
    %4585 = vmatpush1.msra.mxu0 0.0
    %4586 = vmatprep.subr.mxu0 0.0
    %4587 = vmatpush1.msra.mxu0 0.0
    %4588 = vmatprep.subr.mxu0 0.0
    %4589 = vmatpush1.msra.mxu0 0.0
    %4590 = vmatprep.subr.mxu0 0.0
    %4591 = vmatpush1.msra.mxu0 0.0
    %4592 = vmatprep.subr.mxu0 0.0
    %4593 = vmatpush1.msra.mxu0 0.0
    %4594 = vmatprep.subr.mxu0 0.0
    %4595 = vmatpush1.msra.mxu0 0.0
    %4596 = vmatprep.subr.mxu0 0.0
    %4597 = vmatpush1.msra.mxu0 0.0
    %4598 = vmatprep.subr.mxu0 0.0
    %4599 = vmatpush1.msra.mxu0 0.0
    %4600 = vmatprep.subr.mxu0 0.0
    %4601 = vmatpush1.msra.mxu0 0.0
    %4602 = vmatprep.subr.mxu0 0.0
    %4603 = vmatpush1.msra.mxu0 0.0
    %4604 = vmatprep.subr.mxu0 0.0
    %4605 = vmatpush1.msra.mxu0 0.0
    %4606 = vmatprep.subr.mxu0 0.0
    %4607 = vmatpush1.msra.mxu0 0.0
    %4608 = vmatprep.subr.mxu0 0.0
    %4609 = vmatpush1.msra.mxu0 0.0
    %4610 = vmatprep.subr.mxu0 0.0
    %4611 = vmatpush1.msra.mxu0 0.0
    %4612 = vmatprep.subr.mxu0 0.0
    %4613 = vmatpush1.msra.mxu0 0.0
    %4614 = vmatprep.subr.mxu0 0.0
    %4615 = vmatpush1.msra.mxu0 0.0
    %4616 = vmatprep.subr.mxu0 0.0
    %4617 = vmatpush1.msra.mxu0 0.0
    %4618 = vmatprep.subr.mxu0 0.0
    %4619 = vmatpush1.msra.mxu0 0.0
    %4620 = vmatprep.subr.mxu0 0.0
    %4621 = vmatpush1.msra.mxu0 0.0
    %4622 = vmatprep.subr.mxu0 0.0
    %4623 = vmatpush1.msra.mxu0 0.0
    %4624 = vmatprep.subr.mxu0 0.0
    %4625 = vmatpush1.msra.mxu0 0.0
    %4626 = vmatprep.subr.mxu0 0.0
    %4627 = vmatpush1.msra.mxu0 0.0
    %4628 = vmatprep.subr.mxu0 0.0
    %4629 = vmatpush1.msra.mxu0 0.0
    %4630 = vmatprep.subr.mxu0 0.0
    %4631 = vmatpush1.msra.mxu0 0.0
    %4632 = vmatprep.mubr.f32.mxu0 0.0
    %4633 = vmatmul.mubr.f32.gmra.mrb[0].mxu0 %v4563
    %v4634 = vpop.f32.mrb[0].mxu0
    %v4635 = vadd.f32 %v4560, %v4634
    %v4636 = vpop.f32.mrb[0].mxu0
    %4637 = vmatprep.mubr.f32.mxu0 0.0
    %4638 = vmatmul.mubr.f32.gmra.mrb[0].mxu0 %v4566
    %v4639 = vpop.f32.mrb[0].mxu0
    %v4640 = vadd.f32 %v4560, %v4639
    %v4641 = vpop.f32.mrb[0].mxu0
    %4642 = vdwg.mxu0
    %v4643 = vmul.f32 %v4635, 0.5
    %v4644 = vmul.f32 %v4640, 0.5
    %v4645 = vmul.f32 %v4635, %v4635
    %v4646 = vmul.f32 %v4640, %v4640
    %v4647 = vmul.f32 %v4645, %v4635
    %v4648 = vmul.f32 %v4646, %v4640
    %v4649 = vmul.f32 %v4647, 0.044715
    %v4650 = vmul.f32 %v4648, 0.044715
    %v4651 = vadd.f32 %v4635, %v4649
    %v4652 = vadd.f32 %v4640, %v4650
    %v4653 = vmul.f32 %v4651, 0.7978846
    %v4654 = vmul.f32 %v4652, 0.7978846
    %v4655 = vtanh.pop %v4653
    %v4656 = vtanh.pop %v4654
    %v4657 = vadd.f32 %v4655, 1.0
    %v4658 = vadd.f32 %v4656, 1.0
    %v4659 = vmul.f32 %v4643, %v4657
    %v4660 = vmul.f32 %v4644, %v4658
    %s4661 = scalar_lea.vmem %s11, 64
    %v4662 = vld [vmem:[%s4661] sm:$0xff]
    %v4663 = vld [vmem:[%s4661 + $0x8] sm:$0xff]
    %v4664 = vld [vmem:[%s4661 + $0x10] sm:$0xff]
    %v4665 = vld [vmem:[%s4661 + $0x18] sm:$0xff]
    %v4666 = vld [vmem:[%s4661 + $0x20] sm:$0xff]
    %v4667 = vld [vmem:[%s4661 + $0x28] sm:$0xff]
    %v4668 = vld [vmem:[%s4661 + $0x30] sm:$0xff]
    %v4669 = vld [vmem:[%s4661 + $0x38] sm:$0xff]
    %s4670 = scalar_lea.vmem %s12, 1
    %v4671 = vld [vmem:[%s4670] sm:$0x1]
    %v4673 = vlaneseq
    %v4674 = vshrl.u32 %v4673, 7
    %v4675 = vsub.s32 0, %v4674
    %v4676 = vrot.slane %v4671, %v4675
    %v4679 = vsel %vm2332, %v4659, 0
    %v4682 = vsel %vm2332, %v4660, 0
    %4684 = vmatprep.subr.mxu0 0.0
    %4685 = vmatpush1.msra.mxu0 %v4662
    %4686 = vmatprep.subr.mxu0 0.0
    %4687 = vmatpush1.msra.mxu0 %v4663
    %4688 = vmatprep.subr.mxu0 0.0
    %4689 = vmatpush1.msra.mxu0 %v4664
    %4690 = vmatprep.subr.mxu0 0.0
    %4691 = vmatpush1.msra.mxu0 %v4665
    %4692 = vmatprep.subr.mxu0 0.0
    %4693 = vmatpush1.msra.mxu0 %v4666
    %4694 = vmatprep.subr.mxu0 0.0
    %4695 = vmatpush1.msra.mxu0 %v4667
    %4696 = vmatprep.subr.mxu0 0.0
    %4697 = vmatpush1.msra.mxu0 %v4668
    %4698 = vmatprep.subr.mxu0 0.0
    %4699 = vmatpush1.msra.mxu0 %v4669
    %4700 = vmatprep.subr.mxu0 0.0
    %4701 = vmatpush1.msra.mxu0 0.0
    %4702 = vmatprep.subr.mxu0 0.0
    %4703 = vmatpush1.msra.mxu0 0.0
    %4704 = vmatprep.subr.mxu0 0.0
    %4705 = vmatpush1.msra.mxu0 0.0
    %4706 = vmatprep.subr.mxu0 0.0
    %4707 = vmatpush1.msra.mxu0 0.0
    %4708 = vmatprep.subr.mxu0 0.0
    %4709 = vmatpush1.msra.mxu0 0.0
    %4710 = vmatprep.subr.mxu0 0.0
    %4711 = vmatpush1.msra.mxu0 0.0
    %4712 = vmatprep.subr.mxu0 0.0
    %4713 = vmatpush1.msra.mxu0 0.0
    %4714 = vmatprep.subr.mxu0 0.0
    %4715 = vmatpush1.msra.mxu0 0.0
    %4716 = vmatprep.subr.mxu0 0.0
    %4717 = vmatpush1.msra.mxu0 0.0
    %4718 = vmatprep.subr.mxu0 0.0
    %4719 = vmatpush1.msra.mxu0 0.0
    %4720 = vmatprep.subr.mxu0 0.0
    %4721 = vmatpush1.msra.mxu0 0.0
    %4722 = vmatprep.subr.mxu0 0.0
    %4723 = vmatpush1.msra.mxu0 0.0
    %4724 = vmatprep.subr.mxu0 0.0
    %4725 = vmatpush1.msra.mxu0 0.0
    %4726 = vmatprep.subr.mxu0 0.0
    %4727 = vmatpush1.msra.mxu0 0.0
    %4728 = vmatprep.subr.mxu0 0.0
    %4729 = vmatpush1.msra.mxu0 0.0
    %4730 = vmatprep.subr.mxu0 0.0
    %4731 = vmatpush1.msra.mxu0 0.0
    %4732 = vmatprep.subr.mxu0 0.0
    %4733 = vmatpush1.msra.mxu0 0.0
    %4734 = vmatprep.subr.mxu0 0.0
    %4735 = vmatpush1.msra.mxu0 0.0
    %4736 = vmatprep.subr.mxu0 0.0
    %4737 = vmatpush1.msra.mxu0 0.0
    %4738 = vmatprep.subr.mxu0 0.0
    %4739 = vmatpush1.msra.mxu0 0.0
    %4740 = vmatprep.subr.mxu0 0.0
    %4741 = vmatpush1.msra.mxu0 0.0
    %4742 = vmatprep.subr.mxu0 0.0
    %4743 = vmatpush1.msra.mxu0 0.0
    %4744 = vmatprep.subr.mxu0 0.0
    %4745 = vmatpush1.msra.mxu0 0.0
    %4746 = vmatprep.subr.mxu0 0.0
    %4747 = vmatpush1.msra.mxu0 0.0
    %4748 = vmatprep.mubr.f32.mxu0 0.0
    %4749 = vmatmul.mubr.f32.gmra.mrb[0].mxu0 %v4679
    %v4750 = vpop.f32.mrb[0].mxu0
    %v4751 = vadd.f32 %v4676, %v4750
    %v4752 = vpop.f32.mrb[0].mxu0
    %4753 = vmatprep.mubr.f32.mxu0 0.0
    %4754 = vmatmul.mubr.f32.gmra.mrb[0].mxu0 %v4682
    %v4755 = vpop.f32.mrb[0].mxu0
    %v4756 = vadd.f32 %v4676, %v4755
    %v4757 = vpop.f32.mrb[0].mxu0
    %4758 = vdwg.mxu0
    %v4759 = vadd.f32 %v4501, %v4751
    %v4760 = vadd.f32 %v4502, %v4756
    %v4761 = vsel %vm80, %v4759, 0.0
    %v4762 = vrot.slane %v4761, 4
    %v4763 = vadd.f32 %v4761, %v4762
    %v4764 = vrot.slane %v4763, 2
    %v4765 = vadd.f32 %v4763, %v4764
    %v4766 = vrot.slane %v4765, 1
    %v4767 = vadd.f32 %v4765, %v4766
    %v4768 = vsel %vm80, %v4760, 0.0
    %v4769 = vrot.slane %v4768, 4
    %v4770 = vadd.f32 %v4768, %v4769
    %v4771 = vrot.slane %v4770, 2
    %v4772 = vadd.f32 %v4770, %v4771
    %v4773 = vrot.slane %v4772, 1
    %v4774 = vadd.f32 %v4772, %v4773
    %v4775 = vmul.f32 %v4767, 0.125
    %v4776 = vmul.f32 %v4774, 0.125
    %vm4779 = vcmask 1041409
    %v4780 = vsel %vm4779, %v4776, %v4775
    %vm4782 = vcmask 254976
    %4783 = vst.msk [vmem:[#allocation7] sm:$0x3] %vm4782, %v4780
    // Predicated region
    $region62: #{tpu_custom_call.1} parent=1 // pred_check
      _
    $region63: #{tpu_custom_call.1} parent=1 // pred_check_branch
      %4785 = sbr.rel (0) target = $region65
    $region64: #{tpu_custom_call.1} parent=1 // pred_region
      %s4787 = ssub.s32 32, 32
      %4788 = vsyncadd [#allocation4], %s4787
      %s4790 = sshll.u32 [#allocation7], 4
      %s4791 = int_to_ptr.vmem [resolvable:$true] %s4790
      %4793 = dma.vmem_to_hbm [thread:$0]  %s4791, 32, %s13, [#allocation4]
    $region65: #{tpu_custom_call.1} parent=1 // pred_fallthru
      _
    // Predicated region
    $region66: #{tpu_custom_call.1} parent=1 // pred_check
      _
    $region67: #{tpu_custom_call.1} parent=1 // pred_check_branch
      %4795 = sbr.rel (0) target = $region69
    $region68: #{tpu_custom_call.1} parent=1 // pred_region
      %4796 = dma.done [#allocation4], 32
    $region69: #{tpu_custom_call.1} parent=1 // pred_fallthru
      _
    %4797 = vsyncpa [#allocation3], 1
    %4798 = vsyncpa [#allocation6], 1
    %4799 = vsyncpa [#allocation4], 1

</llo_original>
